<compile_context>
chip_gen: v6e
topology: v6e:2x2x1
jax: 0.10.0
libtpu: 0.0.40
codegen_flags: <defaults>
</compile_context>

<pallas_src>
import functools
import math

import jax
import jax.numpy as jnp
from jax.experimental import pallas as pl
from jax.experimental.pallas import tpu as pltpu

EPS = 1e-6

# Rows of the packed [16, D] parameter-vector table.
_LN0_G, _LN0_B, _LN1_G, _LN1_B, _LN2_G, _LN2_B = 0, 1, 2, 3, 4, 5
_SA_BQ, _SA_BK, _SA_BV, _SA_BO = 6, 7, 8, 9
_CA_BQ, _CA_BK, _CA_BV, _CA_BO = 10, 11, 12, 13
_FF_B2 = 14
_VEC_ROWS = 16


# --------------------------- in-kernel sub-blocks ---------------------------

def _layer_norm(x, g, b):
    """PyTorch-style LayerNorm: a_2 * (x - mean) / (std + eps) + b_2 (unbiased std)."""
    n = x.shape[-1]
    mean = jnp.mean(x, axis=-1, keepdims=True)
    d = x - mean
    var = jnp.sum(d * d, axis=-1, keepdims=True) * (1.0 / (n - 1))   # Bessel
    inv = pl.reciprocal(jnp.sqrt(var) + EPS)                          # exact, EUP path
    return g * (d * inv) + b


def _softmax_last(s):
    s = s - jnp.max(s, axis=-1, keepdims=True)
    p = jnp.exp(s)
    return p * pl.reciprocal(jnp.sum(p, axis=-1, keepdims=True), approx=True)


def _attention(q_in16, kv_in16, mask, wq_ref, wk_ref, wv_ref, wo_ref,
               bq, bk, bv, bo, n_heads, dk):
    """Multi-head attention for one batch element.

    q_in16: [Sq, D] bf16 (already normed+cast); kv_in16: [Skv, D] bf16.
    mask: [Sq, Skv] or [1, Skv] bool.  Weights arrive pre-cast to bf16; wo_ref is
    pre-split per head as [H, dk, D], so the head concatenate is replaced by an
    f32 accumulation of per-head output projections."""
    scale = 1.0 / math.sqrt(dk)                    # python float -> no traced capture

    # Full Q/K/V projections: bf16 MXU inputs, f32 accumulation, f32 bias add.
    q = jnp.dot(q_in16, wq_ref[...], preferred_element_type=jnp.float32) + bq
    k = jnp.dot(kv_in16, wk_ref[...], preferred_element_type=jnp.float32) + bk
    v = jnp.dot(kv_in16, wv_ref[...], preferred_element_type=jnp.float32) + bv

    # Cast ONCE per tensor (3 casts total), not per head slice.
    q16 = q.astype(jnp.bfloat16)
    k16 = k.astype(jnp.bfloat16)
    v16 = v.astype(jnp.bfloat16)

    acc = None
    # TODO(synk): for production H/Sq/dk, replace this static unroll with head-
    # batched einsums ([H, Sq, dk] via pltpu.einshape) or a grid axis + VMEM
    # accumulator so per-head intermediates don't all stay live.
    for h in range(n_heads):
        sl = slice(h * dk, (h + 1) * dk)
        # Scores: contract the last dim of both operands (no explicit K transpose).
        s = jax.lax.dot_general(q16[:, sl], k16[:, sl],
                                (((1,), (1,)), ((), ())),
                                preferred_element_type=jnp.float32) * scale
        s = jnp.where(mask, s, -1e9)               # masked_fill(mask == 0, -1e9)
        p = _softmax_last(s).astype(jnp.bfloat16)
        oh = jnp.dot(p, v16[:, sl], preferred_element_type=jnp.float32)   # [Sq, dk]
        ph = jnp.dot(oh.astype(jnp.bfloat16), wo_ref[h],
                     preferred_element_type=jnp.float32)                  # [Sq, D]
        acc = ph if acc is None else acc + ph
    return acc + bo


def _ffn(x16, w1_ref, b1, w2_ref, b2):
    h = jnp.dot(x16, w1_ref[...], preferred_element_type=jnp.float32) + b1
    h = jnp.maximum(h, 0.0)
    return jnp.dot(h.astype(jnp.bfloat16), w2_ref[...],
                   preferred_element_type=jnp.float32) + b2


# ------------------------------ fused kernel --------------------------------

def _decoder_layer_kernel(
    x_ref, mem_ref, tgt_mask_ref, src_mask_ref, vec_ref, b1_ref,
    sa_wq_ref, sa_wk_ref, sa_wv_ref, sa_wo_ref,
    ca_wq_ref, ca_wk_ref, ca_wv_ref, ca_wo_ref,
    w1_ref, w2_ref,
    o_ref, *, n_heads,
):
    batch = x_ref.shape[0]
    d_model = x_ref.shape[-1]
    dk = d_model // n_heads

    def vec(i):                       # [1, D] f32 row of the packed parameter table
        return vec_ref[i:i + 1]

    b1 = b1_ref[...]                  # [1, d_ff]

    # Whole batch in ONE pallas step; static unroll over B (B is tiny).
    for b in range(batch):
        x = x_ref[b]                               # [Sq, D]  f32
        mem16 = mem_ref[b].astype(jnp.bfloat16)    # [Skv, D] bf16 (cast once)
        tmask = tgt_mask_ref[b] != 0               # [Sq, Sq] bool
        smask = src_mask_ref[b] != 0               # [1, Skv] bool

        # sublayer[0]: x + self_attn(norm(x), norm(x), norm(x), tgt_mask)  (dropout = id)
        hn = _layer_norm(x, vec(_LN0_G), vec(_LN0_B)).astype(jnp.bfloat16)
        x = x + _attention(hn, hn, tmask,
                           sa_wq_ref, sa_wk_ref, sa_wv_ref, sa_wo_ref,
                           vec(_SA_BQ), vec(_SA_BK), vec(_SA_BV), vec(_SA_BO),
                           n_heads, dk)

        # sublayer[1]: x + src_attn(norm(x), memory, memory, src_mask)
        hn = _layer_norm(x, vec(_LN1_G), vec(_LN1_B)).astype(jnp.bfloat16)
        x = x + _attention(hn, mem16, smask,
                           ca_wq_ref, ca_wk_ref, ca_wv_ref, ca_wo_ref,
                           vec(_CA_BQ), vec(_CA_BK), vec(_CA_BV), vec(_CA_BO),
                           n_heads, dk)

        # sublayer[2]: x + feed_forward(norm(x))
        hn = _layer_norm(x, vec(_LN2_G), vec(_LN2_B)).astype(jnp.bfloat16)
        x = x + _ffn(hn, w1_ref, b1, w2_ref, vec(_FF_B2))

        o_ref[b] = x


# ------------------------------- wrapper -------------------------------------

def decoder_layer(x, memory, src_mask, tgt_mask, params, n_heads):
    B, Sq, D = x.shape
    dk = D // n_heads
    sa, ca, ff = params["self_attn"], params["src_attn"], params["ffn"]
    d_ff = ff["w1"].shape[1]

    # Pack all [D]-length vectors (LN gains/biases + attention/FFN biases) into
    # one [16, D] f32 table: one input instead of 15 tiny (1, D) ones.
    vec_rows = [
        params["ln0_g"], params["ln0_b"],
        params["ln1_g"], params["ln1_b"],
        params["ln2_g"], params["ln2_b"],
        sa["bq"], sa["bk"], sa["bv"], sa["bo"],
        ca["bq"], ca["bk"], ca["bv"], ca["bo"],
        ff["b2"], jnp.zeros((D,), jnp.float32),
    ]
    vec_table = jnp.stack(vec_rows).astype(jnp.float32)          # [16, D]

    def w16(w):                       # matmul weights pre-cast to bf16
        return w.astype(jnp.bfloat16)

    def wo_heads(w):                  # [D, D] -> [H, dk, D] per-head W_o row blocks
        return w.astype(jnp.bfloat16).reshape(n_heads, dk, D)

    args = (
        x, memory,
        tgt_mask.astype(jnp.int8),    # no-op if the caller already built int8 masks
        src_mask.astype(jnp.int8),
        vec_table,
        ff["b1"].reshape(1, d_ff).astype(jnp.float32),
        w16(sa["wq"]), w16(sa["wk"]), w16(sa["wv"]), wo_heads(sa["wo"]),
        w16(ca["wq"]), w16(ca["wk"]), w16(ca["wv"]), wo_heads(ca["wo"]),
        w16(ff["w1"]), w16(ff["w2"]),
    )

    # No grid, no BlockSpecs: every array (activations + <1 MiB of weights) is
    # placed whole in VMEM and the entire decoder layer runs in one invocation.
    return pl.pallas_call(
        functools.partial(_decoder_layer_kernel, n_heads=n_heads),
        out_shape=jax.ShapeDtypeStruct((B, Sq, D), jnp.float32),
        compiler_params=pltpu.CompilerParams(vmem_limit_bytes=32 * 1024 * 1024),
    )(*args)


# --------------------------------- params ------------------------------------

def init_params(key, D, d_ff):
    ks = jax.random.split(key, 12)

    def lin(k, fan_in, fan_out):
        return 0.05 * jax.random.normal(k, (fan_in, fan_out), jnp.float32)

    def attn_params(k0, k1, k2, k3):
        return {
            "wq": lin(k0, D, D), "bq": jnp.zeros((D,), jnp.float32),
            "wk": lin(k1, D, D), "bk": jnp.zeros((D,), jnp.float32),
            "wv": lin(k2, D, D), "bv": jnp.zeros((D,), jnp.float32),
            "wo": lin(k3, D, D), "bo": jnp.zeros((D,), jnp.float32),
        }

    return {
        "ln0_g": jnp.ones((D,), jnp.float32), "ln0_b": jnp.zeros((D,), jnp.float32),
        "ln1_g": jnp.ones((D,), jnp.float32), "ln1_b": jnp.zeros((D,), jnp.float32),
        "ln2_g": jnp.ones((D,), jnp.float32), "ln2_b": jnp.zeros((D,), jnp.float32),
        "self_attn": attn_params(ks[0], ks[1], ks[2], ks[3]),
        "src_attn": attn_params(ks[4], ks[5], ks[6], ks[7]),
        "ffn": {
            "w1": lin(ks[8], D, d_ff), "b1": jnp.zeros((d_ff,), jnp.float32),
            "w2": lin(ks[9], d_ff, D), "b2": jnp.zeros((D,), jnp.float32),
        },
    }


# ----------------------------------- main -------------------------------------

if __name__ == "__main__":
    B, Sq, Skv, D, H, d_ff = 2, 8, 8, 32, 4, 64

    key = jax.random.PRNGKey(0)
    kx, km, kp = jax.random.split(key, 3)

    x = jax.random.normal(kx, (B, Sq, D), jnp.float32)
    memory = jax.random.normal(km, (B, Skv, D), jnp.float32)
    # Masks built directly as int8 (1 = attend, 0 = masked).
    tgt_mask = jnp.broadcast_to(
        jnp.tril(jnp.ones((Sq, Sq), jnp.int8))[None], (B, Sq, Sq))   # causal
    src_mask = jnp.ones((B, 1, Skv), jnp.int8)                        # no padding

    params = init_params(kp, D, d_ff)

    fn = jax.jit(functools.partial(decoder_layer, n_heads=H))
    out = fn(x, memory, src_mask, tgt_mask, params)
    jax.block_until_ready(out)
    assert out.shape == (B, Sq, D) and out.dtype == jnp.float32
    assert bool(jnp.all(jnp.isfinite(out)))
    print("KERNEL_OK")
</pallas_src>

<mosaic_0001>
module attributes {stable_mosaic.version = 11 : i64} {
  func.func @_decoder_layer_kernel(%arg0: memref<2x8x32xf32, #tpu.memory_space<vmem>>, %arg1: memref<2x8x32xf32, #tpu.memory_space<vmem>>, %arg2: memref<2x8x8xi8, #tpu.memory_space<vmem>>, %arg3: memref<2x1x8xi8, #tpu.memory_space<vmem>>, %arg4: memref<16x32xf32, #tpu.memory_space<vmem>>, %arg5: memref<1x64xf32, #tpu.memory_space<vmem>>, %arg6: memref<32x32xbf16, #tpu.memory_space<vmem>>, %arg7: memref<32x32xbf16, #tpu.memory_space<vmem>>, %arg8: memref<32x32xbf16, #tpu.memory_space<vmem>>, %arg9: memref<4x8x32xbf16, #tpu.memory_space<vmem>>, %arg10: memref<32x32xbf16, #tpu.memory_space<vmem>>, %arg11: memref<32x32xbf16, #tpu.memory_space<vmem>>, %arg12: memref<32x32xbf16, #tpu.memory_space<vmem>>, %arg13: memref<4x8x32xbf16, #tpu.memory_space<vmem>>, %arg14: memref<32x64xbf16, #tpu.memory_space<vmem>>, %arg15: memref<64x32xbf16, #tpu.memory_space<vmem>>, %arg16: memref<2x8x32xf32, #tpu.memory_space<vmem>>) attributes {dimension_semantics = [], scalar_prefetch = 0 : i64, scratch_operands = 0 : i64, tpu.core_type = #tpu.core_type<tc>} {
    %c0 = arith.constant 0 : index
    %c0_0 = arith.constant 0 : index
    %0 = vector.load %arg5[%c0, %c0_0] : memref<1x64xf32, #tpu.memory_space<vmem>>, vector<1x64xf32>
    %c0_1 = arith.constant 0 : index
    %c0_2 = arith.constant 0 : index
    %c0_3 = arith.constant 0 : index
    %1 = vector.load %arg0[%c0_1, %c0_2, %c0_3] : memref<2x8x32xf32, #tpu.memory_space<vmem>>, vector<1x8x32xf32>
    %2 = vector.shape_cast %1 : vector<1x8x32xf32> to vector<8x32xf32>
    %c0_4 = arith.constant 0 : index
    %c0_5 = arith.constant 0 : index
    %c0_6 = arith.constant 0 : index
    %3 = vector.load %arg1[%c0_4, %c0_5, %c0_6] : memref<2x8x32xf32, #tpu.memory_space<vmem>>, vector<1x8x32xf32>
    %4 = vector.shape_cast %3 : vector<1x8x32xf32> to vector<8x32xf32>
    %5 = arith.truncf %4 : vector<8x32xf32> to vector<8x32xbf16>
    %c0_7 = arith.constant 0 : index
    %c0_8 = arith.constant 0 : index
    %c0_9 = arith.constant 0 : index
    %6 = vector.load %arg2[%c0_7, %c0_8, %c0_9] : memref<2x8x8xi8, #tpu.memory_space<vmem>>, vector<1x8x8xi8>
    %7 = vector.shape_cast %6 : vector<1x8x8xi8> to vector<8x8xi8>
    %c0_i8 = arith.constant 0 : i8
    %8 = vector.broadcast %c0_i8 : i8 to vector<8x8xi8>
    %9 = arith.cmpi ne, %7, %8 : vector<8x8xi8>
    %c0_10 = arith.constant 0 : index
    %c0_11 = arith.constant 0 : index
    %c0_12 = arith.constant 0 : index
    %10 = vector.load %arg3[%c0_10, %c0_11, %c0_12] : memref<2x1x8xi8, #tpu.memory_space<vmem>>, vector<1x1x8xi8>
    %11 = vector.shape_cast %10 : vector<1x1x8xi8> to vector<1x8xi8>
    %c0_i8_13 = arith.constant 0 : i8
    %12 = vector.broadcast %c0_i8_13 : i8 to vector<1x8xi8>
    %13 = arith.cmpi ne, %11, %12 : vector<1x8xi8>
    %c0_14 = arith.constant 0 : index
    %c0_15 = arith.constant 0 : index
    %14 = vector.load %arg4[%c0_14, %c0_15] : memref<16x32xf32, #tpu.memory_space<vmem>>, vector<1x32xf32>
    %c1 = arith.constant 1 : index
    %c0_16 = arith.constant 0 : index
    %15 = vector.load %arg4[%c1, %c0_16] : memref<16x32xf32, #tpu.memory_space<vmem>>, vector<1x32xf32>
    %cst = arith.constant dense<0.000000e+00> : vector<8xf32>
    %16 = vector.multi_reduction <add>, %2, %cst [1] : vector<8x32xf32> to vector<8xf32>
    %17 = vector.shape_cast %16 : vector<8xf32> to vector<8x1xf32>
    %cst_17 = arith.constant 3.200000e+01 : f32
    %18 = vector.broadcast %cst_17 : f32 to vector<8x1xf32>
    %19 = arith.divf %17, %18 : vector<8x1xf32>
    %20 = vector.broadcast %19 : vector<8x1xf32> to vector<8x32xf32>
    %21 = arith.subf %2, %20 : vector<8x32xf32>
    %22 = arith.mulf %21, %21 : vector<8x32xf32>
    %cst_18 = arith.constant dense<0.000000e+00> : vector<8xf32>
    %23 = vector.multi_reduction <add>, %22, %cst_18 [1] : vector<8x32xf32> to vector<8xf32>
    %24 = vector.shape_cast %23 : vector<8xf32> to vector<8x1xf32>
    %cst_19 = arith.constant 0.0322580636 : f32
    %25 = vector.broadcast %cst_19 : f32 to vector<8x1xf32>
    %26 = arith.mulf %24, %25 : vector<8x1xf32>
    %27 = math.sqrt %26 : vector<8x1xf32>
    %cst_20 = arith.constant 9.99999997E-7 : f32
    %28 = vector.broadcast %cst_20 : f32 to vector<8x1xf32>
    %29 = arith.addf %27, %28 : vector<8x1xf32>
    %30 = tpu.reciprocal %29 : vector<8x1xf32> -> vector<8x1xf32>
    %31 = vector.broadcast %30 : vector<8x1xf32> to vector<8x32xf32>
    %32 = arith.mulf %21, %31 : vector<8x32xf32>
    %33 = vector.broadcast %14 : vector<1x32xf32> to vector<8x32xf32>
    %34 = arith.mulf %33, %32 : vector<8x32xf32>
    %35 = vector.broadcast %15 : vector<1x32xf32> to vector<8x32xf32>
    %36 = arith.addf %34, %35 : vector<8x32xf32>
    %37 = arith.truncf %36 : vector<8x32xf32> to vector<8x32xbf16>
    %c6 = arith.constant 6 : index
    %c0_21 = arith.constant 0 : index
    %38 = vector.load %arg4[%c6, %c0_21] : memref<16x32xf32, #tpu.memory_space<vmem>>, vector<1x32xf32>
    %c7 = arith.constant 7 : index
    %c0_22 = arith.constant 0 : index
    %39 = vector.load %arg4[%c7, %c0_22] : memref<16x32xf32, #tpu.memory_space<vmem>>, vector<1x32xf32>
    %c8 = arith.constant 8 : index
    %c0_23 = arith.constant 0 : index
    %40 = vector.load %arg4[%c8, %c0_23] : memref<16x32xf32, #tpu.memory_space<vmem>>, vector<1x32xf32>
    %c9 = arith.constant 9 : index
    %c0_24 = arith.constant 0 : index
    %41 = vector.load %arg4[%c9, %c0_24] : memref<16x32xf32, #tpu.memory_space<vmem>>, vector<1x32xf32>
    %c0_25 = arith.constant 0 : index
    %c0_26 = arith.constant 0 : index
    %42 = vector.load %arg6[%c0_25, %c0_26] : memref<32x32xbf16, #tpu.memory_space<vmem>>, vector<32x32xbf16>
    %cst_27 = arith.constant dense<0.000000e+00> : vector<8x32xf32>
    %43 = tpu.matmul %37, %42, %cst_27 {dimension_numbers = #tpu.dot_dimension_numbers<[1], [0], [0], [1], [0, 0, 1, 1], [], []>} : vector<8x32xbf16>, vector<32x32xbf16>, vector<8x32xf32> -> vector<8x32xf32>
    %44 = vector.broadcast %38 : vector<1x32xf32> to vector<8x32xf32>
    %45 = arith.addf %43, %44 : vector<8x32xf32>
    %c0_28 = arith.constant 0 : index
    %c0_29 = arith.constant 0 : index
    %46 = vector.load %arg7[%c0_28, %c0_29] : memref<32x32xbf16, #tpu.memory_space<vmem>>, vector<32x32xbf16>
    %cst_30 = arith.constant dense<0.000000e+00> : vector<8x32xf32>
    %47 = tpu.matmul %37, %46, %cst_30 {dimension_numbers = #tpu.dot_dimension_numbers<[1], [0], [0], [1], [0, 0, 1, 1], [], []>} : vector<8x32xbf16>, vector<32x32xbf16>, vector<8x32xf32> -> vector<8x32xf32>
    %48 = vector.broadcast %39 : vector<1x32xf32> to vector<8x32xf32>
    %49 = arith.addf %47, %48 : vector<8x32xf32>
    %c0_31 = arith.constant 0 : index
    %c0_32 = arith.constant 0 : index
    %50 = vector.load %arg8[%c0_31, %c0_32] : memref<32x32xbf16, #tpu.memory_space<vmem>>, vector<32x32xbf16>
    %cst_33 = arith.constant dense<0.000000e+00> : vector<8x32xf32>
    %51 = tpu.matmul %37, %50, %cst_33 {dimension_numbers = #tpu.dot_dimension_numbers<[1], [0], [0], [1], [0, 0, 1, 1], [], []>} : vector<8x32xbf16>, vector<32x32xbf16>, vector<8x32xf32> -> vector<8x32xf32>
    %52 = vector.broadcast %40 : vector<1x32xf32> to vector<8x32xf32>
    %53 = arith.addf %51, %52 : vector<8x32xf32>
    %54 = arith.truncf %45 : vector<8x32xf32> to vector<8x32xbf16>
    %55 = arith.truncf %49 : vector<8x32xf32> to vector<8x32xbf16>
    %56 = arith.truncf %53 : vector<8x32xf32> to vector<8x32xbf16>
    %57 = vector.extract_strided_slice %54 {offsets = [0, 0], sizes = [8, 8], strides = [1, 1]} : vector<8x32xbf16> to vector<8x8xbf16>
    %58 = vector.extract_strided_slice %55 {offsets = [0, 0], sizes = [8, 8], strides = [1, 1]} : vector<8x32xbf16> to vector<8x8xbf16>
    %cst_34 = arith.constant dense<0.000000e+00> : vector<8x8xf32>
    %59 = tpu.matmul %57, %58, %cst_34 {dimension_numbers = #tpu.dot_dimension_numbers<[1], [1], [0], [0], [0, 0, 1, 0], [], []>} : vector<8x8xbf16>, vector<8x8xbf16>, vector<8x8xf32> -> vector<8x8xf32>
    %cst_35 = arith.constant 0.353553385 : f32
    %60 = vector.broadcast %cst_35 : f32 to vector<8x8xf32>
    %61 = arith.mulf %59, %60 : vector<8x8xf32>
    %cst_36 = arith.constant -1.000000e+09 : f32
    %62 = vector.broadcast %cst_36 : f32 to vector<8x8xf32>
    %63 = arith.select %9, %61, %62 : vector<8x8xi1>, vector<8x8xf32>
    %cst_37 = arith.constant dense<0xFF800000> : vector<8xf32>
    %64 = vector.multi_reduction <maximumf>, %63, %cst_37 [1] : vector<8x8xf32> to vector<8xf32>
    %65 = vector.shape_cast %64 : vector<8xf32> to vector<8x1xf32>
    %66 = vector.broadcast %65 : vector<8x1xf32> to vector<8x8xf32>
    %67 = arith.subf %63, %66 : vector<8x8xf32>
    %68 = math.exp %67 : vector<8x8xf32>
    %cst_38 = arith.constant dense<0.000000e+00> : vector<8xf32>
    %69 = vector.multi_reduction <add>, %68, %cst_38 [1] : vector<8x8xf32> to vector<8xf32>
    %70 = vector.shape_cast %69 : vector<8xf32> to vector<8x1xf32>
    %71 = tpu.reciprocal %70 {approx = true} : vector<8x1xf32> -> vector<8x1xf32>
    %72 = vector.broadcast %71 : vector<8x1xf32> to vector<8x8xf32>
    %73 = arith.mulf %68, %72 : vector<8x8xf32>
    %74 = arith.truncf %73 : vector<8x8xf32> to vector<8x8xbf16>
    %75 = vector.extract_strided_slice %56 {offsets = [0, 0], sizes = [8, 8], strides = [1, 1]} : vector<8x32xbf16> to vector<8x8xbf16>
    %cst_39 = arith.constant dense<0.000000e+00> : vector<8x8xf32>
    %76 = tpu.matmul %74, %75, %cst_39 {dimension_numbers = #tpu.dot_dimension_numbers<[1], [0], [0], [1], [0, 0, 1, 1], [], []>} : vector<8x8xbf16>, vector<8x8xbf16>, vector<8x8xf32> -> vector<8x8xf32>
    %77 = arith.truncf %76 : vector<8x8xf32> to vector<8x8xbf16>
    %c0_40 = arith.constant 0 : index
    %c0_41 = arith.constant 0 : index
    %c0_42 = arith.constant 0 : index
    %78 = vector.load %arg9[%c0_40, %c0_41, %c0_42] : memref<4x8x32xbf16, #tpu.memory_space<vmem>>, vector<1x8x32xbf16>
    %79 = vector.shape_cast %78 : vector<1x8x32xbf16> to vector<8x32xbf16>
    %cst_43 = arith.constant dense<0.000000e+00> : vector<8x32xf32>
    %80 = tpu.matmul %77, %79, %cst_43 {dimension_numbers = #tpu.dot_dimension_numbers<[1], [0], [0], [1], [0, 0, 1, 1], [], []>} : vector<8x8xbf16>, vector<8x32xbf16>, vector<8x32xf32> -> vector<8x32xf32>
    %81 = vector.extract_strided_slice %54 {offsets = [0, 8], sizes = [8, 8], strides = [1, 1]} : vector<8x32xbf16> to vector<8x8xbf16>
    %82 = vector.extract_strided_slice %55 {offsets = [0, 8], sizes = [8, 8], strides = [1, 1]} : vector<8x32xbf16> to vector<8x8xbf16>
    %cst_44 = arith.constant dense<0.000000e+00> : vector<8x8xf32>
    %83 = tpu.matmul %81, %82, %cst_44 {dimension_numbers = #tpu.dot_dimension_numbers<[1], [1], [0], [0], [0, 0, 1, 0], [], []>} : vector<8x8xbf16>, vector<8x8xbf16>, vector<8x8xf32> -> vector<8x8xf32>
    %cst_45 = arith.constant 0.353553385 : f32
    %84 = vector.broadcast %cst_45 : f32 to vector<8x8xf32>
    %85 = arith.mulf %83, %84 : vector<8x8xf32>
    %cst_46 = arith.constant -1.000000e+09 : f32
    %86 = vector.broadcast %cst_46 : f32 to vector<8x8xf32>
    %87 = arith.select %9, %85, %86 : vector<8x8xi1>, vector<8x8xf32>
    %cst_47 = arith.constant dense<0xFF800000> : vector<8xf32>
    %88 = vector.multi_reduction <maximumf>, %87, %cst_47 [1] : vector<8x8xf32> to vector<8xf32>
    %89 = vector.shape_cast %88 : vector<8xf32> to vector<8x1xf32>
    %90 = vector.broadcast %89 : vector<8x1xf32> to vector<8x8xf32>
    %91 = arith.subf %87, %90 : vector<8x8xf32>
    %92 = math.exp %91 : vector<8x8xf32>
    %cst_48 = arith.constant dense<0.000000e+00> : vector<8xf32>
    %93 = vector.multi_reduction <add>, %92, %cst_48 [1] : vector<8x8xf32> to vector<8xf32>
    %94 = vector.shape_cast %93 : vector<8xf32> to vector<8x1xf32>
    %95 = tpu.reciprocal %94 {approx = true} : vector<8x1xf32> -> vector<8x1xf32>
    %96 = vector.broadcast %95 : vector<8x1xf32> to vector<8x8xf32>
    %97 = arith.mulf %92, %96 : vector<8x8xf32>
    %98 = arith.truncf %97 : vector<8x8xf32> to vector<8x8xbf16>
    %99 = vector.extract_strided_slice %56 {offsets = [0, 8], sizes = [8, 8], strides = [1, 1]} : vector<8x32xbf16> to vector<8x8xbf16>
    %cst_49 = arith.constant dense<0.000000e+00> : vector<8x8xf32>
    %100 = tpu.matmul %98, %99, %cst_49 {dimension_numbers = #tpu.dot_dimension_numbers<[1], [0], [0], [1], [0, 0, 1, 1], [], []>} : vector<8x8xbf16>, vector<8x8xbf16>, vector<8x8xf32> -> vector<8x8xf32>
    %101 = arith.truncf %100 : vector<8x8xf32> to vector<8x8xbf16>
    %c1_50 = arith.constant 1 : index
    %c0_51 = arith.constant 0 : index
    %c0_52 = arith.constant 0 : index
    %102 = vector.load %arg9[%c1_50, %c0_51, %c0_52] : memref<4x8x32xbf16, #tpu.memory_space<vmem>>, vector<1x8x32xbf16>
    %103 = vector.shape_cast %102 : vector<1x8x32xbf16> to vector<8x32xbf16>
    %cst_53 = arith.constant dense<0.000000e+00> : vector<8x32xf32>
    %104 = tpu.matmul %101, %103, %cst_53 {dimension_numbers = #tpu.dot_dimension_numbers<[1], [0], [0], [1], [0, 0, 1, 1], [], []>} : vector<8x8xbf16>, vector<8x32xbf16>, vector<8x32xf32> -> vector<8x32xf32>
    %105 = arith.addf %80, %104 : vector<8x32xf32>
    %106 = vector.extract_strided_slice %54 {offsets = [0, 16], sizes = [8, 8], strides = [1, 1]} : vector<8x32xbf16> to vector<8x8xbf16>
    %107 = vector.extract_strided_slice %55 {offsets = [0, 16], sizes = [8, 8], strides = [1, 1]} : vector<8x32xbf16> to vector<8x8xbf16>
    %cst_54 = arith.constant dense<0.000000e+00> : vector<8x8xf32>
    %108 = tpu.matmul %106, %107, %cst_54 {dimension_numbers = #tpu.dot_dimension_numbers<[1], [1], [0], [0], [0, 0, 1, 0], [], []>} : vector<8x8xbf16>, vector<8x8xbf16>, vector<8x8xf32> -> vector<8x8xf32>
    %cst_55 = arith.constant 0.353553385 : f32
    %109 = vector.broadcast %cst_55 : f32 to vector<8x8xf32>
    %110 = arith.mulf %108, %109 : vector<8x8xf32>
    %cst_56 = arith.constant -1.000000e+09 : f32
    %111 = vector.broadcast %cst_56 : f32 to vector<8x8xf32>
    %112 = arith.select %9, %110, %111 : vector<8x8xi1>, vector<8x8xf32>
    %cst_57 = arith.constant dense<0xFF800000> : vector<8xf32>
    %113 = vector.multi_reduction <maximumf>, %112, %cst_57 [1] : vector<8x8xf32> to vector<8xf32>
    %114 = vector.shape_cast %113 : vector<8xf32> to vector<8x1xf32>
    %115 = vector.broadcast %114 : vector<8x1xf32> to vector<8x8xf32>
    %116 = arith.subf %112, %115 : vector<8x8xf32>
    %117 = math.exp %116 : vector<8x8xf32>
    %cst_58 = arith.constant dense<0.000000e+00> : vector<8xf32>
    %118 = vector.multi_reduction <add>, %117, %cst_58 [1] : vector<8x8xf32> to vector<8xf32>
    %119 = vector.shape_cast %118 : vector<8xf32> to vector<8x1xf32>
    %120 = tpu.reciprocal %119 {approx = true} : vector<8x1xf32> -> vector<8x1xf32>
    %121 = vector.broadcast %120 : vector<8x1xf32> to vector<8x8xf32>
    %122 = arith.mulf %117, %121 : vector<8x8xf32>
    %123 = arith.truncf %122 : vector<8x8xf32> to vector<8x8xbf16>
    %124 = vector.extract_strided_slice %56 {offsets = [0, 16], sizes = [8, 8], strides = [1, 1]} : vector<8x32xbf16> to vector<8x8xbf16>
    %cst_59 = arith.constant dense<0.000000e+00> : vector<8x8xf32>
    %125 = tpu.matmul %123, %124, %cst_59 {dimension_numbers = #tpu.dot_dimension_numbers<[1], [0], [0], [1], [0, 0, 1, 1], [], []>} : vector<8x8xbf16>, vector<8x8xbf16>, vector<8x8xf32> -> vector<8x8xf32>
    %126 = arith.truncf %125 : vector<8x8xf32> to vector<8x8xbf16>
    %c2 = arith.constant 2 : index
    %c0_60 = arith.constant 0 : index
    %c0_61 = arith.constant 0 : index
    %127 = vector.load %arg9[%c2, %c0_60, %c0_61] : memref<4x8x32xbf16, #tpu.memory_space<vmem>>, vector<1x8x32xbf16>
    %128 = vector.shape_cast %127 : vector<1x8x32xbf16> to vector<8x32xbf16>
    %cst_62 = arith.constant dense<0.000000e+00> : vector<8x32xf32>
    %129 = tpu.matmul %126, %128, %cst_62 {dimension_numbers = #tpu.dot_dimension_numbers<[1], [0], [0], [1], [0, 0, 1, 1], [], []>} : vector<8x8xbf16>, vector<8x32xbf16>, vector<8x32xf32> -> vector<8x32xf32>
    %130 = arith.addf %105, %129 : vector<8x32xf32>
    %131 = vector.extract_strided_slice %54 {offsets = [0, 24], sizes = [8, 8], strides = [1, 1]} : vector<8x32xbf16> to vector<8x8xbf16>
    %132 = vector.extract_strided_slice %55 {offsets = [0, 24], sizes = [8, 8], strides = [1, 1]} : vector<8x32xbf16> to vector<8x8xbf16>
    %cst_63 = arith.constant dense<0.000000e+00> : vector<8x8xf32>
    %133 = tpu.matmul %131, %132, %cst_63 {dimension_numbers = #tpu.dot_dimension_numbers<[1], [1], [0], [0], [0, 0, 1, 0], [], []>} : vector<8x8xbf16>, vector<8x8xbf16>, vector<8x8xf32> -> vector<8x8xf32>
    %cst_64 = arith.constant 0.353553385 : f32
    %134 = vector.broadcast %cst_64 : f32 to vector<8x8xf32>
    %135 = arith.mulf %133, %134 : vector<8x8xf32>
    %cst_65 = arith.constant -1.000000e+09 : f32
    %136 = vector.broadcast %cst_65 : f32 to vector<8x8xf32>
    %137 = arith.select %9, %135, %136 : vector<8x8xi1>, vector<8x8xf32>
    %cst_66 = arith.constant dense<0xFF800000> : vector<8xf32>
    %138 = vector.multi_reduction <maximumf>, %137, %cst_66 [1] : vector<8x8xf32> to vector<8xf32>
    %139 = vector.shape_cast %138 : vector<8xf32> to vector<8x1xf32>
    %140 = vector.broadcast %139 : vector<8x1xf32> to vector<8x8xf32>
    %141 = arith.subf %137, %140 : vector<8x8xf32>
    %142 = math.exp %141 : vector<8x8xf32>
    %cst_67 = arith.constant dense<0.000000e+00> : vector<8xf32>
    %143 = vector.multi_reduction <add>, %142, %cst_67 [1] : vector<8x8xf32> to vector<8xf32>
    %144 = vector.shape_cast %143 : vector<8xf32> to vector<8x1xf32>
    %145 = tpu.reciprocal %144 {approx = true} : vector<8x1xf32> -> vector<8x1xf32>
    %146 = vector.broadcast %145 : vector<8x1xf32> to vector<8x8xf32>
    %147 = arith.mulf %142, %146 : vector<8x8xf32>
    %148 = arith.truncf %147 : vector<8x8xf32> to vector<8x8xbf16>
    %149 = vector.extract_strided_slice %56 {offsets = [0, 24], sizes = [8, 8], strides = [1, 1]} : vector<8x32xbf16> to vector<8x8xbf16>
    %cst_68 = arith.constant dense<0.000000e+00> : vector<8x8xf32>
    %150 = tpu.matmul %148, %149, %cst_68 {dimension_numbers = #tpu.dot_dimension_numbers<[1], [0], [0], [1], [0, 0, 1, 1], [], []>} : vector<8x8xbf16>, vector<8x8xbf16>, vector<8x8xf32> -> vector<8x8xf32>
    %151 = arith.truncf %150 : vector<8x8xf32> to vector<8x8xbf16>
    %c3 = arith.constant 3 : index
    %c0_69 = arith.constant 0 : index
    %c0_70 = arith.constant 0 : index
    %152 = vector.load %arg9[%c3, %c0_69, %c0_70] : memref<4x8x32xbf16, #tpu.memory_space<vmem>>, vector<1x8x32xbf16>
    %153 = vector.shape_cast %152 : vector<1x8x32xbf16> to vector<8x32xbf16>
    %cst_71 = arith.constant dense<0.000000e+00> : vector<8x32xf32>
    %154 = tpu.matmul %151, %153, %cst_71 {dimension_numbers = #tpu.dot_dimension_numbers<[1], [0], [0], [1], [0, 0, 1, 1], [], []>} : vector<8x8xbf16>, vector<8x32xbf16>, vector<8x32xf32> -> vector<8x32xf32>
    %155 = arith.addf %130, %154 : vector<8x32xf32>
    %156 = vector.broadcast %41 : vector<1x32xf32> to vector<8x32xf32>
    %157 = arith.addf %155, %156 : vector<8x32xf32>
    %158 = arith.addf %2, %157 : vector<8x32xf32>
    %c2_72 = arith.constant 2 : index
    %c0_73 = arith.constant 0 : index
    %159 = vector.load %arg4[%c2_72, %c0_73] : memref<16x32xf32, #tpu.memory_space<vmem>>, vector<1x32xf32>
    %c3_74 = arith.constant 3 : index
    %c0_75 = arith.constant 0 : index
    %160 = vector.load %arg4[%c3_74, %c0_75] : memref<16x32xf32, #tpu.memory_space<vmem>>, vector<1x32xf32>
    %cst_76 = arith.constant dense<0.000000e+00> : vector<8xf32>
    %161 = vector.multi_reduction <add>, %158, %cst_76 [1] : vector<8x32xf32> to vector<8xf32>
    %162 = vector.shape_cast %161 : vector<8xf32> to vector<8x1xf32>
    %cst_77 = arith.constant 3.200000e+01 : f32
    %163 = vector.broadcast %cst_77 : f32 to vector<8x1xf32>
    %164 = arith.divf %162, %163 : vector<8x1xf32>
    %165 = vector.broadcast %164 : vector<8x1xf32> to vector<8x32xf32>
    %166 = arith.subf %158, %165 : vector<8x32xf32>
    %167 = arith.mulf %166, %166 : vector<8x32xf32>
    %cst_78 = arith.constant dense<0.000000e+00> : vector<8xf32>
    %168 = vector.multi_reduction <add>, %167, %cst_78 [1] : vector<8x32xf32> to vector<8xf32>
    %169 = vector.shape_cast %168 : vector<8xf32> to vector<8x1xf32>
    %cst_79 = arith.constant 0.0322580636 : f32
    %170 = vector.broadcast %cst_79 : f32 to vector<8x1xf32>
    %171 = arith.mulf %169, %170 : vector<8x1xf32>
    %172 = math.sqrt %171 : vector<8x1xf32>
    %cst_80 = arith.constant 9.99999997E-7 : f32
    %173 = vector.broadcast %cst_80 : f32 to vector<8x1xf32>
    %174 = arith.addf %172, %173 : vector<8x1xf32>
    %175 = tpu.reciprocal %174 : vector<8x1xf32> -> vector<8x1xf32>
    %176 = vector.broadcast %175 : vector<8x1xf32> to vector<8x32xf32>
    %177 = arith.mulf %166, %176 : vector<8x32xf32>
    %178 = vector.broadcast %159 : vector<1x32xf32> to vector<8x32xf32>
    %179 = arith.mulf %178, %177 : vector<8x32xf32>
    %180 = vector.broadcast %160 : vector<1x32xf32> to vector<8x32xf32>
    %181 = arith.addf %179, %180 : vector<8x32xf32>
    %182 = arith.truncf %181 : vector<8x32xf32> to vector<8x32xbf16>
    %c10 = arith.constant 10 : index
    %c0_81 = arith.constant 0 : index
    %183 = vector.load %arg4[%c10, %c0_81] : memref<16x32xf32, #tpu.memory_space<vmem>>, vector<1x32xf32>
    %c11 = arith.constant 11 : index
    %c0_82 = arith.constant 0 : index
    %184 = vector.load %arg4[%c11, %c0_82] : memref<16x32xf32, #tpu.memory_space<vmem>>, vector<1x32xf32>
    %c12 = arith.constant 12 : index
    %c0_83 = arith.constant 0 : index
    %185 = vector.load %arg4[%c12, %c0_83] : memref<16x32xf32, #tpu.memory_space<vmem>>, vector<1x32xf32>
    %c13 = arith.constant 13 : index
    %c0_84 = arith.constant 0 : index
    %186 = vector.load %arg4[%c13, %c0_84] : memref<16x32xf32, #tpu.memory_space<vmem>>, vector<1x32xf32>
    %c0_85 = arith.constant 0 : index
    %c0_86 = arith.constant 0 : index
    %187 = vector.load %arg10[%c0_85, %c0_86] : memref<32x32xbf16, #tpu.memory_space<vmem>>, vector<32x32xbf16>
    %cst_87 = arith.constant dense<0.000000e+00> : vector<8x32xf32>
    %188 = tpu.matmul %182, %187, %cst_87 {dimension_numbers = #tpu.dot_dimension_numbers<[1], [0], [0], [1], [0, 0, 1, 1], [], []>} : vector<8x32xbf16>, vector<32x32xbf16>, vector<8x32xf32> -> vector<8x32xf32>
    %189 = vector.broadcast %183 : vector<1x32xf32> to vector<8x32xf32>
    %190 = arith.addf %188, %189 : vector<8x32xf32>
    %c0_88 = arith.constant 0 : index
    %c0_89 = arith.constant 0 : index
    %191 = vector.load %arg11[%c0_88, %c0_89] : memref<32x32xbf16, #tpu.memory_space<vmem>>, vector<32x32xbf16>
    %cst_90 = arith.constant dense<0.000000e+00> : vector<8x32xf32>
    %192 = tpu.matmul %5, %191, %cst_90 {dimension_numbers = #tpu.dot_dimension_numbers<[1], [0], [0], [1], [0, 0, 1, 1], [], []>} : vector<8x32xbf16>, vector<32x32xbf16>, vector<8x32xf32> -> vector<8x32xf32>
    %193 = vector.broadcast %184 : vector<1x32xf32> to vector<8x32xf32>
    %194 = arith.addf %192, %193 : vector<8x32xf32>
    %c0_91 = arith.constant 0 : index
    %c0_92 = arith.constant 0 : index
    %195 = vector.load %arg12[%c0_91, %c0_92] : memref<32x32xbf16, #tpu.memory_space<vmem>>, vector<32x32xbf16>
    %cst_93 = arith.constant dense<0.000000e+00> : vector<8x32xf32>
    %196 = tpu.matmul %5, %195, %cst_93 {dimension_numbers = #tpu.dot_dimension_numbers<[1], [0], [0], [1], [0, 0, 1, 1], [], []>} : vector<8x32xbf16>, vector<32x32xbf16>, vector<8x32xf32> -> vector<8x32xf32>
    %197 = vector.broadcast %185 : vector<1x32xf32> to vector<8x32xf32>
    %198 = arith.addf %196, %197 : vector<8x32xf32>
    %199 = arith.truncf %190 : vector<8x32xf32> to vector<8x32xbf16>
    %200 = arith.truncf %194 : vector<8x32xf32> to vector<8x32xbf16>
    %201 = arith.truncf %198 : vector<8x32xf32> to vector<8x32xbf16>
    %202 = vector.extract_strided_slice %199 {offsets = [0, 0], sizes = [8, 8], strides = [1, 1]} : vector<8x32xbf16> to vector<8x8xbf16>
    %203 = vector.extract_strided_slice %200 {offsets = [0, 0], sizes = [8, 8], strides = [1, 1]} : vector<8x32xbf16> to vector<8x8xbf16>
    %cst_94 = arith.constant dense<0.000000e+00> : vector<8x8xf32>
    %204 = tpu.matmul %202, %203, %cst_94 {dimension_numbers = #tpu.dot_dimension_numbers<[1], [1], [0], [0], [0, 0, 1, 0], [], []>} : vector<8x8xbf16>, vector<8x8xbf16>, vector<8x8xf32> -> vector<8x8xf32>
    %cst_95 = arith.constant 0.353553385 : f32
    %205 = vector.broadcast %cst_95 : f32 to vector<8x8xf32>
    %206 = arith.mulf %204, %205 : vector<8x8xf32>
    %cst_96 = arith.constant -1.000000e+09 : f32
    %207 = vector.shape_cast %13 : vector<1x8xi1> to vector<1x8xi1>
    %208 = vector.broadcast %207 : vector<1x8xi1> to vector<8x8xi1>
    %209 = vector.broadcast %cst_96 : f32 to vector<8x8xf32>
    %210 = arith.select %208, %206, %209 : vector<8x8xi1>, vector<8x8xf32>
    %cst_97 = arith.constant dense<0xFF800000> : vector<8xf32>
    %211 = vector.multi_reduction <maximumf>, %210, %cst_97 [1] : vector<8x8xf32> to vector<8xf32>
    %212 = vector.shape_cast %211 : vector<8xf32> to vector<8x1xf32>
    %213 = vector.broadcast %212 : vector<8x1xf32> to vector<8x8xf32>
    %214 = arith.subf %210, %213 : vector<8x8xf32>
    %215 = math.exp %214 : vector<8x8xf32>
    %cst_98 = arith.constant dense<0.000000e+00> : vector<8xf32>
    %216 = vector.multi_reduction <add>, %215, %cst_98 [1] : vector<8x8xf32> to vector<8xf32>
    %217 = vector.shape_cast %216 : vector<8xf32> to vector<8x1xf32>
    %218 = tpu.reciprocal %217 {approx = true} : vector<8x1xf32> -> vector<8x1xf32>
    %219 = vector.broadcast %218 : vector<8x1xf32> to vector<8x8xf32>
    %220 = arith.mulf %215, %219 : vector<8x8xf32>
    %221 = arith.truncf %220 : vector<8x8xf32> to vector<8x8xbf16>
    %222 = vector.extract_strided_slice %201 {offsets = [0, 0], sizes = [8, 8], strides = [1, 1]} : vector<8x32xbf16> to vector<8x8xbf16>
    %cst_99 = arith.constant dense<0.000000e+00> : vector<8x8xf32>
    %223 = tpu.matmul %221, %222, %cst_99 {dimension_numbers = #tpu.dot_dimension_numbers<[1], [0], [0], [1], [0, 0, 1, 1], [], []>} : vector<8x8xbf16>, vector<8x8xbf16>, vector<8x8xf32> -> vector<8x8xf32>
    %224 = arith.truncf %223 : vector<8x8xf32> to vector<8x8xbf16>
    %c0_100 = arith.constant 0 : index
    %c0_101 = arith.constant 0 : index
    %c0_102 = arith.constant 0 : index
    %225 = vector.load %arg13[%c0_100, %c0_101, %c0_102] : memref<4x8x32xbf16, #tpu.memory_space<vmem>>, vector<1x8x32xbf16>
    %226 = vector.shape_cast %225 : vector<1x8x32xbf16> to vector<8x32xbf16>
    %cst_103 = arith.constant dense<0.000000e+00> : vector<8x32xf32>
    %227 = tpu.matmul %224, %226, %cst_103 {dimension_numbers = #tpu.dot_dimension_numbers<[1], [0], [0], [1], [0, 0, 1, 1], [], []>} : vector<8x8xbf16>, vector<8x32xbf16>, vector<8x32xf32> -> vector<8x32xf32>
    %228 = vector.extract_strided_slice %199 {offsets = [0, 8], sizes = [8, 8], strides = [1, 1]} : vector<8x32xbf16> to vector<8x8xbf16>
    %229 = vector.extract_strided_slice %200 {offsets = [0, 8], sizes = [8, 8], strides = [1, 1]} : vector<8x32xbf16> to vector<8x8xbf16>
    %cst_104 = arith.constant dense<0.000000e+00> : vector<8x8xf32>
    %230 = tpu.matmul %228, %229, %cst_104 {dimension_numbers = #tpu.dot_dimension_numbers<[1], [1], [0], [0], [0, 0, 1, 0], [], []>} : vector<8x8xbf16>, vector<8x8xbf16>, vector<8x8xf32> -> vector<8x8xf32>
    %cst_105 = arith.constant 0.353553385 : f32
    %231 = vector.broadcast %cst_105 : f32 to vector<8x8xf32>
    %232 = arith.mulf %230, %231 : vector<8x8xf32>
    %cst_106 = arith.constant -1.000000e+09 : f32
    %233 = vector.shape_cast %13 : vector<1x8xi1> to vector<1x8xi1>
    %234 = vector.broadcast %233 : vector<1x8xi1> to vector<8x8xi1>
    %235 = vector.broadcast %cst_106 : f32 to vector<8x8xf32>
    %236 = arith.select %234, %232, %235 : vector<8x8xi1>, vector<8x8xf32>
    %cst_107 = arith.constant dense<0xFF800000> : vector<8xf32>
    %237 = vector.multi_reduction <maximumf>, %236, %cst_107 [1] : vector<8x8xf32> to vector<8xf32>
    %238 = vector.shape_cast %237 : vector<8xf32> to vector<8x1xf32>
    %239 = vector.broadcast %238 : vector<8x1xf32> to vector<8x8xf32>
    %240 = arith.subf %236, %239 : vector<8x8xf32>
    %241 = math.exp %240 : vector<8x8xf32>
    %cst_108 = arith.constant dense<0.000000e+00> : vector<8xf32>
    %242 = vector.multi_reduction <add>, %241, %cst_108 [1] : vector<8x8xf32> to vector<8xf32>
    %243 = vector.shape_cast %242 : vector<8xf32> to vector<8x1xf32>
    %244 = tpu.reciprocal %243 {approx = true} : vector<8x1xf32> -> vector<8x1xf32>
    %245 = vector.broadcast %244 : vector<8x1xf32> to vector<8x8xf32>
    %246 = arith.mulf %241, %245 : vector<8x8xf32>
    %247 = arith.truncf %246 : vector<8x8xf32> to vector<8x8xbf16>
    %248 = vector.extract_strided_slice %201 {offsets = [0, 8], sizes = [8, 8], strides = [1, 1]} : vector<8x32xbf16> to vector<8x8xbf16>
    %cst_109 = arith.constant dense<0.000000e+00> : vector<8x8xf32>
    %249 = tpu.matmul %247, %248, %cst_109 {dimension_numbers = #tpu.dot_dimension_numbers<[1], [0], [0], [1], [0, 0, 1, 1], [], []>} : vector<8x8xbf16>, vector<8x8xbf16>, vector<8x8xf32> -> vector<8x8xf32>
    %250 = arith.truncf %249 : vector<8x8xf32> to vector<8x8xbf16>
    %c1_110 = arith.constant 1 : index
    %c0_111 = arith.constant 0 : index
    %c0_112 = arith.constant 0 : index
    %251 = vector.load %arg13[%c1_110, %c0_111, %c0_112] : memref<4x8x32xbf16, #tpu.memory_space<vmem>>, vector<1x8x32xbf16>
    %252 = vector.shape_cast %251 : vector<1x8x32xbf16> to vector<8x32xbf16>
    %cst_113 = arith.constant dense<0.000000e+00> : vector<8x32xf32>
    %253 = tpu.matmul %250, %252, %cst_113 {dimension_numbers = #tpu.dot_dimension_numbers<[1], [0], [0], [1], [0, 0, 1, 1], [], []>} : vector<8x8xbf16>, vector<8x32xbf16>, vector<8x32xf32> -> vector<8x32xf32>
    %254 = arith.addf %227, %253 : vector<8x32xf32>
    %255 = vector.extract_strided_slice %199 {offsets = [0, 16], sizes = [8, 8], strides = [1, 1]} : vector<8x32xbf16> to vector<8x8xbf16>
    %256 = vector.extract_strided_slice %200 {offsets = [0, 16], sizes = [8, 8], strides = [1, 1]} : vector<8x32xbf16> to vector<8x8xbf16>
    %cst_114 = arith.constant dense<0.000000e+00> : vector<8x8xf32>
    %257 = tpu.matmul %255, %256, %cst_114 {dimension_numbers = #tpu.dot_dimension_numbers<[1], [1], [0], [0], [0, 0, 1, 0], [], []>} : vector<8x8xbf16>, vector<8x8xbf16>, vector<8x8xf32> -> vector<8x8xf32>
    %cst_115 = arith.constant 0.353553385 : f32
    %258 = vector.broadcast %cst_115 : f32 to vector<8x8xf32>
    %259 = arith.mulf %257, %258 : vector<8x8xf32>
    %cst_116 = arith.constant -1.000000e+09 : f32
    %260 = vector.shape_cast %13 : vector<1x8xi1> to vector<1x8xi1>
    %261 = vector.broadcast %260 : vector<1x8xi1> to vector<8x8xi1>
    %262 = vector.broadcast %cst_116 : f32 to vector<8x8xf32>
    %263 = arith.select %261, %259, %262 : vector<8x8xi1>, vector<8x8xf32>
    %cst_117 = arith.constant dense<0xFF800000> : vector<8xf32>
    %264 = vector.multi_reduction <maximumf>, %263, %cst_117 [1] : vector<8x8xf32> to vector<8xf32>
    %265 = vector.shape_cast %264 : vector<8xf32> to vector<8x1xf32>
    %266 = vector.broadcast %265 : vector<8x1xf32> to vector<8x8xf32>
    %267 = arith.subf %263, %266 : vector<8x8xf32>
    %268 = math.exp %267 : vector<8x8xf32>
    %cst_118 = arith.constant dense<0.000000e+00> : vector<8xf32>
    %269 = vector.multi_reduction <add>, %268, %cst_118 [1] : vector<8x8xf32> to vector<8xf32>
    %270 = vector.shape_cast %269 : vector<8xf32> to vector<8x1xf32>
    %271 = tpu.reciprocal %270 {approx = true} : vector<8x1xf32> -> vector<8x1xf32>
    %272 = vector.broadcast %271 : vector<8x1xf32> to vector<8x8xf32>
    %273 = arith.mulf %268, %272 : vector<8x8xf32>
    %274 = arith.truncf %273 : vector<8x8xf32> to vector<8x8xbf16>
    %275 = vector.extract_strided_slice %201 {offsets = [0, 16], sizes = [8, 8], strides = [1, 1]} : vector<8x32xbf16> to vector<8x8xbf16>
    %cst_119 = arith.constant dense<0.000000e+00> : vector<8x8xf32>
    %276 = tpu.matmul %274, %275, %cst_119 {dimension_numbers = #tpu.dot_dimension_numbers<[1], [0], [0], [1], [0, 0, 1, 1], [], []>} : vector<8x8xbf16>, vector<8x8xbf16>, vector<8x8xf32> -> vector<8x8xf32>
    %277 = arith.truncf %276 : vector<8x8xf32> to vector<8x8xbf16>
    %c2_120 = arith.constant 2 : index
    %c0_121 = arith.constant 0 : index
    %c0_122 = arith.constant 0 : index
    %278 = vector.load %arg13[%c2_120, %c0_121, %c0_122] : memref<4x8x32xbf16, #tpu.memory_space<vmem>>, vector<1x8x32xbf16>
    %279 = vector.shape_cast %278 : vector<1x8x32xbf16> to vector<8x32xbf16>
    %cst_123 = arith.constant dense<0.000000e+00> : vector<8x32xf32>
    %280 = tpu.matmul %277, %279, %cst_123 {dimension_numbers = #tpu.dot_dimension_numbers<[1], [0], [0], [1], [0, 0, 1, 1], [], []>} : vector<8x8xbf16>, vector<8x32xbf16>, vector<8x32xf32> -> vector<8x32xf32>
    %281 = arith.addf %254, %280 : vector<8x32xf32>
    %282 = vector.extract_strided_slice %199 {offsets = [0, 24], sizes = [8, 8], strides = [1, 1]} : vector<8x32xbf16> to vector<8x8xbf16>
    %283 = vector.extract_strided_slice %200 {offsets = [0, 24], sizes = [8, 8], strides = [1, 1]} : vector<8x32xbf16> to vector<8x8xbf16>
    %cst_124 = arith.constant dense<0.000000e+00> : vector<8x8xf32>
    %284 = tpu.matmul %282, %283, %cst_124 {dimension_numbers = #tpu.dot_dimension_numbers<[1], [1], [0], [0], [0, 0, 1, 0], [], []>} : vector<8x8xbf16>, vector<8x8xbf16>, vector<8x8xf32> -> vector<8x8xf32>
    %cst_125 = arith.constant 0.353553385 : f32
    %285 = vector.broadcast %cst_125 : f32 to vector<8x8xf32>
    %286 = arith.mulf %284, %285 : vector<8x8xf32>
    %cst_126 = arith.constant -1.000000e+09 : f32
    %287 = vector.shape_cast %13 : vector<1x8xi1> to vector<1x8xi1>
    %288 = vector.broadcast %287 : vector<1x8xi1> to vector<8x8xi1>
    %289 = vector.broadcast %cst_126 : f32 to vector<8x8xf32>
    %290 = arith.select %288, %286, %289 : vector<8x8xi1>, vector<8x8xf32>
    %cst_127 = arith.constant dense<0xFF800000> : vector<8xf32>
    %291 = vector.multi_reduction <maximumf>, %290, %cst_127 [1] : vector<8x8xf32> to vector<8xf32>
    %292 = vector.shape_cast %291 : vector<8xf32> to vector<8x1xf32>
    %293 = vector.broadcast %292 : vector<8x1xf32> to vector<8x8xf32>
    %294 = arith.subf %290, %293 : vector<8x8xf32>
    %295 = math.exp %294 : vector<8x8xf32>
    %cst_128 = arith.constant dense<0.000000e+00> : vector<8xf32>
    %296 = vector.multi_reduction <add>, %295, %cst_128 [1] : vector<8x8xf32> to vector<8xf32>
    %297 = vector.shape_cast %296 : vector<8xf32> to vector<8x1xf32>
    %298 = tpu.reciprocal %297 {approx = true} : vector<8x1xf32> -> vector<8x1xf32>
    %299 = vector.broadcast %298 : vector<8x1xf32> to vector<8x8xf32>
    %300 = arith.mulf %295, %299 : vector<8x8xf32>
    %301 = arith.truncf %300 : vector<8x8xf32> to vector<8x8xbf16>
    %302 = vector.extract_strided_slice %201 {offsets = [0, 24], sizes = [8, 8], strides = [1, 1]} : vector<8x32xbf16> to vector<8x8xbf16>
    %cst_129 = arith.constant dense<0.000000e+00> : vector<8x8xf32>
    %303 = tpu.matmul %301, %302, %cst_129 {dimension_numbers = #tpu.dot_dimension_numbers<[1], [0], [0], [1], [0, 0, 1, 1], [], []>} : vector<8x8xbf16>, vector<8x8xbf16>, vector<8x8xf32> -> vector<8x8xf32>
    %304 = arith.truncf %303 : vector<8x8xf32> to vector<8x8xbf16>
    %c3_130 = arith.constant 3 : index
    %c0_131 = arith.constant 0 : index
    %c0_132 = arith.constant 0 : index
    %305 = vector.load %arg13[%c3_130, %c0_131, %c0_132] : memref<4x8x32xbf16, #tpu.memory_space<vmem>>, vector<1x8x32xbf16>
    %306 = vector.shape_cast %305 : vector<1x8x32xbf16> to vector<8x32xbf16>
    %cst_133 = arith.constant dense<0.000000e+00> : vector<8x32xf32>
    %307 = tpu.matmul %304, %306, %cst_133 {dimension_numbers = #tpu.dot_dimension_numbers<[1], [0], [0], [1], [0, 0, 1, 1], [], []>} : vector<8x8xbf16>, vector<8x32xbf16>, vector<8x32xf32> -> vector<8x32xf32>
    %308 = arith.addf %281, %307 : vector<8x32xf32>
    %309 = vector.broadcast %186 : vector<1x32xf32> to vector<8x32xf32>
    %310 = arith.addf %308, %309 : vector<8x32xf32>
    %311 = arith.addf %158, %310 : vector<8x32xf32>
    %c4 = arith.constant 4 : index
    %c0_134 = arith.constant 0 : index
    %312 = vector.load %arg4[%c4, %c0_134] : memref<16x32xf32, #tpu.memory_space<vmem>>, vector<1x32xf32>
    %c5 = arith.constant 5 : index
    %c0_135 = arith.constant 0 : index
    %313 = vector.load %arg4[%c5, %c0_135] : memref<16x32xf32, #tpu.memory_space<vmem>>, vector<1x32xf32>
    %cst_136 = arith.constant dense<0.000000e+00> : vector<8xf32>
    %314 = vector.multi_reduction <add>, %311, %cst_136 [1] : vector<8x32xf32> to vector<8xf32>
    %315 = vector.shape_cast %314 : vector<8xf32> to vector<8x1xf32>
    %cst_137 = arith.constant 3.200000e+01 : f32
    %316 = vector.broadcast %cst_137 : f32 to vector<8x1xf32>
    %317 = arith.divf %315, %316 : vector<8x1xf32>
    %318 = vector.broadcast %317 : vector<8x1xf32> to vector<8x32xf32>
    %319 = arith.subf %311, %318 : vector<8x32xf32>
    %320 = arith.mulf %319, %319 : vector<8x32xf32>
    %cst_138 = arith.constant dense<0.000000e+00> : vector<8xf32>
    %321 = vector.multi_reduction <add>, %320, %cst_138 [1] : vector<8x32xf32> to vector<8xf32>
    %322 = vector.shape_cast %321 : vector<8xf32> to vector<8x1xf32>
    %cst_139 = arith.constant 0.0322580636 : f32
    %323 = vector.broadcast %cst_139 : f32 to vector<8x1xf32>
    %324 = arith.mulf %322, %323 : vector<8x1xf32>
    %325 = math.sqrt %324 : vector<8x1xf32>
    %cst_140 = arith.constant 9.99999997E-7 : f32
    %326 = vector.broadcast %cst_140 : f32 to vector<8x1xf32>
    %327 = arith.addf %325, %326 : vector<8x1xf32>
    %328 = tpu.reciprocal %327 : vector<8x1xf32> -> vector<8x1xf32>
    %329 = vector.broadcast %328 : vector<8x1xf32> to vector<8x32xf32>
    %330 = arith.mulf %319, %329 : vector<8x32xf32>
    %331 = vector.broadcast %312 : vector<1x32xf32> to vector<8x32xf32>
    %332 = arith.mulf %331, %330 : vector<8x32xf32>
    %333 = vector.broadcast %313 : vector<1x32xf32> to vector<8x32xf32>
    %334 = arith.addf %332, %333 : vector<8x32xf32>
    %335 = arith.truncf %334 : vector<8x32xf32> to vector<8x32xbf16>
    %c14 = arith.constant 14 : index
    %c0_141 = arith.constant 0 : index
    %336 = vector.load %arg4[%c14, %c0_141] : memref<16x32xf32, #tpu.memory_space<vmem>>, vector<1x32xf32>
    %c0_142 = arith.constant 0 : index
    %c0_143 = arith.constant 0 : index
    %337 = vector.load %arg14[%c0_142, %c0_143] : memref<32x64xbf16, #tpu.memory_space<vmem>>, vector<32x64xbf16>
    %cst_144 = arith.constant dense<0.000000e+00> : vector<8x64xf32>
    %338 = tpu.matmul %335, %337, %cst_144 {dimension_numbers = #tpu.dot_dimension_numbers<[1], [0], [0], [1], [0, 0, 1, 1], [], []>} : vector<8x32xbf16>, vector<32x64xbf16>, vector<8x64xf32> -> vector<8x64xf32>
    %339 = vector.broadcast %0 : vector<1x64xf32> to vector<8x64xf32>
    %340 = arith.addf %338, %339 : vector<8x64xf32>
    %cst_145 = arith.constant 0.000000e+00 : f32
    %341 = vector.broadcast %cst_145 : f32 to vector<8x64xf32>
    %342 = arith.maximumf %340, %341 : vector<8x64xf32>
    %343 = arith.truncf %342 : vector<8x64xf32> to vector<8x64xbf16>
    %c0_146 = arith.constant 0 : index
    %c0_147 = arith.constant 0 : index
    %344 = vector.load %arg15[%c0_146, %c0_147] : memref<64x32xbf16, #tpu.memory_space<vmem>>, vector<64x32xbf16>
    %cst_148 = arith.constant dense<0.000000e+00> : vector<8x32xf32>
    %345 = tpu.matmul %343, %344, %cst_148 {dimension_numbers = #tpu.dot_dimension_numbers<[1], [0], [0], [1], [0, 0, 1, 1], [], []>} : vector<8x64xbf16>, vector<64x32xbf16>, vector<8x32xf32> -> vector<8x32xf32>
    %346 = vector.broadcast %336 : vector<1x32xf32> to vector<8x32xf32>
    %347 = arith.addf %345, %346 : vector<8x32xf32>
    %348 = arith.addf %311, %347 : vector<8x32xf32>
    %c0_149 = arith.constant 0 : index
    %c0_150 = arith.constant 0 : index
    %c0_151 = arith.constant 0 : index
    %349 = vector.load %arg16[%c0_149, %c0_150, %c0_151] : memref<2x8x32xf32, #tpu.memory_space<vmem>>, vector<1x8x32xf32>
    %350 = vector.shape_cast %349 : vector<1x8x32xf32> to vector<8x32xf32>
    %351 = vector.shape_cast %348 : vector<8x32xf32> to vector<1x8x32xf32>
    tpu.vector_store %arg16[%c0_149, %c0_150, %c0_151], %351 {strides = array<i32>} : memref<2x8x32xf32, #tpu.memory_space<vmem>>, vector<1x8x32xf32>,
    %c1_152 = arith.constant 1 : index
    %c0_153 = arith.constant 0 : index
    %c0_154 = arith.constant 0 : index
    %352 = vector.load %arg0[%c1_152, %c0_153, %c0_154] : memref<2x8x32xf32, #tpu.memory_space<vmem>>, vector<1x8x32xf32>
    %353 = vector.shape_cast %352 : vector<1x8x32xf32> to vector<8x32xf32>
    %c1_155 = arith.constant 1 : index
    %c0_156 = arith.constant 0 : index
    %c0_157 = arith.constant 0 : index
    %354 = vector.load %arg1[%c1_155, %c0_156, %c0_157] : memref<2x8x32xf32, #tpu.memory_space<vmem>>, vector<1x8x32xf32>
    %355 = vector.shape_cast %354 : vector<1x8x32xf32> to vector<8x32xf32>
    %356 = arith.truncf %355 : vector<8x32xf32> to vector<8x32xbf16>
    %c1_158 = arith.constant 1 : index
    %c0_159 = arith.constant 0 : index
    %c0_160 = arith.constant 0 : index
    %357 = vector.load %arg2[%c1_158, %c0_159, %c0_160] : memref<2x8x8xi8, #tpu.memory_space<vmem>>, vector<1x8x8xi8>
    %358 = vector.shape_cast %357 : vector<1x8x8xi8> to vector<8x8xi8>
    %c0_i8_161 = arith.constant 0 : i8
    %359 = vector.broadcast %c0_i8_161 : i8 to vector<8x8xi8>
    %360 = arith.cmpi ne, %358, %359 : vector<8x8xi8>
    %c1_162 = arith.constant 1 : index
    %c0_163 = arith.constant 0 : index
    %c0_164 = arith.constant 0 : index
    %361 = vector.load %arg3[%c1_162, %c0_163, %c0_164] : memref<2x1x8xi8, #tpu.memory_space<vmem>>, vector<1x1x8xi8>
    %362 = vector.shape_cast %361 : vector<1x1x8xi8> to vector<1x8xi8>
    %c0_i8_165 = arith.constant 0 : i8
    %363 = vector.broadcast %c0_i8_165 : i8 to vector<1x8xi8>
    %364 = arith.cmpi ne, %362, %363 : vector<1x8xi8>
    %c0_166 = arith.constant 0 : index
    %c0_167 = arith.constant 0 : index
    %365 = vector.load %arg4[%c0_166, %c0_167] : memref<16x32xf32, #tpu.memory_space<vmem>>, vector<1x32xf32>
    %c1_168 = arith.constant 1 : index
    %c0_169 = arith.constant 0 : index
    %366 = vector.load %arg4[%c1_168, %c0_169] : memref<16x32xf32, #tpu.memory_space<vmem>>, vector<1x32xf32>
    %cst_170 = arith.constant dense<0.000000e+00> : vector<8xf32>
    %367 = vector.multi_reduction <add>, %353, %cst_170 [1] : vector<8x32xf32> to vector<8xf32>
    %368 = vector.shape_cast %367 : vector<8xf32> to vector<8x1xf32>
    %cst_171 = arith.constant 3.200000e+01 : f32
    %369 = vector.broadcast %cst_171 : f32 to vector<8x1xf32>
    %370 = arith.divf %368, %369 : vector<8x1xf32>
    %371 = vector.broadcast %370 : vector<8x1xf32> to vector<8x32xf32>
    %372 = arith.subf %353, %371 : vector<8x32xf32>
    %373 = arith.mulf %372, %372 : vector<8x32xf32>
    %cst_172 = arith.constant dense<0.000000e+00> : vector<8xf32>
    %374 = vector.multi_reduction <add>, %373, %cst_172 [1] : vector<8x32xf32> to vector<8xf32>
    %375 = vector.shape_cast %374 : vector<8xf32> to vector<8x1xf32>
    %cst_173 = arith.constant 0.0322580636 : f32
    %376 = vector.broadcast %cst_173 : f32 to vector<8x1xf32>
    %377 = arith.mulf %375, %376 : vector<8x1xf32>
    %378 = math.sqrt %377 : vector<8x1xf32>
    %cst_174 = arith.constant 9.99999997E-7 : f32
    %379 = vector.broadcast %cst_174 : f32 to vector<8x1xf32>
    %380 = arith.addf %378, %379 : vector<8x1xf32>
    %381 = tpu.reciprocal %380 : vector<8x1xf32> -> vector<8x1xf32>
    %382 = vector.broadcast %381 : vector<8x1xf32> to vector<8x32xf32>
    %383 = arith.mulf %372, %382 : vector<8x32xf32>
    %384 = vector.broadcast %365 : vector<1x32xf32> to vector<8x32xf32>
    %385 = arith.mulf %384, %383 : vector<8x32xf32>
    %386 = vector.broadcast %366 : vector<1x32xf32> to vector<8x32xf32>
    %387 = arith.addf %385, %386 : vector<8x32xf32>
    %388 = arith.truncf %387 : vector<8x32xf32> to vector<8x32xbf16>
    %c6_175 = arith.constant 6 : index
    %c0_176 = arith.constant 0 : index
    %389 = vector.load %arg4[%c6_175, %c0_176] : memref<16x32xf32, #tpu.memory_space<vmem>>, vector<1x32xf32>
    %c7_177 = arith.constant 7 : index
    %c0_178 = arith.constant 0 : index
    %390 = vector.load %arg4[%c7_177, %c0_178] : memref<16x32xf32, #tpu.memory_space<vmem>>, vector<1x32xf32>
    %c8_179 = arith.constant 8 : index
    %c0_180 = arith.constant 0 : index
    %391 = vector.load %arg4[%c8_179, %c0_180] : memref<16x32xf32, #tpu.memory_space<vmem>>, vector<1x32xf32>
    %c9_181 = arith.constant 9 : index
    %c0_182 = arith.constant 0 : index
    %392 = vector.load %arg4[%c9_181, %c0_182] : memref<16x32xf32, #tpu.memory_space<vmem>>, vector<1x32xf32>
    %c0_183 = arith.constant 0 : index
    %c0_184 = arith.constant 0 : index
    %393 = vector.load %arg6[%c0_183, %c0_184] : memref<32x32xbf16, #tpu.memory_space<vmem>>, vector<32x32xbf16>
    %cst_185 = arith.constant dense<0.000000e+00> : vector<8x32xf32>
    %394 = tpu.matmul %388, %393, %cst_185 {dimension_numbers = #tpu.dot_dimension_numbers<[1], [0], [0], [1], [0, 0, 1, 1], [], []>} : vector<8x32xbf16>, vector<32x32xbf16>, vector<8x32xf32> -> vector<8x32xf32>
    %395 = vector.broadcast %389 : vector<1x32xf32> to vector<8x32xf32>
    %396 = arith.addf %394, %395 : vector<8x32xf32>
    %c0_186 = arith.constant 0 : index
    %c0_187 = arith.constant 0 : index
    %397 = vector.load %arg7[%c0_186, %c0_187] : memref<32x32xbf16, #tpu.memory_space<vmem>>, vector<32x32xbf16>
    %cst_188 = arith.constant dense<0.000000e+00> : vector<8x32xf32>
    %398 = tpu.matmul %388, %397, %cst_188 {dimension_numbers = #tpu.dot_dimension_numbers<[1], [0], [0], [1], [0, 0, 1, 1], [], []>} : vector<8x32xbf16>, vector<32x32xbf16>, vector<8x32xf32> -> vector<8x32xf32>
    %399 = vector.broadcast %390 : vector<1x32xf32> to vector<8x32xf32>
    %400 = arith.addf %398, %399 : vector<8x32xf32>
    %c0_189 = arith.constant 0 : index
    %c0_190 = arith.constant 0 : index
    %401 = vector.load %arg8[%c0_189, %c0_190] : memref<32x32xbf16, #tpu.memory_space<vmem>>, vector<32x32xbf16>
    %cst_191 = arith.constant dense<0.000000e+00> : vector<8x32xf32>
    %402 = tpu.matmul %388, %401, %cst_191 {dimension_numbers = #tpu.dot_dimension_numbers<[1], [0], [0], [1], [0, 0, 1, 1], [], []>} : vector<8x32xbf16>, vector<32x32xbf16>, vector<8x32xf32> -> vector<8x32xf32>
    %403 = vector.broadcast %391 : vector<1x32xf32> to vector<8x32xf32>
    %404 = arith.addf %402, %403 : vector<8x32xf32>
    %405 = arith.truncf %396 : vector<8x32xf32> to vector<8x32xbf16>
    %406 = arith.truncf %400 : vector<8x32xf32> to vector<8x32xbf16>
    %407 = arith.truncf %404 : vector<8x32xf32> to vector<8x32xbf16>
    %408 = vector.extract_strided_slice %405 {offsets = [0, 0], sizes = [8, 8], strides = [1, 1]} : vector<8x32xbf16> to vector<8x8xbf16>
    %409 = vector.extract_strided_slice %406 {offsets = [0, 0], sizes = [8, 8], strides = [1, 1]} : vector<8x32xbf16> to vector<8x8xbf16>
    %cst_192 = arith.constant dense<0.000000e+00> : vector<8x8xf32>
    %410 = tpu.matmul %408, %409, %cst_192 {dimension_numbers = #tpu.dot_dimension_numbers<[1], [1], [0], [0], [0, 0, 1, 0], [], []>} : vector<8x8xbf16>, vector<8x8xbf16>, vector<8x8xf32> -> vector<8x8xf32>
    %cst_193 = arith.constant 0.353553385 : f32
    %411 = vector.broadcast %cst_193 : f32 to vector<8x8xf32>
    %412 = arith.mulf %410, %411 : vector<8x8xf32>
    %cst_194 = arith.constant -1.000000e+09 : f32
    %413 = vector.broadcast %cst_194 : f32 to vector<8x8xf32>
    %414 = arith.select %360, %412, %413 : vector<8x8xi1>, vector<8x8xf32>
    %cst_195 = arith.constant dense<0xFF800000> : vector<8xf32>
    %415 = vector.multi_reduction <maximumf>, %414, %cst_195 [1] : vector<8x8xf32> to vector<8xf32>
    %416 = vector.shape_cast %415 : vector<8xf32> to vector<8x1xf32>
    %417 = vector.broadcast %416 : vector<8x1xf32> to vector<8x8xf32>
    %418 = arith.subf %414, %417 : vector<8x8xf32>
    %419 = math.exp %418 : vector<8x8xf32>
    %cst_196 = arith.constant dense<0.000000e+00> : vector<8xf32>
    %420 = vector.multi_reduction <add>, %419, %cst_196 [1] : vector<8x8xf32> to vector<8xf32>
    %421 = vector.shape_cast %420 : vector<8xf32> to vector<8x1xf32>
    %422 = tpu.reciprocal %421 {approx = true} : vector<8x1xf32> -> vector<8x1xf32>
    %423 = vector.broadcast %422 : vector<8x1xf32> to vector<8x8xf32>
    %424 = arith.mulf %419, %423 : vector<8x8xf32>
    %425 = arith.truncf %424 : vector<8x8xf32> to vector<8x8xbf16>
    %426 = vector.extract_strided_slice %407 {offsets = [0, 0], sizes = [8, 8], strides = [1, 1]} : vector<8x32xbf16> to vector<8x8xbf16>
    %cst_197 = arith.constant dense<0.000000e+00> : vector<8x8xf32>
    %427 = tpu.matmul %425, %426, %cst_197 {dimension_numbers = #tpu.dot_dimension_numbers<[1], [0], [0], [1], [0, 0, 1, 1], [], []>} : vector<8x8xbf16>, vector<8x8xbf16>, vector<8x8xf32> -> vector<8x8xf32>
    %428 = arith.truncf %427 : vector<8x8xf32> to vector<8x8xbf16>
    %c0_198 = arith.constant 0 : index
    %c0_199 = arith.constant 0 : index
    %c0_200 = arith.constant 0 : index
    %429 = vector.load %arg9[%c0_198, %c0_199, %c0_200] : memref<4x8x32xbf16, #tpu.memory_space<vmem>>, vector<1x8x32xbf16>
    %430 = vector.shape_cast %429 : vector<1x8x32xbf16> to vector<8x32xbf16>
    %cst_201 = arith.constant dense<0.000000e+00> : vector<8x32xf32>
    %431 = tpu.matmul %428, %430, %cst_201 {dimension_numbers = #tpu.dot_dimension_numbers<[1], [0], [0], [1], [0, 0, 1, 1], [], []>} : vector<8x8xbf16>, vector<8x32xbf16>, vector<8x32xf32> -> vector<8x32xf32>
    %432 = vector.extract_strided_slice %405 {offsets = [0, 8], sizes = [8, 8], strides = [1, 1]} : vector<8x32xbf16> to vector<8x8xbf16>
    %433 = vector.extract_strided_slice %406 {offsets = [0, 8], sizes = [8, 8], strides = [1, 1]} : vector<8x32xbf16> to vector<8x8xbf16>
    %cst_202 = arith.constant dense<0.000000e+00> : vector<8x8xf32>
    %434 = tpu.matmul %432, %433, %cst_202 {dimension_numbers = #tpu.dot_dimension_numbers<[1], [1], [0], [0], [0, 0, 1, 0], [], []>} : vector<8x8xbf16>, vector<8x8xbf16>, vector<8x8xf32> -> vector<8x8xf32>
    %cst_203 = arith.constant 0.353553385 : f32
    %435 = vector.broadcast %cst_203 : f32 to vector<8x8xf32>
    %436 = arith.mulf %434, %435 : vector<8x8xf32>
    %cst_204 = arith.constant -1.000000e+09 : f32
    %437 = vector.broadcast %cst_204 : f32 to vector<8x8xf32>
    %438 = arith.select %360, %436, %437 : vector<8x8xi1>, vector<8x8xf32>
    %cst_205 = arith.constant dense<0xFF800000> : vector<8xf32>
    %439 = vector.multi_reduction <maximumf>, %438, %cst_205 [1] : vector<8x8xf32> to vector<8xf32>
    %440 = vector.shape_cast %439 : vector<8xf32> to vector<8x1xf32>
    %441 = vector.broadcast %440 : vector<8x1xf32> to vector<8x8xf32>
    %442 = arith.subf %438, %441 : vector<8x8xf32>
    %443 = math.exp %442 : vector<8x8xf32>
    %cst_206 = arith.constant dense<0.000000e+00> : vector<8xf32>
    %444 = vector.multi_reduction <add>, %443, %cst_206 [1] : vector<8x8xf32> to vector<8xf32>
    %445 = vector.shape_cast %444 : vector<8xf32> to vector<8x1xf32>
    %446 = tpu.reciprocal %445 {approx = true} : vector<8x1xf32> -> vector<8x1xf32>
    %447 = vector.broadcast %446 : vector<8x1xf32> to vector<8x8xf32>
    %448 = arith.mulf %443, %447 : vector<8x8xf32>
    %449 = arith.truncf %448 : vector<8x8xf32> to vector<8x8xbf16>
    %450 = vector.extract_strided_slice %407 {offsets = [0, 8], sizes = [8, 8], strides = [1, 1]} : vector<8x32xbf16> to vector<8x8xbf16>
    %cst_207 = arith.constant dense<0.000000e+00> : vector<8x8xf32>
    %451 = tpu.matmul %449, %450, %cst_207 {dimension_numbers = #tpu.dot_dimension_numbers<[1], [0], [0], [1], [0, 0, 1, 1], [], []>} : vector<8x8xbf16>, vector<8x8xbf16>, vector<8x8xf32> -> vector<8x8xf32>
    %452 = arith.truncf %451 : vector<8x8xf32> to vector<8x8xbf16>
    %c1_208 = arith.constant 1 : index
    %c0_209 = arith.constant 0 : index
    %c0_210 = arith.constant 0 : index
    %453 = vector.load %arg9[%c1_208, %c0_209, %c0_210] : memref<4x8x32xbf16, #tpu.memory_space<vmem>>, vector<1x8x32xbf16>
    %454 = vector.shape_cast %453 : vector<1x8x32xbf16> to vector<8x32xbf16>
    %cst_211 = arith.constant dense<0.000000e+00> : vector<8x32xf32>
    %455 = tpu.matmul %452, %454, %cst_211 {dimension_numbers = #tpu.dot_dimension_numbers<[1], [0], [0], [1], [0, 0, 1, 1], [], []>} : vector<8x8xbf16>, vector<8x32xbf16>, vector<8x32xf32> -> vector<8x32xf32>
    %456 = arith.addf %431, %455 : vector<8x32xf32>
    %457 = vector.extract_strided_slice %405 {offsets = [0, 16], sizes = [8, 8], strides = [1, 1]} : vector<8x32xbf16> to vector<8x8xbf16>
    %458 = vector.extract_strided_slice %406 {offsets = [0, 16], sizes = [8, 8], strides = [1, 1]} : vector<8x32xbf16> to vector<8x8xbf16>
    %cst_212 = arith.constant dense<0.000000e+00> : vector<8x8xf32>
    %459 = tpu.matmul %457, %458, %cst_212 {dimension_numbers = #tpu.dot_dimension_numbers<[1], [1], [0], [0], [0, 0, 1, 0], [], []>} : vector<8x8xbf16>, vector<8x8xbf16>, vector<8x8xf32> -> vector<8x8xf32>
    %cst_213 = arith.constant 0.353553385 : f32
    %460 = vector.broadcast %cst_213 : f32 to vector<8x8xf32>
    %461 = arith.mulf %459, %460 : vector<8x8xf32>
    %cst_214 = arith.constant -1.000000e+09 : f32
    %462 = vector.broadcast %cst_214 : f32 to vector<8x8xf32>
    %463 = arith.select %360, %461, %462 : vector<8x8xi1>, vector<8x8xf32>
    %cst_215 = arith.constant dense<0xFF800000> : vector<8xf32>
    %464 = vector.multi_reduction <maximumf>, %463, %cst_215 [1] : vector<8x8xf32> to vector<8xf32>
    %465 = vector.shape_cast %464 : vector<8xf32> to vector<8x1xf32>
    %466 = vector.broadcast %465 : vector<8x1xf32> to vector<8x8xf32>
    %467 = arith.subf %463, %466 : vector<8x8xf32>
    %468 = math.exp %467 : vector<8x8xf32>
    %cst_216 = arith.constant dense<0.000000e+00> : vector<8xf32>
    %469 = vector.multi_reduction <add>, %468, %cst_216 [1] : vector<8x8xf32> to vector<8xf32>
    %470 = vector.shape_cast %469 : vector<8xf32> to vector<8x1xf32>
    %471 = tpu.reciprocal %470 {approx = true} : vector<8x1xf32> -> vector<8x1xf32>
    %472 = vector.broadcast %471 : vector<8x1xf32> to vector<8x8xf32>
    %473 = arith.mulf %468, %472 : vector<8x8xf32>
    %474 = arith.truncf %473 : vector<8x8xf32> to vector<8x8xbf16>
    %475 = vector.extract_strided_slice %407 {offsets = [0, 16], sizes = [8, 8], strides = [1, 1]} : vector<8x32xbf16> to vector<8x8xbf16>
    %cst_217 = arith.constant dense<0.000000e+00> : vector<8x8xf32>
    %476 = tpu.matmul %474, %475, %cst_217 {dimension_numbers = #tpu.dot_dimension_numbers<[1], [0], [0], [1], [0, 0, 1, 1], [], []>} : vector<8x8xbf16>, vector<8x8xbf16>, vector<8x8xf32> -> vector<8x8xf32>
    %477 = arith.truncf %476 : vector<8x8xf32> to vector<8x8xbf16>
    %c2_218 = arith.constant 2 : index
    %c0_219 = arith.constant 0 : index
    %c0_220 = arith.constant 0 : index
    %478 = vector.load %arg9[%c2_218, %c0_219, %c0_220] : memref<4x8x32xbf16, #tpu.memory_space<vmem>>, vector<1x8x32xbf16>
    %479 = vector.shape_cast %478 : vector<1x8x32xbf16> to vector<8x32xbf16>
    %cst_221 = arith.constant dense<0.000000e+00> : vector<8x32xf32>
    %480 = tpu.matmul %477, %479, %cst_221 {dimension_numbers = #tpu.dot_dimension_numbers<[1], [0], [0], [1], [0, 0, 1, 1], [], []>} : vector<8x8xbf16>, vector<8x32xbf16>, vector<8x32xf32> -> vector<8x32xf32>
    %481 = arith.addf %456, %480 : vector<8x32xf32>
    %482 = vector.extract_strided_slice %405 {offsets = [0, 24], sizes = [8, 8], strides = [1, 1]} : vector<8x32xbf16> to vector<8x8xbf16>
    %483 = vector.extract_strided_slice %406 {offsets = [0, 24], sizes = [8, 8], strides = [1, 1]} : vector<8x32xbf16> to vector<8x8xbf16>
    %cst_222 = arith.constant dense<0.000000e+00> : vector<8x8xf32>
    %484 = tpu.matmul %482, %483, %cst_222 {dimension_numbers = #tpu.dot_dimension_numbers<[1], [1], [0], [0], [0, 0, 1, 0], [], []>} : vector<8x8xbf16>, vector<8x8xbf16>, vector<8x8xf32> -> vector<8x8xf32>
    %cst_223 = arith.constant 0.353553385 : f32
    %485 = vector.broadcast %cst_223 : f32 to vector<8x8xf32>
    %486 = arith.mulf %484, %485 : vector<8x8xf32>
    %cst_224 = arith.constant -1.000000e+09 : f32
    %487 = vector.broadcast %cst_224 : f32 to vector<8x8xf32>
    %488 = arith.select %360, %486, %487 : vector<8x8xi1>, vector<8x8xf32>
    %cst_225 = arith.constant dense<0xFF800000> : vector<8xf32>
    %489 = vector.multi_reduction <maximumf>, %488, %cst_225 [1] : vector<8x8xf32> to vector<8xf32>
    %490 = vector.shape_cast %489 : vector<8xf32> to vector<8x1xf32>
    %491 = vector.broadcast %490 : vector<8x1xf32> to vector<8x8xf32>
    %492 = arith.subf %488, %491 : vector<8x8xf32>
    %493 = math.exp %492 : vector<8x8xf32>
    %cst_226 = arith.constant dense<0.000000e+00> : vector<8xf32>
    %494 = vector.multi_reduction <add>, %493, %cst_226 [1] : vector<8x8xf32> to vector<8xf32>
    %495 = vector.shape_cast %494 : vector<8xf32> to vector<8x1xf32>
    %496 = tpu.reciprocal %495 {approx = true} : vector<8x1xf32> -> vector<8x1xf32>
    %497 = vector.broadcast %496 : vector<8x1xf32> to vector<8x8xf32>
    %498 = arith.mulf %493, %497 : vector<8x8xf32>
    %499 = arith.truncf %498 : vector<8x8xf32> to vector<8x8xbf16>
    %500 = vector.extract_strided_slice %407 {offsets = [0, 24], sizes = [8, 8], strides = [1, 1]} : vector<8x32xbf16> to vector<8x8xbf16>
    %cst_227 = arith.constant dense<0.000000e+00> : vector<8x8xf32>
    %501 = tpu.matmul %499, %500, %cst_227 {dimension_numbers = #tpu.dot_dimension_numbers<[1], [0], [0], [1], [0, 0, 1, 1], [], []>} : vector<8x8xbf16>, vector<8x8xbf16>, vector<8x8xf32> -> vector<8x8xf32>
    %502 = arith.truncf %501 : vector<8x8xf32> to vector<8x8xbf16>
    %c3_228 = arith.constant 3 : index
    %c0_229 = arith.constant 0 : index
    %c0_230 = arith.constant 0 : index
    %503 = vector.load %arg9[%c3_228, %c0_229, %c0_230] : memref<4x8x32xbf16, #tpu.memory_space<vmem>>, vector<1x8x32xbf16>
    %504 = vector.shape_cast %503 : vector<1x8x32xbf16> to vector<8x32xbf16>
    %cst_231 = arith.constant dense<0.000000e+00> : vector<8x32xf32>
    %505 = tpu.matmul %502, %504, %cst_231 {dimension_numbers = #tpu.dot_dimension_numbers<[1], [0], [0], [1], [0, 0, 1, 1], [], []>} : vector<8x8xbf16>, vector<8x32xbf16>, vector<8x32xf32> -> vector<8x32xf32>
    %506 = arith.addf %481, %505 : vector<8x32xf32>
    %507 = vector.broadcast %392 : vector<1x32xf32> to vector<8x32xf32>
    %508 = arith.addf %506, %507 : vector<8x32xf32>
    %509 = arith.addf %353, %508 : vector<8x32xf32>
    %c2_232 = arith.constant 2 : index
    %c0_233 = arith.constant 0 : index
    %510 = vector.load %arg4[%c2_232, %c0_233] : memref<16x32xf32, #tpu.memory_space<vmem>>, vector<1x32xf32>
    %c3_234 = arith.constant 3 : index
    %c0_235 = arith.constant 0 : index
    %511 = vector.load %arg4[%c3_234, %c0_235] : memref<16x32xf32, #tpu.memory_space<vmem>>, vector<1x32xf32>
    %cst_236 = arith.constant dense<0.000000e+00> : vector<8xf32>
    %512 = vector.multi_reduction <add>, %509, %cst_236 [1] : vector<8x32xf32> to vector<8xf32>
    %513 = vector.shape_cast %512 : vector<8xf32> to vector<8x1xf32>
    %cst_237 = arith.constant 3.200000e+01 : f32
    %514 = vector.broadcast %cst_237 : f32 to vector<8x1xf32>
    %515 = arith.divf %513, %514 : vector<8x1xf32>
    %516 = vector.broadcast %515 : vector<8x1xf32> to vector<8x32xf32>
    %517 = arith.subf %509, %516 : vector<8x32xf32>
    %518 = arith.mulf %517, %517 : vector<8x32xf32>
    %cst_238 = arith.constant dense<0.000000e+00> : vector<8xf32>
    %519 = vector.multi_reduction <add>, %518, %cst_238 [1] : vector<8x32xf32> to vector<8xf32>
    %520 = vector.shape_cast %519 : vector<8xf32> to vector<8x1xf32>
    %cst_239 = arith.constant 0.0322580636 : f32
    %521 = vector.broadcast %cst_239 : f32 to vector<8x1xf32>
    %522 = arith.mulf %520, %521 : vector<8x1xf32>
    %523 = math.sqrt %522 : vector<8x1xf32>
    %cst_240 = arith.constant 9.99999997E-7 : f32
    %524 = vector.broadcast %cst_240 : f32 to vector<8x1xf32>
    %525 = arith.addf %523, %524 : vector<8x1xf32>
    %526 = tpu.reciprocal %525 : vector<8x1xf32> -> vector<8x1xf32>
    %527 = vector.broadcast %526 : vector<8x1xf32> to vector<8x32xf32>
    %528 = arith.mulf %517, %527 : vector<8x32xf32>
    %529 = vector.broadcast %510 : vector<1x32xf32> to vector<8x32xf32>
    %530 = arith.mulf %529, %528 : vector<8x32xf32>
    %531 = vector.broadcast %511 : vector<1x32xf32> to vector<8x32xf32>
    %532 = arith.addf %530, %531 : vector<8x32xf32>
    %533 = arith.truncf %532 : vector<8x32xf32> to vector<8x32xbf16>
    %c10_241 = arith.constant 10 : index
    %c0_242 = arith.constant 0 : index
    %534 = vector.load %arg4[%c10_241, %c0_242] : memref<16x32xf32, #tpu.memory_space<vmem>>, vector<1x32xf32>
    %c11_243 = arith.constant 11 : index
    %c0_244 = arith.constant 0 : index
    %535 = vector.load %arg4[%c11_243, %c0_244] : memref<16x32xf32, #tpu.memory_space<vmem>>, vector<1x32xf32>
    %c12_245 = arith.constant 12 : index
    %c0_246 = arith.constant 0 : index
    %536 = vector.load %arg4[%c12_245, %c0_246] : memref<16x32xf32, #tpu.memory_space<vmem>>, vector<1x32xf32>
    %c13_247 = arith.constant 13 : index
    %c0_248 = arith.constant 0 : index
    %537 = vector.load %arg4[%c13_247, %c0_248] : memref<16x32xf32, #tpu.memory_space<vmem>>, vector<1x32xf32>
    %c0_249 = arith.constant 0 : index
    %c0_250 = arith.constant 0 : index
    %538 = vector.load %arg10[%c0_249, %c0_250] : memref<32x32xbf16, #tpu.memory_space<vmem>>, vector<32x32xbf16>
    %cst_251 = arith.constant dense<0.000000e+00> : vector<8x32xf32>
    %539 = tpu.matmul %533, %538, %cst_251 {dimension_numbers = #tpu.dot_dimension_numbers<[1], [0], [0], [1], [0, 0, 1, 1], [], []>} : vector<8x32xbf16>, vector<32x32xbf16>, vector<8x32xf32> -> vector<8x32xf32>
    %540 = vector.broadcast %534 : vector<1x32xf32> to vector<8x32xf32>
    %541 = arith.addf %539, %540 : vector<8x32xf32>
    %c0_252 = arith.constant 0 : index
    %c0_253 = arith.constant 0 : index
    %542 = vector.load %arg11[%c0_252, %c0_253] : memref<32x32xbf16, #tpu.memory_space<vmem>>, vector<32x32xbf16>
    %cst_254 = arith.constant dense<0.000000e+00> : vector<8x32xf32>
    %543 = tpu.matmul %356, %542, %cst_254 {dimension_numbers = #tpu.dot_dimension_numbers<[1], [0], [0], [1], [0, 0, 1, 1], [], []>} : vector<8x32xbf16>, vector<32x32xbf16>, vector<8x32xf32> -> vector<8x32xf32>
    %544 = vector.broadcast %535 : vector<1x32xf32> to vector<8x32xf32>
    %545 = arith.addf %543, %544 : vector<8x32xf32>
    %c0_255 = arith.constant 0 : index
    %c0_256 = arith.constant 0 : index
    %546 = vector.load %arg12[%c0_255, %c0_256] : memref<32x32xbf16, #tpu.memory_space<vmem>>, vector<32x32xbf16>
    %cst_257 = arith.constant dense<0.000000e+00> : vector<8x32xf32>
    %547 = tpu.matmul %356, %546, %cst_257 {dimension_numbers = #tpu.dot_dimension_numbers<[1], [0], [0], [1], [0, 0, 1, 1], [], []>} : vector<8x32xbf16>, vector<32x32xbf16>, vector<8x32xf32> -> vector<8x32xf32>
    %548 = vector.broadcast %536 : vector<1x32xf32> to vector<8x32xf32>
    %549 = arith.addf %547, %548 : vector<8x32xf32>
    %550 = arith.truncf %541 : vector<8x32xf32> to vector<8x32xbf16>
    %551 = arith.truncf %545 : vector<8x32xf32> to vector<8x32xbf16>
    %552 = arith.truncf %549 : vector<8x32xf32> to vector<8x32xbf16>
    %553 = vector.extract_strided_slice %550 {offsets = [0, 0], sizes = [8, 8], strides = [1, 1]} : vector<8x32xbf16> to vector<8x8xbf16>
    %554 = vector.extract_strided_slice %551 {offsets = [0, 0], sizes = [8, 8], strides = [1, 1]} : vector<8x32xbf16> to vector<8x8xbf16>
    %cst_258 = arith.constant dense<0.000000e+00> : vector<8x8xf32>
    %555 = tpu.matmul %553, %554, %cst_258 {dimension_numbers = #tpu.dot_dimension_numbers<[1], [1], [0], [0], [0, 0, 1, 0], [], []>} : vector<8x8xbf16>, vector<8x8xbf16>, vector<8x8xf32> -> vector<8x8xf32>
    %cst_259 = arith.constant 0.353553385 : f32
    %556 = vector.broadcast %cst_259 : f32 to vector<8x8xf32>
    %557 = arith.mulf %555, %556 : vector<8x8xf32>
    %cst_260 = arith.constant -1.000000e+09 : f32
    %558 = vector.shape_cast %364 : vector<1x8xi1> to vector<1x8xi1>
    %559 = vector.broadcast %558 : vector<1x8xi1> to vector<8x8xi1>
    %560 = vector.broadcast %cst_260 : f32 to vector<8x8xf32>
    %561 = arith.select %559, %557, %560 : vector<8x8xi1>, vector<8x8xf32>
    %cst_261 = arith.constant dense<0xFF800000> : vector<8xf32>
    %562 = vector.multi_reduction <maximumf>, %561, %cst_261 [1] : vector<8x8xf32> to vector<8xf32>
    %563 = vector.shape_cast %562 : vector<8xf32> to vector<8x1xf32>
    %564 = vector.broadcast %563 : vector<8x1xf32> to vector<8x8xf32>
    %565 = arith.subf %561, %564 : vector<8x8xf32>
    %566 = math.exp %565 : vector<8x8xf32>
    %cst_262 = arith.constant dense<0.000000e+00> : vector<8xf32>
    %567 = vector.multi_reduction <add>, %566, %cst_262 [1] : vector<8x8xf32> to vector<8xf32>
    %568 = vector.shape_cast %567 : vector<8xf32> to vector<8x1xf32>
    %569 = tpu.reciprocal %568 {approx = true} : vector<8x1xf32> -> vector<8x1xf32>
    %570 = vector.broadcast %569 : vector<8x1xf32> to vector<8x8xf32>
    %571 = arith.mulf %566, %570 : vector<8x8xf32>
    %572 = arith.truncf %571 : vector<8x8xf32> to vector<8x8xbf16>
    %573 = vector.extract_strided_slice %552 {offsets = [0, 0], sizes = [8, 8], strides = [1, 1]} : vector<8x32xbf16> to vector<8x8xbf16>
    %cst_263 = arith.constant dense<0.000000e+00> : vector<8x8xf32>
    %574 = tpu.matmul %572, %573, %cst_263 {dimension_numbers = #tpu.dot_dimension_numbers<[1], [0], [0], [1], [0, 0, 1, 1], [], []>} : vector<8x8xbf16>, vector<8x8xbf16>, vector<8x8xf32> -> vector<8x8xf32>
    %575 = arith.truncf %574 : vector<8x8xf32> to vector<8x8xbf16>
    %c0_264 = arith.constant 0 : index
    %c0_265 = arith.constant 0 : index
    %c0_266 = arith.constant 0 : index
    %576 = vector.load %arg13[%c0_264, %c0_265, %c0_266] : memref<4x8x32xbf16, #tpu.memory_space<vmem>>, vector<1x8x32xbf16>
    %577 = vector.shape_cast %576 : vector<1x8x32xbf16> to vector<8x32xbf16>
    %cst_267 = arith.constant dense<0.000000e+00> : vector<8x32xf32>
    %578 = tpu.matmul %575, %577, %cst_267 {dimension_numbers = #tpu.dot_dimension_numbers<[1], [0], [0], [1], [0, 0, 1, 1], [], []>} : vector<8x8xbf16>, vector<8x32xbf16>, vector<8x32xf32> -> vector<8x32xf32>
    %579 = vector.extract_strided_slice %550 {offsets = [0, 8], sizes = [8, 8], strides = [1, 1]} : vector<8x32xbf16> to vector<8x8xbf16>
    %580 = vector.extract_strided_slice %551 {offsets = [0, 8], sizes = [8, 8], strides = [1, 1]} : vector<8x32xbf16> to vector<8x8xbf16>
    %cst_268 = arith.constant dense<0.000000e+00> : vector<8x8xf32>
    %581 = tpu.matmul %579, %580, %cst_268 {dimension_numbers = #tpu.dot_dimension_numbers<[1], [1], [0], [0], [0, 0, 1, 0], [], []>} : vector<8x8xbf16>, vector<8x8xbf16>, vector<8x8xf32> -> vector<8x8xf32>
    %cst_269 = arith.constant 0.353553385 : f32
    %582 = vector.broadcast %cst_269 : f32 to vector<8x8xf32>
    %583 = arith.mulf %581, %582 : vector<8x8xf32>
    %cst_270 = arith.constant -1.000000e+09 : f32
    %584 = vector.shape_cast %364 : vector<1x8xi1> to vector<1x8xi1>
    %585 = vector.broadcast %584 : vector<1x8xi1> to vector<8x8xi1>
    %586 = vector.broadcast %cst_270 : f32 to vector<8x8xf32>
    %587 = arith.select %585, %583, %586 : vector<8x8xi1>, vector<8x8xf32>
    %cst_271 = arith.constant dense<0xFF800000> : vector<8xf32>
    %588 = vector.multi_reduction <maximumf>, %587, %cst_271 [1] : vector<8x8xf32> to vector<8xf32>
    %589 = vector.shape_cast %588 : vector<8xf32> to vector<8x1xf32>
    %590 = vector.broadcast %589 : vector<8x1xf32> to vector<8x8xf32>
    %591 = arith.subf %587, %590 : vector<8x8xf32>
    %592 = math.exp %591 : vector<8x8xf32>
    %cst_272 = arith.constant dense<0.000000e+00> : vector<8xf32>
    %593 = vector.multi_reduction <add>, %592, %cst_272 [1] : vector<8x8xf32> to vector<8xf32>
    %594 = vector.shape_cast %593 : vector<8xf32> to vector<8x1xf32>
    %595 = tpu.reciprocal %594 {approx = true} : vector<8x1xf32> -> vector<8x1xf32>
    %596 = vector.broadcast %595 : vector<8x1xf32> to vector<8x8xf32>
    %597 = arith.mulf %592, %596 : vector<8x8xf32>
    %598 = arith.truncf %597 : vector<8x8xf32> to vector<8x8xbf16>
    %599 = vector.extract_strided_slice %552 {offsets = [0, 8], sizes = [8, 8], strides = [1, 1]} : vector<8x32xbf16> to vector<8x8xbf16>
    %cst_273 = arith.constant dense<0.000000e+00> : vector<8x8xf32>
    %600 = tpu.matmul %598, %599, %cst_273 {dimension_numbers = #tpu.dot_dimension_numbers<[1], [0], [0], [1], [0, 0, 1, 1], [], []>} : vector<8x8xbf16>, vector<8x8xbf16>, vector<8x8xf32> -> vector<8x8xf32>
    %601 = arith.truncf %600 : vector<8x8xf32> to vector<8x8xbf16>
    %c1_274 = arith.constant 1 : index
    %c0_275 = arith.constant 0 : index
    %c0_276 = arith.constant 0 : index
    %602 = vector.load %arg13[%c1_274, %c0_275, %c0_276] : memref<4x8x32xbf16, #tpu.memory_space<vmem>>, vector<1x8x32xbf16>
    %603 = vector.shape_cast %602 : vector<1x8x32xbf16> to vector<8x32xbf16>
    %cst_277 = arith.constant dense<0.000000e+00> : vector<8x32xf32>
    %604 = tpu.matmul %601, %603, %cst_277 {dimension_numbers = #tpu.dot_dimension_numbers<[1], [0], [0], [1], [0, 0, 1, 1], [], []>} : vector<8x8xbf16>, vector<8x32xbf16>, vector<8x32xf32> -> vector<8x32xf32>
    %605 = arith.addf %578, %604 : vector<8x32xf32>
    %606 = vector.extract_strided_slice %550 {offsets = [0, 16], sizes = [8, 8], strides = [1, 1]} : vector<8x32xbf16> to vector<8x8xbf16>
    %607 = vector.extract_strided_slice %551 {offsets = [0, 16], sizes = [8, 8], strides = [1, 1]} : vector<8x32xbf16> to vector<8x8xbf16>
    %cst_278 = arith.constant dense<0.000000e+00> : vector<8x8xf32>
    %608 = tpu.matmul %606, %607, %cst_278 {dimension_numbers = #tpu.dot_dimension_numbers<[1], [1], [0], [0], [0, 0, 1, 0], [], []>} : vector<8x8xbf16>, vector<8x8xbf16>, vector<8x8xf32> -> vector<8x8xf32>
    %cst_279 = arith.constant 0.353553385 : f32
    %609 = vector.broadcast %cst_279 : f32 to vector<8x8xf32>
    %610 = arith.mulf %608, %609 : vector<8x8xf32>
    %cst_280 = arith.constant -1.000000e+09 : f32
    %611 = vector.shape_cast %364 : vector<1x8xi1> to vector<1x8xi1>
    %612 = vector.broadcast %611 : vector<1x8xi1> to vector<8x8xi1>
    %613 = vector.broadcast %cst_280 : f32 to vector<8x8xf32>
    %614 = arith.select %612, %610, %613 : vector<8x8xi1>, vector<8x8xf32>
    %cst_281 = arith.constant dense<0xFF800000> : vector<8xf32>
    %615 = vector.multi_reduction <maximumf>, %614, %cst_281 [1] : vector<8x8xf32> to vector<8xf32>
    %616 = vector.shape_cast %615 : vector<8xf32> to vector<8x1xf32>
    %617 = vector.broadcast %616 : vector<8x1xf32> to vector<8x8xf32>
    %618 = arith.subf %614, %617 : vector<8x8xf32>
    %619 = math.exp %618 : vector<8x8xf32>
    %cst_282 = arith.constant dense<0.000000e+00> : vector<8xf32>
    %620 = vector.multi_reduction <add>, %619, %cst_282 [1] : vector<8x8xf32> to vector<8xf32>
    %621 = vector.shape_cast %620 : vector<8xf32> to vector<8x1xf32>
    %622 = tpu.reciprocal %621 {approx = true} : vector<8x1xf32> -> vector<8x1xf32>
    %623 = vector.broadcast %622 : vector<8x1xf32> to vector<8x8xf32>
    %624 = arith.mulf %619, %623 : vector<8x8xf32>
    %625 = arith.truncf %624 : vector<8x8xf32> to vector<8x8xbf16>
    %626 = vector.extract_strided_slice %552 {offsets = [0, 16], sizes = [8, 8], strides = [1, 1]} : vector<8x32xbf16> to vector<8x8xbf16>
    %cst_283 = arith.constant dense<0.000000e+00> : vector<8x8xf32>
    %627 = tpu.matmul %625, %626, %cst_283 {dimension_numbers = #tpu.dot_dimension_numbers<[1], [0], [0], [1], [0, 0, 1, 1], [], []>} : vector<8x8xbf16>, vector<8x8xbf16>, vector<8x8xf32> -> vector<8x8xf32>
    %628 = arith.truncf %627 : vector<8x8xf32> to vector<8x8xbf16>
    %c2_284 = arith.constant 2 : index
    %c0_285 = arith.constant 0 : index
    %c0_286 = arith.constant 0 : index
    %629 = vector.load %arg13[%c2_284, %c0_285, %c0_286] : memref<4x8x32xbf16, #tpu.memory_space<vmem>>, vector<1x8x32xbf16>
    %630 = vector.shape_cast %629 : vector<1x8x32xbf16> to vector<8x32xbf16>
    %cst_287 = arith.constant dense<0.000000e+00> : vector<8x32xf32>
    %631 = tpu.matmul %628, %630, %cst_287 {dimension_numbers = #tpu.dot_dimension_numbers<[1], [0], [0], [1], [0, 0, 1, 1], [], []>} : vector<8x8xbf16>, vector<8x32xbf16>, vector<8x32xf32> -> vector<8x32xf32>
    %632 = arith.addf %605, %631 : vector<8x32xf32>
    %633 = vector.extract_strided_slice %550 {offsets = [0, 24], sizes = [8, 8], strides = [1, 1]} : vector<8x32xbf16> to vector<8x8xbf16>
    %634 = vector.extract_strided_slice %551 {offsets = [0, 24], sizes = [8, 8], strides = [1, 1]} : vector<8x32xbf16> to vector<8x8xbf16>
    %cst_288 = arith.constant dense<0.000000e+00> : vector<8x8xf32>
    %635 = tpu.matmul %633, %634, %cst_288 {dimension_numbers = #tpu.dot_dimension_numbers<[1], [1], [0], [0], [0, 0, 1, 0], [], []>} : vector<8x8xbf16>, vector<8x8xbf16>, vector<8x8xf32> -> vector<8x8xf32>
    %cst_289 = arith.constant 0.353553385 : f32
    %636 = vector.broadcast %cst_289 : f32 to vector<8x8xf32>
    %637 = arith.mulf %635, %636 : vector<8x8xf32>
    %cst_290 = arith.constant -1.000000e+09 : f32
    %638 = vector.shape_cast %364 : vector<1x8xi1> to vector<1x8xi1>
    %639 = vector.broadcast %638 : vector<1x8xi1> to vector<8x8xi1>
    %640 = vector.broadcast %cst_290 : f32 to vector<8x8xf32>
    %641 = arith.select %639, %637, %640 : vector<8x8xi1>, vector<8x8xf32>
    %cst_291 = arith.constant dense<0xFF800000> : vector<8xf32>
    %642 = vector.multi_reduction <maximumf>, %641, %cst_291 [1] : vector<8x8xf32> to vector<8xf32>
    %643 = vector.shape_cast %642 : vector<8xf32> to vector<8x1xf32>
    %644 = vector.broadcast %643 : vector<8x1xf32> to vector<8x8xf32>
    %645 = arith.subf %641, %644 : vector<8x8xf32>
    %646 = math.exp %645 : vector<8x8xf32>
    %cst_292 = arith.constant dense<0.000000e+00> : vector<8xf32>
    %647 = vector.multi_reduction <add>, %646, %cst_292 [1] : vector<8x8xf32> to vector<8xf32>
    %648 = vector.shape_cast %647 : vector<8xf32> to vector<8x1xf32>
    %649 = tpu.reciprocal %648 {approx = true} : vector<8x1xf32> -> vector<8x1xf32>
    %650 = vector.broadcast %649 : vector<8x1xf32> to vector<8x8xf32>
    %651 = arith.mulf %646, %650 : vector<8x8xf32>
    %652 = arith.truncf %651 : vector<8x8xf32> to vector<8x8xbf16>
    %653 = vector.extract_strided_slice %552 {offsets = [0, 24], sizes = [8, 8], strides = [1, 1]} : vector<8x32xbf16> to vector<8x8xbf16>
    %cst_293 = arith.constant dense<0.000000e+00> : vector<8x8xf32>
    %654 = tpu.matmul %652, %653, %cst_293 {dimension_numbers = #tpu.dot_dimension_numbers<[1], [0], [0], [1], [0, 0, 1, 1], [], []>} : vector<8x8xbf16>, vector<8x8xbf16>, vector<8x8xf32> -> vector<8x8xf32>
    %655 = arith.truncf %654 : vector<8x8xf32> to vector<8x8xbf16>
    %c3_294 = arith.constant 3 : index
    %c0_295 = arith.constant 0 : index
    %c0_296 = arith.constant 0 : index
    %656 = vector.load %arg13[%c3_294, %c0_295, %c0_296] : memref<4x8x32xbf16, #tpu.memory_space<vmem>>, vector<1x8x32xbf16>
    %657 = vector.shape_cast %656 : vector<1x8x32xbf16> to vector<8x32xbf16>
    %cst_297 = arith.constant dense<0.000000e+00> : vector<8x32xf32>
    %658 = tpu.matmul %655, %657, %cst_297 {dimension_numbers = #tpu.dot_dimension_numbers<[1], [0], [0], [1], [0, 0, 1, 1], [], []>} : vector<8x8xbf16>, vector<8x32xbf16>, vector<8x32xf32> -> vector<8x32xf32>
    %659 = arith.addf %632, %658 : vector<8x32xf32>
    %660 = vector.broadcast %537 : vector<1x32xf32> to vector<8x32xf32>
    %661 = arith.addf %659, %660 : vector<8x32xf32>
    %662 = arith.addf %509, %661 : vector<8x32xf32>
    %c4_298 = arith.constant 4 : index
    %c0_299 = arith.constant 0 : index
    %663 = vector.load %arg4[%c4_298, %c0_299] : memref<16x32xf32, #tpu.memory_space<vmem>>, vector<1x32xf32>
    %c5_300 = arith.constant 5 : index
    %c0_301 = arith.constant 0 : index
    %664 = vector.load %arg4[%c5_300, %c0_301] : memref<16x32xf32, #tpu.memory_space<vmem>>, vector<1x32xf32>
    %cst_302 = arith.constant dense<0.000000e+00> : vector<8xf32>
    %665 = vector.multi_reduction <add>, %662, %cst_302 [1] : vector<8x32xf32> to vector<8xf32>
    %666 = vector.shape_cast %665 : vector<8xf32> to vector<8x1xf32>
    %cst_303 = arith.constant 3.200000e+01 : f32
    %667 = vector.broadcast %cst_303 : f32 to vector<8x1xf32>
    %668 = arith.divf %666, %667 : vector<8x1xf32>
    %669 = vector.broadcast %668 : vector<8x1xf32> to vector<8x32xf32>
    %670 = arith.subf %662, %669 : vector<8x32xf32>
    %671 = arith.mulf %670, %670 : vector<8x32xf32>
    %cst_304 = arith.constant dense<0.000000e+00> : vector<8xf32>
    %672 = vector.multi_reduction <add>, %671, %cst_304 [1] : vector<8x32xf32> to vector<8xf32>
    %673 = vector.shape_cast %672 : vector<8xf32> to vector<8x1xf32>
    %cst_305 = arith.constant 0.0322580636 : f32
    %674 = vector.broadcast %cst_305 : f32 to vector<8x1xf32>
    %675 = arith.mulf %673, %674 : vector<8x1xf32>
    %676 = math.sqrt %675 : vector<8x1xf32>
    %cst_306 = arith.constant 9.99999997E-7 : f32
    %677 = vector.broadcast %cst_306 : f32 to vector<8x1xf32>
    %678 = arith.addf %676, %677 : vector<8x1xf32>
    %679 = tpu.reciprocal %678 : vector<8x1xf32> -> vector<8x1xf32>
    %680 = vector.broadcast %679 : vector<8x1xf32> to vector<8x32xf32>
    %681 = arith.mulf %670, %680 : vector<8x32xf32>
    %682 = vector.broadcast %663 : vector<1x32xf32> to vector<8x32xf32>
    %683 = arith.mulf %682, %681 : vector<8x32xf32>
    %684 = vector.broadcast %664 : vector<1x32xf32> to vector<8x32xf32>
    %685 = arith.addf %683, %684 : vector<8x32xf32>
    %686 = arith.truncf %685 : vector<8x32xf32> to vector<8x32xbf16>
    %c14_307 = arith.constant 14 : index
    %c0_308 = arith.constant 0 : index
    %687 = vector.load %arg4[%c14_307, %c0_308] : memref<16x32xf32, #tpu.memory_space<vmem>>, vector<1x32xf32>
    %c0_309 = arith.constant 0 : index
    %c0_310 = arith.constant 0 : index
    %688 = vector.load %arg14[%c0_309, %c0_310] : memref<32x64xbf16, #tpu.memory_space<vmem>>, vector<32x64xbf16>
    %cst_311 = arith.constant dense<0.000000e+00> : vector<8x64xf32>
    %689 = tpu.matmul %686, %688, %cst_311 {dimension_numbers = #tpu.dot_dimension_numbers<[1], [0], [0], [1], [0, 0, 1, 1], [], []>} : vector<8x32xbf16>, vector<32x64xbf16>, vector<8x64xf32> -> vector<8x64xf32>
    %690 = vector.broadcast %0 : vector<1x64xf32> to vector<8x64xf32>
    %691 = arith.addf %689, %690 : vector<8x64xf32>
    %cst_312 = arith.constant 0.000000e+00 : f32
    %692 = vector.broadcast %cst_312 : f32 to vector<8x64xf32>
    %693 = arith.maximumf %691, %692 : vector<8x64xf32>
    %694 = arith.truncf %693 : vector<8x64xf32> to vector<8x64xbf16>
    %c0_313 = arith.constant 0 : index
    %c0_314 = arith.constant 0 : index
    %695 = vector.load %arg15[%c0_313, %c0_314] : memref<64x32xbf16, #tpu.memory_space<vmem>>, vector<64x32xbf16>
    %cst_315 = arith.constant dense<0.000000e+00> : vector<8x32xf32>
    %696 = tpu.matmul %694, %695, %cst_315 {dimension_numbers = #tpu.dot_dimension_numbers<[1], [0], [0], [1], [0, 0, 1, 1], [], []>} : vector<8x64xbf16>, vector<64x32xbf16>, vector<8x32xf32> -> vector<8x32xf32>
    %697 = vector.broadcast %687 : vector<1x32xf32> to vector<8x32xf32>
    %698 = arith.addf %696, %697 : vector<8x32xf32>
    %699 = arith.addf %662, %698 : vector<8x32xf32>
    %c1_316 = arith.constant 1 : index
    %c0_317 = arith.constant 0 : index
    %c0_318 = arith.constant 0 : index
    %700 = vector.load %arg16[%c1_316, %c0_317, %c0_318] : memref<2x8x32xf32, #tpu.memory_space<vmem>>, vector<1x8x32xf32>
    %701 = vector.shape_cast %700 : vector<1x8x32xf32> to vector<8x32xf32>
    %702 = vector.shape_cast %699 : vector<8x32xf32> to vector<1x8x32xf32>
    tpu.vector_store %arg16[%c1_316, %c0_317, %c0_318], %702 {strides = array<i32>} : memref<2x8x32xf32, #tpu.memory_space<vmem>>, vector<1x8x32xf32>,
    return
  }
}

</mosaic_0001>

<llo_original>
// kernel: decoder_layer.1
$region0: #{decoder_layer.1}
  #allocation0 [shape = 'u32[]', space=smem, size = 0x4, offset = 0x4, fixed_abs, tag = 'smem constant byte address 0x4 - core index']
  #allocation1 [shape = 'u32[144,128]{1,0:T(1,128)}', space=vmem, size = 0x12000, scoped, tag = 'internal scratch']
  %s0 = inlined_call_operand.vmem [shape: f32[2,8,32], index: 0, kind: input, shape index: {}]
  %s1 = inlined_call_operand.vmem [shape: f32[2,8,32], index: 1, kind: input, shape index: {}]
  %s2 = inlined_call_operand.vmem [shape: s8[2,8,8], index: 2, kind: input, shape index: {}]
  %s3 = inlined_call_operand.vmem [shape: s8[2,1,8], index: 3, kind: input, shape index: {}]
  %s4 = inlined_call_operand.vmem [shape: f32[16,32], index: 4, kind: input, shape index: {}]
  %s5 = inlined_call_operand.vmem [shape: f32[1,64], index: 5, kind: input, shape index: {}]
  %s6 = inlined_call_operand.vmem [shape: bf16[32,32], index: 6, kind: input, shape index: {}]
  %s7 = inlined_call_operand.vmem [shape: bf16[32,32], index: 7, kind: input, shape index: {}]
  %s8 = inlined_call_operand.vmem [shape: bf16[32,32], index: 8, kind: input, shape index: {}]
  %s9 = inlined_call_operand.vmem [shape: bf16[4,8,32], index: 9, kind: input, shape index: {}]
  %s10 = inlined_call_operand.vmem [shape: bf16[32,32], index: 10, kind: input, shape index: {}]
  %s11 = inlined_call_operand.vmem [shape: bf16[32,32], index: 11, kind: input, shape index: {}]
  %s12 = inlined_call_operand.vmem [shape: bf16[32,32], index: 12, kind: input, shape index: {}]
  %s13 = inlined_call_operand.vmem [shape: bf16[4,8,32], index: 13, kind: input, shape index: {}]
  %s14 = inlined_call_operand.vmem [shape: bf16[32,64], index: 14, kind: input, shape index: {}]
  %s15 = inlined_call_operand.vmem [shape: bf16[64,32], index: 15, kind: input, shape index: {}]
  %s16 = inlined_call_operand.hbm [shape: f32[2,8,32], index: 16, kind: output, shape index: {}]
  %s17 = sld [smem:[#allocation0]]
  $region74: #{decoder_layer.1} parent=0
    _
  %s19 = ssub.s32 1, %s17
  %s20 = scalar_select 0, %s19, %s17
  $region1: #{decoder_layer.1} parent=0
    #allocation2 [shape = 'u8[8192]{0}', space=vmem, size = 0x2000, scoped, tag = 'output window, operand 0, single buffered']
    #allocation3 [shape = 's32[1]{0}', space=sflag, size = 0x4, scoped, tag = 'scoped memory for decoder_layer.1']
    %21 = vsyncpa [#allocation3], 0
    // Predicated region
    $region2: #{decoder_layer.1} parent=1 // pred_check
      _
    $region3: #{decoder_layer.1} parent=1 // pred_check_branch
      %23 = sbr.rel (0) target = $region5
    $region4: #{decoder_layer.1} parent=1 // pred_region
      _
    $region5: #{decoder_layer.1} parent=1 // pred_fallthru
      _
    // Predicated region
    $region6: #{decoder_layer.1} parent=1 // pred_check
      _
    $region7: #{decoder_layer.1} parent=1 // pred_check_branch
      %25 = sbr.rel (0) target = $region9
    $region8: #{decoder_layer.1} parent=1 // pred_region
      _
    $region9: #{decoder_layer.1} parent=1 // pred_fallthru
      _
    // Predicated region
    $region10: #{decoder_layer.1} parent=1 // pred_check
      _
    $region11: #{decoder_layer.1} parent=1 // pred_check_branch
      %27 = sbr.rel (0) target = $region13
    $region12: #{decoder_layer.1} parent=1 // pred_region
      _
    $region13: #{decoder_layer.1} parent=1 // pred_fallthru
      _
    // Predicated region
    $region14: #{decoder_layer.1} parent=1 // pred_check
      _
    $region15: #{decoder_layer.1} parent=1 // pred_check_branch
      %29 = sbr.rel (0) target = $region17
    $region16: #{decoder_layer.1} parent=1 // pred_region
      _
    $region17: #{decoder_layer.1} parent=1 // pred_fallthru
      _
    // Predicated region
    $region18: #{decoder_layer.1} parent=1 // pred_check
      _
    $region19: #{decoder_layer.1} parent=1 // pred_check_branch
      %31 = sbr.rel (0) target = $region21
    $region20: #{decoder_layer.1} parent=1 // pred_region
      _
    $region21: #{decoder_layer.1} parent=1 // pred_fallthru
      _
    // Predicated region
    $region22: #{decoder_layer.1} parent=1 // pred_check
      _
    $region23: #{decoder_layer.1} parent=1 // pred_check_branch
      %33 = sbr.rel (0) target = $region25
    $region24: #{decoder_layer.1} parent=1 // pred_region
      _
    $region25: #{decoder_layer.1} parent=1 // pred_fallthru
      _
    // Predicated region
    $region26: #{decoder_layer.1} parent=1 // pred_check
      _
    $region27: #{decoder_layer.1} parent=1 // pred_check_branch
      %35 = sbr.rel (0) target = $region29
    $region28: #{decoder_layer.1} parent=1 // pred_region
      _
    $region29: #{decoder_layer.1} parent=1 // pred_fallthru
      _
    // Predicated region
    $region30: #{decoder_layer.1} parent=1 // pred_check
      _
    $region31: #{decoder_layer.1} parent=1 // pred_check_branch
      %37 = sbr.rel (0) target = $region33
    $region32: #{decoder_layer.1} parent=1 // pred_region
      _
    $region33: #{decoder_layer.1} parent=1 // pred_fallthru
      _
    // Predicated region
    $region34: #{decoder_layer.1} parent=1 // pred_check
      _
    $region35: #{decoder_layer.1} parent=1 // pred_check_branch
      %39 = sbr.rel (0) target = $region37
    $region36: #{decoder_layer.1} parent=1 // pred_region
      _
    $region37: #{decoder_layer.1} parent=1 // pred_fallthru
      _
    // Predicated region
    $region38: #{decoder_layer.1} parent=1 // pred_check
      _
    $region39: #{decoder_layer.1} parent=1 // pred_check_branch
      %41 = sbr.rel (0) target = $region41
    $region40: #{decoder_layer.1} parent=1 // pred_region
      _
    $region41: #{decoder_layer.1} parent=1 // pred_fallthru
      _
    // Predicated region
    $region42: #{decoder_layer.1} parent=1 // pred_check
      _
    $region43: #{decoder_layer.1} parent=1 // pred_check_branch
      %43 = sbr.rel (0) target = $region45
    $region44: #{decoder_layer.1} parent=1 // pred_region
      _
    $region45: #{decoder_layer.1} parent=1 // pred_fallthru
      _
    // Predicated region
    $region46: #{decoder_layer.1} parent=1 // pred_check
      _
    $region47: #{decoder_layer.1} parent=1 // pred_check_branch
      %45 = sbr.rel (0) target = $region49
    $region48: #{decoder_layer.1} parent=1 // pred_region
      _
    $region49: #{decoder_layer.1} parent=1 // pred_fallthru
      _
    // Predicated region
    $region50: #{decoder_layer.1} parent=1 // pred_check
      _
    $region51: #{decoder_layer.1} parent=1 // pred_check_branch
      %47 = sbr.rel (0) target = $region53
    $region52: #{decoder_layer.1} parent=1 // pred_region
      _
    $region53: #{decoder_layer.1} parent=1 // pred_fallthru
      _
    // Predicated region
    $region54: #{decoder_layer.1} parent=1 // pred_check
      _
    $region55: #{decoder_layer.1} parent=1 // pred_check_branch
      %49 = sbr.rel (0) target = $region57
    $region56: #{decoder_layer.1} parent=1 // pred_region
      _
    $region57: #{decoder_layer.1} parent=1 // pred_fallthru
      _
    // Predicated region
    $region58: #{decoder_layer.1} parent=1 // pred_check
      _
    $region59: #{decoder_layer.1} parent=1 // pred_check_branch
      %51 = sbr.rel (0) target = $region61
    $region60: #{decoder_layer.1} parent=1 // pred_region
      _
    $region61: #{decoder_layer.1} parent=1 // pred_fallthru
      _
    // Predicated region
    $region62: #{decoder_layer.1} parent=1 // pred_check
      _
    $region63: #{decoder_layer.1} parent=1 // pred_check_branch
      %53 = sbr.rel (0) target = $region65
    $region64: #{decoder_layer.1} parent=1 // pred_region
      _
    $region65: #{decoder_layer.1} parent=1 // pred_fallthru
      _
    %v57 = vld [vmem:[%s5] sm:$0x1]
    %v58 = vld [vmem:[%s0] sm:$0xff]
    %v59 = vld [vmem:[%s1] sm:$0xff]
    %v60 = vpack.c.bf16 %v59, %v59
    %v61 = vld [vmem:[%s2] sm:$0x3]
    %vm62 = vnez %v61
    %v63 = vld [vmem:[%s3] sm:$0x1]
    %vm64 = vnez %v63
    %v65 = vld [vmem:[%s4] sm:$0x1]
    %v66 = vld [vmem:[%s4 + $0x1] sm:$0x1]
    %vm67 = vcmask 261120
    %v68 = vsel %vm67, %v58, 0.0
    %69 = vadd.xlane.f32.xlu0 %v68
    %v70 = vpop.xlane.xlu0 %69
    %v71 = vrcp.pop 32.0
    %v72 = vmul.f32 %v70, %v71
    %v73 = vsub.f32 %v58, %v72
    %v74 = vmul.f32 %v73, %v73
    %v75 = vsel %vm67, %v74, 0.0
    %76 = vadd.xlane.f32.xlu0 %v75
    %v77 = vpop.xlane.xlu0 %76
    %v78 = vmul.f32 %v77, 0.032258064
    %v79 = vrsqrt.pop %v78
    %v80 = vmul.f32 %v78, %v79
    %vm81 = vcmp.eq.f32.partialorder %v78, inf
    %v82 = vsel %vm81, %v78, %v80
    %vm83 = vcmp.eq.f32.partialorder %v78, 0.0
    %v84 = vand.u32 %v78, 2147483648
    %v85 = vsel %vm83, %v84, %v82
    %v86 = vadd.f32 %v85, 1e-06
    %v87 = vrcp.pop %v86
    %v88 = vmul.f32 %v73, %v87
    %v89 = vlaneseq
    %v90 = vshrl.u32 %v89, 7
    %v91 = vsub.s32 0, %v90
    %v92 = vrot.slane %v65, %v91
    %v93 = vmul.f32 %v92, %v88
    %v94 = vlaneseq
    %v95 = vshrl.u32 %v94, 7
    %v96 = vsub.s32 0, %v95
    %v97 = vrot.slane %v66, %v96
    %v98 = vadd.f32 %v93, %v97
    %v99 = vpack.c.bf16 %v98, %v98
    %v100 = vld [vmem:[%s4 + $0x6] sm:$0x1]
    %v101 = vld [vmem:[%s4 + $0x7] sm:$0x1]
    %v102 = vld [vmem:[%s4 + $0x8] sm:$0x1]
    %v103 = vld [vmem:[%s4 + $0x9] sm:$0x1]
    %v104 = vld [vmem:[%s6] sm:$0xf]
    %v105 = vld [vmem:[%s6 + $0x4] sm:$0xf]
    %v106 = vld [vmem:[%s6 + $0x8] sm:$0xf]
    %v107 = vld [vmem:[%s6 + $0xc] sm:$0xf]
    %v108 = vlaneseq
    %v109 = vshrl.u32 %v108, 7
    %v110 = vsub.s32 0, %v109
    %v111 = vrot.slane %v100, %v110
    %v116 = vunpack.c.l.b16 %v104
    %v117 = vunpack.c.l.b16 %v105
    %v118 = vunpack.c.l.b16 %v106
    %v119 = vunpack.c.l.b16 %v107
    %v120 = vpack.c.b16 %v117, %v116
    %v121 = vpack.c.b16 %v119, %v118
    %v125 = vsel %vm67, %v99, 0
    %127 = vmatprep.subr.bf16.mxu0 0
    %128 = vmatpush1.bf16.msra.mxu0 0
    %129 = vmatprep.subr.bf16.mxu0 0
    %130 = vmatpush1.bf16.msra.mxu0 0
    %131 = vmatprep.subr.bf16.mxu0 0
    %132 = vmatpush1.bf16.msra.mxu0 0
    %133 = vmatprep.subr.bf16.mxu0 0
    %134 = vmatpush1.bf16.msra.mxu0 0
    %135 = vmatprep.subr.bf16.mxu0 0
    %136 = vmatpush1.bf16.msra.mxu0 0
    %137 = vmatprep.subr.bf16.mxu0 0
    %138 = vmatpush1.bf16.msra.mxu0 0
    %139 = vmatprep.subr.bf16.mxu0 0
    %140 = vmatpush1.bf16.msra.mxu0 %v121
    %141 = vmatprep.subr.bf16.mxu0 0
    %142 = vmatpush1.bf16.msra.mxu0 %v120
    %143 = vmatprep.subr.bf16.mxu0 0
    %144 = vmatpush2.bf16.msra.mxu0 0
    %145 = vmatprep.subr.bf16.mxu0 0
    %146 = vmatpush2.bf16.msra.mxu0 0
    %147 = vmatprep.subr.bf16.mxu0 0
    %148 = vmatpush2.bf16.msra.mxu0 0
    %149 = vmatprep.subr.bf16.mxu0 0
    %150 = vmatpush2.bf16.msra.mxu0 0
    %151 = vmatprep.subr.bf16.mxu0 0
    %152 = vmatpush2.bf16.msra.mxu0 0
    %153 = vmatprep.subr.bf16.mxu0 0
    %154 = vmatpush2.bf16.msra.mxu0 0
    %155 = vmatprep.subr.bf16.mxu0 0
    %156 = vmatpush2.bf16.msra.mxu0 0
    %157 = vmatprep.subr.bf16.mxu0 0
    %158 = vmatpush2.bf16.msra.mxu0 0
    %159 = vmatprep.mubr.bf16.mxu0 0
    %160 = vmatmul.mubr.bf16.gmra.mxu0 %v125
    %v161 = vpop.f32.mrf.mxu0
    %v162 = vadd.f32 %v111, %v161
    %v163 = vpop.f32.mrf.mxu0
    %v164 = vpop.f32.mrf.mxu0
    %v165 = vpop.f32.mrf.mxu0
    %166 = vdwg.mxu0
    %v167 = vld [vmem:[%s7] sm:$0xf]
    %v168 = vld [vmem:[%s7 + $0x4] sm:$0xf]
    %v169 = vld [vmem:[%s7 + $0x8] sm:$0xf]
    %v170 = vld [vmem:[%s7 + $0xc] sm:$0xf]
    %v171 = vlaneseq
    %v172 = vshrl.u32 %v171, 7
    %v173 = vsub.s32 0, %v172
    %v174 = vrot.slane %v101, %v173
    %v179 = vunpack.c.l.b16 %v167
    %v180 = vunpack.c.l.b16 %v168
    %v181 = vunpack.c.l.b16 %v169
    %v182 = vunpack.c.l.b16 %v170
    %v183 = vpack.c.b16 %v180, %v179
    %v184 = vpack.c.b16 %v182, %v181
    %187 = vmatprep.subr.bf16.mxu0 0
    %188 = vmatpush1.bf16.msra.mxu0 0
    %189 = vmatprep.subr.bf16.mxu0 0
    %190 = vmatpush1.bf16.msra.mxu0 0
    %191 = vmatprep.subr.bf16.mxu0 0
    %192 = vmatpush1.bf16.msra.mxu0 0
    %193 = vmatprep.subr.bf16.mxu0 0
    %194 = vmatpush1.bf16.msra.mxu0 0
    %195 = vmatprep.subr.bf16.mxu0 0
    %196 = vmatpush1.bf16.msra.mxu0 0
    %197 = vmatprep.subr.bf16.mxu0 0
    %198 = vmatpush1.bf16.msra.mxu0 0
    %199 = vmatprep.subr.bf16.mxu0 0
    %200 = vmatpush1.bf16.msra.mxu0 %v184
    %201 = vmatprep.subr.bf16.mxu0 0
    %202 = vmatpush1.bf16.msra.mxu0 %v183
    %203 = vmatprep.subr.bf16.mxu0 0
    %204 = vmatpush2.bf16.msra.mxu0 0
    %205 = vmatprep.subr.bf16.mxu0 0
    %206 = vmatpush2.bf16.msra.mxu0 0
    %207 = vmatprep.subr.bf16.mxu0 0
    %208 = vmatpush2.bf16.msra.mxu0 0
    %209 = vmatprep.subr.bf16.mxu0 0
    %210 = vmatpush2.bf16.msra.mxu0 0
    %211 = vmatprep.subr.bf16.mxu0 0
    %212 = vmatpush2.bf16.msra.mxu0 0
    %213 = vmatprep.subr.bf16.mxu0 0
    %214 = vmatpush2.bf16.msra.mxu0 0
    %215 = vmatprep.subr.bf16.mxu0 0
    %216 = vmatpush2.bf16.msra.mxu0 0
    %217 = vmatprep.subr.bf16.mxu0 0
    %218 = vmatpush2.bf16.msra.mxu0 0
    %219 = vmatprep.mubr.bf16.mxu0 0
    %220 = vmatmul.mubr.bf16.gmra.mxu0 %v125
    %v221 = vpop.f32.mrf.mxu0
    %v222 = vadd.f32 %v174, %v221
    %v223 = vpop.f32.mrf.mxu0
    %v224 = vpop.f32.mrf.mxu0
    %v225 = vpop.f32.mrf.mxu0
    %226 = vdwg.mxu0
    %v227 = vld [vmem:[%s8] sm:$0xf]
    %v228 = vld [vmem:[%s8 + $0x4] sm:$0xf]
    %v229 = vld [vmem:[%s8 + $0x8] sm:$0xf]
    %v230 = vld [vmem:[%s8 + $0xc] sm:$0xf]
    %v231 = vlaneseq
    %v232 = vshrl.u32 %v231, 7
    %v233 = vsub.s32 0, %v232
    %v234 = vrot.slane %v102, %v233
    %v239 = vunpack.c.l.b16 %v227
    %v240 = vunpack.c.l.b16 %v228
    %v241 = vunpack.c.l.b16 %v229
    %v242 = vunpack.c.l.b16 %v230
    %v243 = vpack.c.b16 %v240, %v239
    %v244 = vpack.c.b16 %v242, %v241
    %247 = vmatprep.subr.bf16.mxu0 0
    %248 = vmatpush1.bf16.msra.mxu0 0
    %249 = vmatprep.subr.bf16.mxu0 0
    %250 = vmatpush1.bf16.msra.mxu0 0
    %251 = vmatprep.subr.bf16.mxu0 0
    %252 = vmatpush1.bf16.msra.mxu0 0
    %253 = vmatprep.subr.bf16.mxu0 0
    %254 = vmatpush1.bf16.msra.mxu0 0
    %255 = vmatprep.subr.bf16.mxu0 0
    %256 = vmatpush1.bf16.msra.mxu0 0
    %257 = vmatprep.subr.bf16.mxu0 0
    %258 = vmatpush1.bf16.msra.mxu0 0
    %259 = vmatprep.subr.bf16.mxu0 0
    %260 = vmatpush1.bf16.msra.mxu0 %v244
    %261 = vmatprep.subr.bf16.mxu0 0
    %262 = vmatpush1.bf16.msra.mxu0 %v243
    %263 = vmatprep.subr.bf16.mxu0 0
    %264 = vmatpush2.bf16.msra.mxu0 0
    %265 = vmatprep.subr.bf16.mxu0 0
    %266 = vmatpush2.bf16.msra.mxu0 0
    %267 = vmatprep.subr.bf16.mxu0 0
    %268 = vmatpush2.bf16.msra.mxu0 0
    %269 = vmatprep.subr.bf16.mxu0 0
    %270 = vmatpush2.bf16.msra.mxu0 0
    %271 = vmatprep.subr.bf16.mxu0 0
    %272 = vmatpush2.bf16.msra.mxu0 0
    %273 = vmatprep.subr.bf16.mxu0 0
    %274 = vmatpush2.bf16.msra.mxu0 0
    %275 = vmatprep.subr.bf16.mxu0 0
    %276 = vmatpush2.bf16.msra.mxu0 0
    %277 = vmatprep.subr.bf16.mxu0 0
    %278 = vmatpush2.bf16.msra.mxu0 0
    %279 = vmatprep.mubr.bf16.mxu0 0
    %280 = vmatmul.mubr.bf16.gmra.mxu0 %v125
    %v281 = vpop.f32.mrf.mxu0
    %v282 = vadd.f32 %v234, %v281
    %v283 = vpop.f32.mrf.mxu0
    %v284 = vpop.f32.mrf.mxu0
    %v285 = vpop.f32.mrf.mxu0
    %286 = vdwg.mxu0
    %v287 = vpack.c.bf16 %v162, %v162
    %v288 = vpack.c.bf16 %v222, %v222
    %v289 = vpack.c.bf16 %v282, %v282
    %vm290 = vcmask 64512
    %v292 = vsel %vm290, %v287, 0
    %v295 = vsel %vm290, %v288, 0
    %297 = vmatprep.subr.bf16.mxu0 0
    %298 = vmatpush1.bf16.xpose.msra.mxu0 0
    %299 = vmatprep.subr.bf16.mxu0 0
    %300 = vmatpush1.bf16.xpose.msra.mxu0 0
    %301 = vmatprep.subr.bf16.mxu0 0
    %302 = vmatpush1.bf16.xpose.msra.mxu0 0
    %303 = vmatprep.subr.bf16.mxu0 0
    %304 = vmatpush1.bf16.xpose.msra.mxu0 0
    %305 = vmatprep.subr.bf16.mxu0 0
    %306 = vmatpush1.bf16.xpose.msra.mxu0 0
    %307 = vmatprep.subr.bf16.mxu0 0
    %308 = vmatpush1.bf16.xpose.msra.mxu0 0
    %309 = vmatprep.subr.bf16.mxu0 0
    %310 = vmatpush1.bf16.xpose.msra.mxu0 0
    %311 = vmatprep.subr.bf16.mxu0 0
    %312 = vmatpush1.bf16.xpose.msra.mxu0 %v295
    %313 = vmatprep.subr.bf16.mxu0 0
    %314 = vmatpush2.bf16.xpose.msra.mxu0 0
    %315 = vmatprep.subr.bf16.mxu0 0
    %316 = vmatpush2.bf16.xpose.msra.mxu0 0
    %317 = vmatprep.subr.bf16.mxu0 0
    %318 = vmatpush2.bf16.xpose.msra.mxu0 0
    %319 = vmatprep.subr.bf16.mxu0 0
    %320 = vmatpush2.bf16.xpose.msra.mxu0 0
    %321 = vmatprep.subr.bf16.mxu0 0
    %322 = vmatpush2.bf16.xpose.msra.mxu0 0
    %323 = vmatprep.subr.bf16.mxu0 0
    %324 = vmatpush2.bf16.xpose.msra.mxu0 0
    %325 = vmatprep.subr.bf16.mxu0 0
    %326 = vmatpush2.bf16.xpose.msra.mxu0 0
    %327 = vmatprep.subr.bf16.mxu0 0
    %328 = vmatpush2.bf16.xpose.msra.mxu0 0
    %329 = vmatprep.mubr.bf16.mxu0 0
    %330 = vmatmul.mubr.bf16.gmra.mxu0 %v292
    %v331 = vpop.f32.mrf.mxu0
    %v332 = vadd.f32 0.0, %v331
    %v333 = vpop.f32.mrf.mxu0
    %v334 = vpop.f32.mrf.mxu0
    %v335 = vpop.f32.mrf.mxu0
    %336 = vdwg.mxu0
    %v337 = vmul.f32 %v332, 0.35355338
    %v338 = vsel %vm62, 16843009, 0
    %v339 = vunpack.c.0.s8 %v338
    %vm340 = vcmp.ne.s32.totalorder %v339, 0
    %v341 = vsel %vm340, %v337, -1e+09
    %v342 = vsel %vm290, %v341, -inf
    %343 = vmax.xlane.f32.xlu0 %v342
    %v344 = vpop.xlane.xlu0 %343
    %v345 = vsub.f32 %v341, %v344
    %v346 = vmul.f32 %v345, 1.442695
    %v347 = vpow.pop %v346
    %v348 = vsel %vm290, %v347, 0.0
    %349 = vadd.xlane.f32.xlu0 %v348
    %v350 = vpop.xlane.xlu0 %349
    %v351 = vrcp.pop %v350
    %v352 = vmul.f32 %v347, %v351
    %v353 = vpack.c.bf16 %v352, %v352
    %v355 = vsel %vm290, %v353, 0
    %vm357 = vcmask 1043456
    %v359 = vsel %vm357, %v289, 0
    %361 = vmatprep.subr.bf16.mxu0 0
    %362 = vmatpush1.bf16.msra.mxu0 0
    %363 = vmatprep.subr.bf16.mxu0 0
    %364 = vmatpush1.bf16.msra.mxu0 0
    %365 = vmatprep.subr.bf16.mxu0 0
    %366 = vmatpush1.bf16.msra.mxu0 0
    %367 = vmatprep.subr.bf16.mxu0 0
    %368 = vmatpush1.bf16.msra.mxu0 0
    %369 = vmatprep.subr.bf16.mxu0 0
    %370 = vmatpush1.bf16.msra.mxu0 0
    %371 = vmatprep.subr.bf16.mxu0 0
    %372 = vmatpush1.bf16.msra.mxu0 0
    %373 = vmatprep.subr.bf16.mxu0 0
    %374 = vmatpush1.bf16.msra.mxu0 0
    %375 = vmatprep.subr.bf16.mxu0 0
    %376 = vmatpush1.bf16.msra.mxu0 %v359
    %377 = vmatprep.subr.bf16.mxu0 0
    %378 = vmatpush2.bf16.msra.mxu0 0
    %379 = vmatprep.subr.bf16.mxu0 0
    %380 = vmatpush2.bf16.msra.mxu0 0
    %381 = vmatprep.subr.bf16.mxu0 0
    %382 = vmatpush2.bf16.msra.mxu0 0
    %383 = vmatprep.subr.bf16.mxu0 0
    %384 = vmatpush2.bf16.msra.mxu0 0
    %385 = vmatprep.subr.bf16.mxu0 0
    %386 = vmatpush2.bf16.msra.mxu0 0
    %387 = vmatprep.subr.bf16.mxu0 0
    %388 = vmatpush2.bf16.msra.mxu0 0
    %389 = vmatprep.subr.bf16.mxu0 0
    %390 = vmatpush2.bf16.msra.mxu0 0
    %391 = vmatprep.subr.bf16.mxu0 0
    %392 = vmatpush2.bf16.msra.mxu0 0
    %393 = vmatprep.mubr.bf16.mxu0 0
    %394 = vmatmul.mubr.bf16.gmra.mxu0 %v355
    %v395 = vpop.f32.mrf.mxu0
    %v396 = vadd.f32 0.0, %v395
    %v397 = vpop.f32.mrf.mxu0
    %v398 = vpop.f32.mrf.mxu0
    %v399 = vpop.f32.mrf.mxu0
    %400 = vdwg.mxu0
    %v401 = vpack.c.bf16 %v396, %v396
    %v402 = vld [vmem:[%s9] sm:$0xf]
    %404 = vrot.lane.b32.xlu0 %v287, 120
    %v405 = vpop.permute.xlu0 %404
    %407 = vrot.lane.b32.xlu0 %v288, 120
    %v408 = vpop.permute.xlu0 %407
    %v410 = vsel %vm290, %v405, 0
    %v413 = vsel %vm290, %v408, 0
    %415 = vmatprep.subr.bf16.mxu0 0
    %416 = vmatpush1.bf16.xpose.msra.mxu0 0
    %417 = vmatprep.subr.bf16.mxu0 0
    %418 = vmatpush1.bf16.xpose.msra.mxu0 0
    %419 = vmatprep.subr.bf16.mxu0 0
    %420 = vmatpush1.bf16.xpose.msra.mxu0 0
    %421 = vmatprep.subr.bf16.mxu0 0
    %422 = vmatpush1.bf16.xpose.msra.mxu0 0
    %423 = vmatprep.subr.bf16.mxu0 0
    %424 = vmatpush1.bf16.xpose.msra.mxu0 0
    %425 = vmatprep.subr.bf16.mxu0 0
    %426 = vmatpush1.bf16.xpose.msra.mxu0 0
    %427 = vmatprep.subr.bf16.mxu0 0
    %428 = vmatpush1.bf16.xpose.msra.mxu0 0
    %429 = vmatprep.subr.bf16.mxu0 0
    %430 = vmatpush1.bf16.xpose.msra.mxu0 %v413
    %431 = vmatprep.subr.bf16.mxu0 0
    %432 = vmatpush2.bf16.xpose.msra.mxu0 0
    %433 = vmatprep.subr.bf16.mxu0 0
    %434 = vmatpush2.bf16.xpose.msra.mxu0 0
    %435 = vmatprep.subr.bf16.mxu0 0
    %436 = vmatpush2.bf16.xpose.msra.mxu0 0
    %437 = vmatprep.subr.bf16.mxu0 0
    %438 = vmatpush2.bf16.xpose.msra.mxu0 0
    %439 = vmatprep.subr.bf16.mxu0 0
    %440 = vmatpush2.bf16.xpose.msra.mxu0 0
    %441 = vmatprep.subr.bf16.mxu0 0
    %442 = vmatpush2.bf16.xpose.msra.mxu0 0
    %443 = vmatprep.subr.bf16.mxu0 0
    %444 = vmatpush2.bf16.xpose.msra.mxu0 0
    %445 = vmatprep.subr.bf16.mxu0 0
    %446 = vmatpush2.bf16.xpose.msra.mxu0 0
    %447 = vmatprep.mubr.bf16.mxu0 0
    %448 = vmatmul.mubr.bf16.gmra.mxu0 %v410
    %v449 = vpop.f32.mrf.mxu0
    %v450 = vadd.f32 0.0, %v449
    %v451 = vpop.f32.mrf.mxu0
    %v452 = vpop.f32.mrf.mxu0
    %v453 = vpop.f32.mrf.mxu0
    %454 = vdwg.mxu0
    %v455 = vmul.f32 %v450, 0.35355338
    %v456 = vsel %vm340, %v455, -1e+09
    %v457 = vsel %vm290, %v456, -inf
    %458 = vmax.xlane.f32.xlu0 %v457
    %v459 = vpop.xlane.xlu0 %458
    %v460 = vsub.f32 %v456, %v459
    %v461 = vmul.f32 %v460, 1.442695
    %v462 = vpow.pop %v461
    %v463 = vsel %vm290, %v462, 0.0
    %464 = vadd.xlane.f32.xlu0 %v463
    %v465 = vpop.xlane.xlu0 %464
    %v466 = vrcp.pop %v465
    %v467 = vmul.f32 %v462, %v466
    %v468 = vpack.c.bf16 %v467, %v467
    %470 = vrot.lane.b32.xlu0 %v289, 120
    %v471 = vpop.permute.xlu0 %470
    %v473 = vsel %vm290, %v468, 0
    %v476 = vsel %vm357, %v471, 0
    %478 = vmatprep.subr.bf16.mxu0 0
    %479 = vmatpush1.bf16.msra.mxu0 0
    %480 = vmatprep.subr.bf16.mxu0 0
    %481 = vmatpush1.bf16.msra.mxu0 0
    %482 = vmatprep.subr.bf16.mxu0 0
    %483 = vmatpush1.bf16.msra.mxu0 0
    %484 = vmatprep.subr.bf16.mxu0 0
    %485 = vmatpush1.bf16.msra.mxu0 0
    %486 = vmatprep.subr.bf16.mxu0 0
    %487 = vmatpush1.bf16.msra.mxu0 0
    %488 = vmatprep.subr.bf16.mxu0 0
    %489 = vmatpush1.bf16.msra.mxu0 0
    %490 = vmatprep.subr.bf16.mxu0 0
    %491 = vmatpush1.bf16.msra.mxu0 0
    %492 = vmatprep.subr.bf16.mxu0 0
    %493 = vmatpush1.bf16.msra.mxu0 %v476
    %494 = vmatprep.subr.bf16.mxu0 0
    %495 = vmatpush2.bf16.msra.mxu0 0
    %496 = vmatprep.subr.bf16.mxu0 0
    %497 = vmatpush2.bf16.msra.mxu0 0
    %498 = vmatprep.subr.bf16.mxu0 0
    %499 = vmatpush2.bf16.msra.mxu0 0
    %500 = vmatprep.subr.bf16.mxu0 0
    %501 = vmatpush2.bf16.msra.mxu0 0
    %502 = vmatprep.subr.bf16.mxu0 0
    %503 = vmatpush2.bf16.msra.mxu0 0
    %504 = vmatprep.subr.bf16.mxu0 0
    %505 = vmatpush2.bf16.msra.mxu0 0
    %506 = vmatprep.subr.bf16.mxu0 0
    %507 = vmatpush2.bf16.msra.mxu0 0
    %508 = vmatprep.subr.bf16.mxu0 0
    %509 = vmatpush2.bf16.msra.mxu0 0
    %510 = vmatprep.mubr.bf16.mxu0 0
    %511 = vmatmul.mubr.bf16.gmra.mxu0 %v473
    %v512 = vpop.f32.mrf.mxu0
    %v513 = vadd.f32 0.0, %v512
    %v514 = vpop.f32.mrf.mxu0
    %v515 = vpop.f32.mrf.mxu0
    %v516 = vpop.f32.mrf.mxu0
    %517 = vdwg.mxu0
    %v518 = vpack.c.bf16 %v513, %v513
    %s519 = scalar_lea.vmem %s9, 4
    %v520 = vld [vmem:[%s519] sm:$0xf]
    %v522 = vsel %vm290, %v518, 0
    %v525 = vsel %vm357, %v520, 0
    %527 = vmatprep.subr.bf16.mxu0 0
    %528 = vmatpush1.bf16.msra.mxu0 0
    %529 = vmatprep.subr.bf16.mxu0 0
    %530 = vmatpush1.bf16.msra.mxu0 0
    %531 = vmatprep.subr.bf16.mxu0 0
    %532 = vmatpush1.bf16.msra.mxu0 0
    %533 = vmatprep.subr.bf16.mxu0 0
    %534 = vmatpush1.bf16.msra.mxu0 0
    %535 = vmatprep.subr.bf16.mxu0 0
    %536 = vmatpush1.bf16.msra.mxu0 0
    %537 = vmatprep.subr.bf16.mxu0 0
    %538 = vmatpush1.bf16.msra.mxu0 0
    %539 = vmatprep.subr.bf16.mxu0 0
    %540 = vmatpush1.bf16.msra.mxu0 0
    %541 = vmatprep.subr.bf16.mxu0 0
    %542 = vmatpush1.bf16.msra.mxu0 %v525
    %543 = vmatprep.subr.bf16.mxu0 0
    %544 = vmatpush2.bf16.msra.mxu0 0
    %545 = vmatprep.subr.bf16.mxu0 0
    %546 = vmatpush2.bf16.msra.mxu0 0
    %547 = vmatprep.subr.bf16.mxu0 0
    %548 = vmatpush2.bf16.msra.mxu0 0
    %549 = vmatprep.subr.bf16.mxu0 0
    %550 = vmatpush2.bf16.msra.mxu0 0
    %551 = vmatprep.subr.bf16.mxu0 0
    %552 = vmatpush2.bf16.msra.mxu0 0
    %553 = vmatprep.subr.bf16.mxu0 0
    %554 = vmatpush2.bf16.msra.mxu0 0
    %555 = vmatprep.subr.bf16.mxu0 0
    %556 = vmatpush2.bf16.msra.mxu0 0
    %557 = vmatprep.subr.bf16.mxu0 0
    %558 = vmatpush2.bf16.msra.mxu0 0
    %559 = vmatprep.mubr.bf16.mxu0 0
    %560 = vmatmul.mubr.bf16.gmra.mxu0 %v522
    %v561 = vpop.f32.mrf.mxu0
    %v562 = vadd.f32 0.0, %v561
    %v563 = vpop.f32.mrf.mxu0
    %v564 = vpop.f32.mrf.mxu0
    %v565 = vpop.f32.mrf.mxu0
    %566 = vdwg.mxu0
    %v568 = vsel %vm290, %v401, 0
    %v571 = vsel %vm357, %v402, 0
    %573 = vmatprep.subr.bf16.mxu0 0
    %574 = vmatpush1.bf16.msra.mxu0 0
    %575 = vmatprep.subr.bf16.mxu0 0
    %576 = vmatpush1.bf16.msra.mxu0 0
    %577 = vmatprep.subr.bf16.mxu0 0
    %578 = vmatpush1.bf16.msra.mxu0 0
    %579 = vmatprep.subr.bf16.mxu0 0
    %580 = vmatpush1.bf16.msra.mxu0 0
    %581 = vmatprep.subr.bf16.mxu0 0
    %582 = vmatpush1.bf16.msra.mxu0 0
    %583 = vmatprep.subr.bf16.mxu0 0
    %584 = vmatpush1.bf16.msra.mxu0 0
    %585 = vmatprep.subr.bf16.mxu0 0
    %586 = vmatpush1.bf16.msra.mxu0 0
    %587 = vmatprep.subr.bf16.mxu0 0
    %588 = vmatpush1.bf16.msra.mxu0 %v571
    %589 = vmatprep.subr.bf16.mxu0 0
    %590 = vmatpush2.bf16.msra.mxu0 0
    %591 = vmatprep.subr.bf16.mxu0 0
    %592 = vmatpush2.bf16.msra.mxu0 0
    %593 = vmatprep.subr.bf16.mxu0 0
    %594 = vmatpush2.bf16.msra.mxu0 0
    %595 = vmatprep.subr.bf16.mxu0 0
    %596 = vmatpush2.bf16.msra.mxu0 0
    %597 = vmatprep.subr.bf16.mxu0 0
    %598 = vmatpush2.bf16.msra.mxu0 0
    %599 = vmatprep.subr.bf16.mxu0 0
    %600 = vmatpush2.bf16.msra.mxu0 0
    %601 = vmatprep.subr.bf16.mxu0 0
    %602 = vmatpush2.bf16.msra.mxu0 0
    %603 = vmatprep.subr.bf16.mxu0 0
    %604 = vmatpush2.bf16.msra.mxu0 0
    %605 = vmatprep.mubr.bf16.mxu0 0
    %606 = vmatmul.mubr.bf16.gmra.mxu0 %v568
    %v607 = vpop.f32.mrf.mxu0
    %v608 = vadd.f32 %v562, %v607
    %v609 = vpop.f32.mrf.mxu0
    %v610 = vpop.f32.mrf.mxu0
    %v611 = vpop.f32.mrf.mxu0
    %612 = vdwg.mxu0
    %613 = vrot.lane.b32.xlu0 %v287, 112
    %v614 = vpop.permute.xlu0 %613
    %615 = vrot.lane.b32.xlu0 %v288, 112
    %v616 = vpop.permute.xlu0 %615
    %v618 = vsel %vm290, %v614, 0
    %v621 = vsel %vm290, %v616, 0
    %623 = vmatprep.subr.bf16.mxu0 0
    %624 = vmatpush1.bf16.xpose.msra.mxu0 0
    %625 = vmatprep.subr.bf16.mxu0 0
    %626 = vmatpush1.bf16.xpose.msra.mxu0 0
    %627 = vmatprep.subr.bf16.mxu0 0
    %628 = vmatpush1.bf16.xpose.msra.mxu0 0
    %629 = vmatprep.subr.bf16.mxu0 0
    %630 = vmatpush1.bf16.xpose.msra.mxu0 0
    %631 = vmatprep.subr.bf16.mxu0 0
    %632 = vmatpush1.bf16.xpose.msra.mxu0 0
    %633 = vmatprep.subr.bf16.mxu0 0
    %634 = vmatpush1.bf16.xpose.msra.mxu0 0
    %635 = vmatprep.subr.bf16.mxu0 0
    %636 = vmatpush1.bf16.xpose.msra.mxu0 0
    %637 = vmatprep.subr.bf16.mxu0 0
    %638 = vmatpush1.bf16.xpose.msra.mxu0 %v621
    %639 = vmatprep.subr.bf16.mxu0 0
    %640 = vmatpush2.bf16.xpose.msra.mxu0 0
    %641 = vmatprep.subr.bf16.mxu0 0
    %642 = vmatpush2.bf16.xpose.msra.mxu0 0
    %643 = vmatprep.subr.bf16.mxu0 0
    %644 = vmatpush2.bf16.xpose.msra.mxu0 0
    %645 = vmatprep.subr.bf16.mxu0 0
    %646 = vmatpush2.bf16.xpose.msra.mxu0 0
    %647 = vmatprep.subr.bf16.mxu0 0
    %648 = vmatpush2.bf16.xpose.msra.mxu0 0
    %649 = vmatprep.subr.bf16.mxu0 0
    %650 = vmatpush2.bf16.xpose.msra.mxu0 0
    %651 = vmatprep.subr.bf16.mxu0 0
    %652 = vmatpush2.bf16.xpose.msra.mxu0 0
    %653 = vmatprep.subr.bf16.mxu0 0
    %654 = vmatpush2.bf16.xpose.msra.mxu0 0
    %655 = vmatprep.mubr.bf16.mxu0 0
    %656 = vmatmul.mubr.bf16.gmra.mxu0 %v618
    %v657 = vpop.f32.mrf.mxu0
    %v658 = vadd.f32 0.0, %v657
    %v659 = vpop.f32.mrf.mxu0
    %v660 = vpop.f32.mrf.mxu0
    %v661 = vpop.f32.mrf.mxu0
    %662 = vdwg.mxu0
    %v663 = vmul.f32 %v658, 0.35355338
    %v664 = vsel %vm340, %v663, -1e+09
    %v665 = vsel %vm290, %v664, -inf
    %666 = vmax.xlane.f32.xlu0 %v665
    %v667 = vpop.xlane.xlu0 %666
    %v668 = vsub.f32 %v664, %v667
    %v669 = vmul.f32 %v668, 1.442695
    %v670 = vpow.pop %v669
    %v671 = vsel %vm290, %v670, 0.0
    %672 = vadd.xlane.f32.xlu0 %v671
    %v673 = vpop.xlane.xlu0 %672
    %v674 = vrcp.pop %v673
    %v675 = vmul.f32 %v670, %v674
    %v676 = vpack.c.bf16 %v675, %v675
    %677 = vrot.lane.b32.xlu0 %v289, 112
    %v678 = vpop.permute.xlu0 %677
    %v680 = vsel %vm290, %v676, 0
    %v683 = vsel %vm357, %v678, 0
    %685 = vmatprep.subr.bf16.mxu0 0
    %686 = vmatpush1.bf16.msra.mxu0 0
    %687 = vmatprep.subr.bf16.mxu0 0
    %688 = vmatpush1.bf16.msra.mxu0 0
    %689 = vmatprep.subr.bf16.mxu0 0
    %690 = vmatpush1.bf16.msra.mxu0 0
    %691 = vmatprep.subr.bf16.mxu0 0
    %692 = vmatpush1.bf16.msra.mxu0 0
    %693 = vmatprep.subr.bf16.mxu0 0
    %694 = vmatpush1.bf16.msra.mxu0 0
    %695 = vmatprep.subr.bf16.mxu0 0
    %696 = vmatpush1.bf16.msra.mxu0 0
    %697 = vmatprep.subr.bf16.mxu0 0
    %698 = vmatpush1.bf16.msra.mxu0 0
    %699 = vmatprep.subr.bf16.mxu0 0
    %700 = vmatpush1.bf16.msra.mxu0 %v683
    %701 = vmatprep.subr.bf16.mxu0 0
    %702 = vmatpush2.bf16.msra.mxu0 0
    %703 = vmatprep.subr.bf16.mxu0 0
    %704 = vmatpush2.bf16.msra.mxu0 0
    %705 = vmatprep.subr.bf16.mxu0 0
    %706 = vmatpush2.bf16.msra.mxu0 0
    %707 = vmatprep.subr.bf16.mxu0 0
    %708 = vmatpush2.bf16.msra.mxu0 0
    %709 = vmatprep.subr.bf16.mxu0 0
    %710 = vmatpush2.bf16.msra.mxu0 0
    %711 = vmatprep.subr.bf16.mxu0 0
    %712 = vmatpush2.bf16.msra.mxu0 0
    %713 = vmatprep.subr.bf16.mxu0 0
    %714 = vmatpush2.bf16.msra.mxu0 0
    %715 = vmatprep.subr.bf16.mxu0 0
    %716 = vmatpush2.bf16.msra.mxu0 0
    %717 = vmatprep.mubr.bf16.mxu0 0
    %718 = vmatmul.mubr.bf16.gmra.mxu0 %v680
    %v719 = vpop.f32.mrf.mxu0
    %v720 = vadd.f32 0.0, %v719
    %v721 = vpop.f32.mrf.mxu0
    %v722 = vpop.f32.mrf.mxu0
    %v723 = vpop.f32.mrf.mxu0
    %724 = vdwg.mxu0
    %v725 = vpack.c.bf16 %v720, %v720
    %s726 = scalar_lea.vmem %s9, 8
    %v727 = vld [vmem:[%s726] sm:$0xf]
    %v729 = vsel %vm290, %v725, 0
    %v732 = vsel %vm357, %v727, 0
    %734 = vmatprep.subr.bf16.mxu0 0
    %735 = vmatpush1.bf16.msra.mxu0 0
    %736 = vmatprep.subr.bf16.mxu0 0
    %737 = vmatpush1.bf16.msra.mxu0 0
    %738 = vmatprep.subr.bf16.mxu0 0
    %739 = vmatpush1.bf16.msra.mxu0 0
    %740 = vmatprep.subr.bf16.mxu0 0
    %741 = vmatpush1.bf16.msra.mxu0 0
    %742 = vmatprep.subr.bf16.mxu0 0
    %743 = vmatpush1.bf16.msra.mxu0 0
    %744 = vmatprep.subr.bf16.mxu0 0
    %745 = vmatpush1.bf16.msra.mxu0 0
    %746 = vmatprep.subr.bf16.mxu0 0
    %747 = vmatpush1.bf16.msra.mxu0 0
    %748 = vmatprep.subr.bf16.mxu0 0
    %749 = vmatpush1.bf16.msra.mxu0 %v732
    %750 = vmatprep.subr.bf16.mxu0 0
    %751 = vmatpush2.bf16.msra.mxu0 0
    %752 = vmatprep.subr.bf16.mxu0 0
    %753 = vmatpush2.bf16.msra.mxu0 0
    %754 = vmatprep.subr.bf16.mxu0 0
    %755 = vmatpush2.bf16.msra.mxu0 0
    %756 = vmatprep.subr.bf16.mxu0 0
    %757 = vmatpush2.bf16.msra.mxu0 0
    %758 = vmatprep.subr.bf16.mxu0 0
    %759 = vmatpush2.bf16.msra.mxu0 0
    %760 = vmatprep.subr.bf16.mxu0 0
    %761 = vmatpush2.bf16.msra.mxu0 0
    %762 = vmatprep.subr.bf16.mxu0 0
    %763 = vmatpush2.bf16.msra.mxu0 0
    %764 = vmatprep.subr.bf16.mxu0 0
    %765 = vmatpush2.bf16.msra.mxu0 0
    %766 = vmatprep.mubr.bf16.mxu0 0
    %767 = vmatmul.mubr.bf16.gmra.mxu0 %v729
    %v768 = vpop.f32.mrf.mxu0
    %v769 = vadd.f32 0.0, %v768
    %v770 = vpop.f32.mrf.mxu0
    %v771 = vpop.f32.mrf.mxu0
    %v772 = vpop.f32.mrf.mxu0
    %773 = vdwg.mxu0
    %v774 = vadd.f32 %v608, %v769
    %775 = vrot.lane.b32.xlu0 %v287, 104
    %v776 = vpop.permute.xlu0 %775
    %777 = vrot.lane.b32.xlu0 %v288, 104
    %v778 = vpop.permute.xlu0 %777
    %v780 = vsel %vm290, %v776, 0
    %v783 = vsel %vm290, %v778, 0
    %785 = vmatprep.subr.bf16.mxu0 0
    %786 = vmatpush1.bf16.xpose.msra.mxu0 0
    %787 = vmatprep.subr.bf16.mxu0 0
    %788 = vmatpush1.bf16.xpose.msra.mxu0 0
    %789 = vmatprep.subr.bf16.mxu0 0
    %790 = vmatpush1.bf16.xpose.msra.mxu0 0
    %791 = vmatprep.subr.bf16.mxu0 0
    %792 = vmatpush1.bf16.xpose.msra.mxu0 0
    %793 = vmatprep.subr.bf16.mxu0 0
    %794 = vmatpush1.bf16.xpose.msra.mxu0 0
    %795 = vmatprep.subr.bf16.mxu0 0
    %796 = vmatpush1.bf16.xpose.msra.mxu0 0
    %797 = vmatprep.subr.bf16.mxu0 0
    %798 = vmatpush1.bf16.xpose.msra.mxu0 0
    %799 = vmatprep.subr.bf16.mxu0 0
    %800 = vmatpush1.bf16.xpose.msra.mxu0 %v783
    %801 = vmatprep.subr.bf16.mxu0 0
    %802 = vmatpush2.bf16.xpose.msra.mxu0 0
    %803 = vmatprep.subr.bf16.mxu0 0
    %804 = vmatpush2.bf16.xpose.msra.mxu0 0
    %805 = vmatprep.subr.bf16.mxu0 0
    %806 = vmatpush2.bf16.xpose.msra.mxu0 0
    %807 = vmatprep.subr.bf16.mxu0 0
    %808 = vmatpush2.bf16.xpose.msra.mxu0 0
    %809 = vmatprep.subr.bf16.mxu0 0
    %810 = vmatpush2.bf16.xpose.msra.mxu0 0
    %811 = vmatprep.subr.bf16.mxu0 0
    %812 = vmatpush2.bf16.xpose.msra.mxu0 0
    %813 = vmatprep.subr.bf16.mxu0 0
    %814 = vmatpush2.bf16.xpose.msra.mxu0 0
    %815 = vmatprep.subr.bf16.mxu0 0
    %816 = vmatpush2.bf16.xpose.msra.mxu0 0
    %817 = vmatprep.mubr.bf16.mxu0 0
    %818 = vmatmul.mubr.bf16.gmra.mxu0 %v780
    %v819 = vpop.f32.mrf.mxu0
    %v820 = vadd.f32 0.0, %v819
    %v821 = vpop.f32.mrf.mxu0
    %v822 = vpop.f32.mrf.mxu0
    %v823 = vpop.f32.mrf.mxu0
    %824 = vdwg.mxu0
    %v825 = vmul.f32 %v820, 0.35355338
    %v826 = vsel %vm340, %v825, -1e+09
    %v827 = vsel %vm290, %v826, -inf
    %828 = vmax.xlane.f32.xlu0 %v827
    %v829 = vpop.xlane.xlu0 %828
    %v830 = vsub.f32 %v826, %v829
    %v831 = vmul.f32 %v830, 1.442695
    %v832 = vpow.pop %v831
    %v833 = vsel %vm290, %v832, 0.0
    %834 = vadd.xlane.f32.xlu0 %v833
    %v835 = vpop.xlane.xlu0 %834
    %v836 = vrcp.pop %v835
    %v837 = vmul.f32 %v832, %v836
    %v838 = vpack.c.bf16 %v837, %v837
    %839 = vrot.lane.b32.xlu0 %v289, 104
    %v840 = vpop.permute.xlu0 %839
    %v842 = vsel %vm290, %v838, 0
    %v845 = vsel %vm357, %v840, 0
    %847 = vmatprep.subr.bf16.mxu0 0
    %848 = vmatpush1.bf16.msra.mxu0 0
    %849 = vmatprep.subr.bf16.mxu0 0
    %850 = vmatpush1.bf16.msra.mxu0 0
    %851 = vmatprep.subr.bf16.mxu0 0
    %852 = vmatpush1.bf16.msra.mxu0 0
    %853 = vmatprep.subr.bf16.mxu0 0
    %854 = vmatpush1.bf16.msra.mxu0 0
    %855 = vmatprep.subr.bf16.mxu0 0
    %856 = vmatpush1.bf16.msra.mxu0 0
    %857 = vmatprep.subr.bf16.mxu0 0
    %858 = vmatpush1.bf16.msra.mxu0 0
    %859 = vmatprep.subr.bf16.mxu0 0
    %860 = vmatpush1.bf16.msra.mxu0 0
    %861 = vmatprep.subr.bf16.mxu0 0
    %862 = vmatpush1.bf16.msra.mxu0 %v845
    %863 = vmatprep.subr.bf16.mxu0 0
    %864 = vmatpush2.bf16.msra.mxu0 0
    %865 = vmatprep.subr.bf16.mxu0 0
    %866 = vmatpush2.bf16.msra.mxu0 0
    %867 = vmatprep.subr.bf16.mxu0 0
    %868 = vmatpush2.bf16.msra.mxu0 0
    %869 = vmatprep.subr.bf16.mxu0 0
    %870 = vmatpush2.bf16.msra.mxu0 0
    %871 = vmatprep.subr.bf16.mxu0 0
    %872 = vmatpush2.bf16.msra.mxu0 0
    %873 = vmatprep.subr.bf16.mxu0 0
    %874 = vmatpush2.bf16.msra.mxu0 0
    %875 = vmatprep.subr.bf16.mxu0 0
    %876 = vmatpush2.bf16.msra.mxu0 0
    %877 = vmatprep.subr.bf16.mxu0 0
    %878 = vmatpush2.bf16.msra.mxu0 0
    %879 = vmatprep.mubr.bf16.mxu0 0
    %880 = vmatmul.mubr.bf16.gmra.mxu0 %v842
    %v881 = vpop.f32.mrf.mxu0
    %v882 = vadd.f32 0.0, %v881
    %v883 = vpop.f32.mrf.mxu0
    %v884 = vpop.f32.mrf.mxu0
    %v885 = vpop.f32.mrf.mxu0
    %886 = vdwg.mxu0
    %v887 = vpack.c.bf16 %v882, %v882
    %s888 = scalar_lea.vmem %s9, 12
    %v889 = vld [vmem:[%s888] sm:$0xf]
    %v891 = vsel %vm290, %v887, 0
    %v894 = vsel %vm357, %v889, 0
    %896 = vmatprep.subr.bf16.mxu0 0
    %897 = vmatpush1.bf16.msra.mxu0 0
    %898 = vmatprep.subr.bf16.mxu0 0
    %899 = vmatpush1.bf16.msra.mxu0 0
    %900 = vmatprep.subr.bf16.mxu0 0
    %901 = vmatpush1.bf16.msra.mxu0 0
    %902 = vmatprep.subr.bf16.mxu0 0
    %903 = vmatpush1.bf16.msra.mxu0 0
    %904 = vmatprep.subr.bf16.mxu0 0
    %905 = vmatpush1.bf16.msra.mxu0 0
    %906 = vmatprep.subr.bf16.mxu0 0
    %907 = vmatpush1.bf16.msra.mxu0 0
    %908 = vmatprep.subr.bf16.mxu0 0
    %909 = vmatpush1.bf16.msra.mxu0 0
    %910 = vmatprep.subr.bf16.mxu0 0
    %911 = vmatpush1.bf16.msra.mxu0 %v894
    %912 = vmatprep.subr.bf16.mxu0 0
    %913 = vmatpush2.bf16.msra.mxu0 0
    %914 = vmatprep.subr.bf16.mxu0 0
    %915 = vmatpush2.bf16.msra.mxu0 0
    %916 = vmatprep.subr.bf16.mxu0 0
    %917 = vmatpush2.bf16.msra.mxu0 0
    %918 = vmatprep.subr.bf16.mxu0 0
    %919 = vmatpush2.bf16.msra.mxu0 0
    %920 = vmatprep.subr.bf16.mxu0 0
    %921 = vmatpush2.bf16.msra.mxu0 0
    %922 = vmatprep.subr.bf16.mxu0 0
    %923 = vmatpush2.bf16.msra.mxu0 0
    %924 = vmatprep.subr.bf16.mxu0 0
    %925 = vmatpush2.bf16.msra.mxu0 0
    %926 = vmatprep.subr.bf16.mxu0 0
    %927 = vmatpush2.bf16.msra.mxu0 0
    %928 = vmatprep.mubr.bf16.mxu0 0
    %929 = vmatmul.mubr.bf16.gmra.mxu0 %v891
    %v930 = vpop.f32.mrf.mxu0
    %v931 = vadd.f32 0.0, %v930
    %v932 = vpop.f32.mrf.mxu0
    %v933 = vpop.f32.mrf.mxu0
    %v934 = vpop.f32.mrf.mxu0
    %935 = vdwg.mxu0
    %v936 = vadd.f32 %v774, %v931
    %v937 = vlaneseq
    %v938 = vshrl.u32 %v937, 7
    %v939 = vsub.s32 0, %v938
    %v940 = vrot.slane %v103, %v939
    %v941 = vadd.f32 %v936, %v940
    %v942 = vadd.f32 %v58, %v941
    %v943 = vld [vmem:[%s4 + $0x2] sm:$0x1]
    %v944 = vld [vmem:[%s4 + $0x3] sm:$0x1]
    %v945 = vsel %vm67, %v942, 0.0
    %946 = vadd.xlane.f32.xlu0 %v945
    %v947 = vpop.xlane.xlu0 %946
    %v948 = vmul.f32 %v947, %v71
    %v949 = vsub.f32 %v942, %v948
    %v950 = vmul.f32 %v949, %v949
    %v951 = vsel %vm67, %v950, 0.0
    %952 = vadd.xlane.f32.xlu0 %v951
    %v953 = vpop.xlane.xlu0 %952
    %v954 = vmul.f32 %v953, 0.032258064
    %v955 = vrsqrt.pop %v954
    %v956 = vmul.f32 %v954, %v955
    %vm957 = vcmp.eq.f32.partialorder %v954, inf
    %v958 = vsel %vm957, %v954, %v956
    %vm959 = vcmp.eq.f32.partialorder %v954, 0.0
    %v960 = vand.u32 %v954, 2147483648
    %v961 = vsel %vm959, %v960, %v958
    %v962 = vadd.f32 %v961, 1e-06
    %v963 = vrcp.pop %v962
    %v964 = vmul.f32 %v949, %v963
    %v965 = vlaneseq
    %v966 = vshrl.u32 %v965, 7
    %v967 = vsub.s32 0, %v966
    %v968 = vrot.slane %v943, %v967
    %v969 = vmul.f32 %v968, %v964
    %v970 = vlaneseq
    %v971 = vshrl.u32 %v970, 7
    %v972 = vsub.s32 0, %v971
    %v973 = vrot.slane %v944, %v972
    %v974 = vadd.f32 %v969, %v973
    %v975 = vpack.c.bf16 %v974, %v974
    %v976 = vld [vmem:[%s4 + $0xa] sm:$0x1]
    %v977 = vld [vmem:[%s4 + $0xb] sm:$0x1]
    %v978 = vld [vmem:[%s4 + $0xc] sm:$0x1]
    %v979 = vld [vmem:[%s4 + $0xd] sm:$0x1]
    %v980 = vld [vmem:[%s10] sm:$0xf]
    %v981 = vld [vmem:[%s10 + $0x4] sm:$0xf]
    %v982 = vld [vmem:[%s10 + $0x8] sm:$0xf]
    %v983 = vld [vmem:[%s10 + $0xc] sm:$0xf]
    %v984 = vlaneseq
    %v985 = vshrl.u32 %v984, 7
    %v986 = vsub.s32 0, %v985
    %v987 = vrot.slane %v976, %v986
    %v992 = vunpack.c.l.b16 %v980
    %v993 = vunpack.c.l.b16 %v981
    %v994 = vunpack.c.l.b16 %v982
    %v995 = vunpack.c.l.b16 %v983
    %v996 = vpack.c.b16 %v993, %v992
    %v997 = vpack.c.b16 %v995, %v994
    %v1001 = vsel %vm67, %v975, 0
    %1003 = vmatprep.subr.bf16.mxu0 0
    %1004 = vmatpush1.bf16.msra.mxu0 0
    %1005 = vmatprep.subr.bf16.mxu0 0
    %1006 = vmatpush1.bf16.msra.mxu0 0
    %1007 = vmatprep.subr.bf16.mxu0 0
    %1008 = vmatpush1.bf16.msra.mxu0 0
    %1009 = vmatprep.subr.bf16.mxu0 0
    %1010 = vmatpush1.bf16.msra.mxu0 0
    %1011 = vmatprep.subr.bf16.mxu0 0
    %1012 = vmatpush1.bf16.msra.mxu0 0
    %1013 = vmatprep.subr.bf16.mxu0 0
    %1014 = vmatpush1.bf16.msra.mxu0 0
    %1015 = vmatprep.subr.bf16.mxu0 0
    %1016 = vmatpush1.bf16.msra.mxu0 %v997
    %1017 = vmatprep.subr.bf16.mxu0 0
    %1018 = vmatpush1.bf16.msra.mxu0 %v996
    %1019 = vmatprep.subr.bf16.mxu0 0
    %1020 = vmatpush2.bf16.msra.mxu0 0
    %1021 = vmatprep.subr.bf16.mxu0 0
    %1022 = vmatpush2.bf16.msra.mxu0 0
    %1023 = vmatprep.subr.bf16.mxu0 0
    %1024 = vmatpush2.bf16.msra.mxu0 0
    %1025 = vmatprep.subr.bf16.mxu0 0
    %1026 = vmatpush2.bf16.msra.mxu0 0
    %1027 = vmatprep.subr.bf16.mxu0 0
    %1028 = vmatpush2.bf16.msra.mxu0 0
    %1029 = vmatprep.subr.bf16.mxu0 0
    %1030 = vmatpush2.bf16.msra.mxu0 0
    %1031 = vmatprep.subr.bf16.mxu0 0
    %1032 = vmatpush2.bf16.msra.mxu0 0
    %1033 = vmatprep.subr.bf16.mxu0 0
    %1034 = vmatpush2.bf16.msra.mxu0 0
    %1035 = vmatprep.mubr.bf16.mxu0 0
    %1036 = vmatmul.mubr.bf16.gmra.mxu0 %v1001
    %v1037 = vpop.f32.mrf.mxu0
    %v1038 = vadd.f32 %v987, %v1037
    %v1039 = vpop.f32.mrf.mxu0
    %v1040 = vpop.f32.mrf.mxu0
    %v1041 = vpop.f32.mrf.mxu0
    %1042 = vdwg.mxu0
    %v1043 = vld [vmem:[%s11] sm:$0xf]
    %v1044 = vld [vmem:[%s11 + $0x4] sm:$0xf]
    %v1045 = vld [vmem:[%s11 + $0x8] sm:$0xf]
    %v1046 = vld [vmem:[%s11 + $0xc] sm:$0xf]
    %v1047 = vlaneseq
    %v1048 = vshrl.u32 %v1047, 7
    %v1049 = vsub.s32 0, %v1048
    %v1050 = vrot.slane %v977, %v1049
    %v1055 = vunpack.c.l.b16 %v1043
    %v1056 = vunpack.c.l.b16 %v1044
    %v1057 = vunpack.c.l.b16 %v1045
    %v1058 = vunpack.c.l.b16 %v1046
    %v1059 = vpack.c.b16 %v1056, %v1055
    %v1060 = vpack.c.b16 %v1058, %v1057
    %v1064 = vsel %vm67, %v60, 0
    %1066 = vmatprep.subr.bf16.mxu0 0
    %1067 = vmatpush1.bf16.msra.mxu0 0
    %1068 = vmatprep.subr.bf16.mxu0 0
    %1069 = vmatpush1.bf16.msra.mxu0 0
    %1070 = vmatprep.subr.bf16.mxu0 0
    %1071 = vmatpush1.bf16.msra.mxu0 0
    %1072 = vmatprep.subr.bf16.mxu0 0
    %1073 = vmatpush1.bf16.msra.mxu0 0
    %1074 = vmatprep.subr.bf16.mxu0 0
    %1075 = vmatpush1.bf16.msra.mxu0 0
    %1076 = vmatprep.subr.bf16.mxu0 0
    %1077 = vmatpush1.bf16.msra.mxu0 0
    %1078 = vmatprep.subr.bf16.mxu0 0
    %1079 = vmatpush1.bf16.msra.mxu0 %v1060
    %1080 = vmatprep.subr.bf16.mxu0 0
    %1081 = vmatpush1.bf16.msra.mxu0 %v1059
    %1082 = vmatprep.subr.bf16.mxu0 0
    %1083 = vmatpush2.bf16.msra.mxu0 0
    %1084 = vmatprep.subr.bf16.mxu0 0
    %1085 = vmatpush2.bf16.msra.mxu0 0
    %1086 = vmatprep.subr.bf16.mxu0 0
    %1087 = vmatpush2.bf16.msra.mxu0 0
    %1088 = vmatprep.subr.bf16.mxu0 0
    %1089 = vmatpush2.bf16.msra.mxu0 0
    %1090 = vmatprep.subr.bf16.mxu0 0
    %1091 = vmatpush2.bf16.msra.mxu0 0
    %1092 = vmatprep.subr.bf16.mxu0 0
    %1093 = vmatpush2.bf16.msra.mxu0 0
    %1094 = vmatprep.subr.bf16.mxu0 0
    %1095 = vmatpush2.bf16.msra.mxu0 0
    %1096 = vmatprep.subr.bf16.mxu0 0
    %1097 = vmatpush2.bf16.msra.mxu0 0
    %1098 = vmatprep.mubr.bf16.mxu0 0
    %1099 = vmatmul.mubr.bf16.gmra.mxu0 %v1064
    %v1100 = vpop.f32.mrf.mxu0
    %v1101 = vadd.f32 %v1050, %v1100
    %v1102 = vpop.f32.mrf.mxu0
    %v1103 = vpop.f32.mrf.mxu0
    %v1104 = vpop.f32.mrf.mxu0
    %1105 = vdwg.mxu0
    %v1106 = vld [vmem:[%s12] sm:$0xf]
    %v1107 = vld [vmem:[%s12 + $0x4] sm:$0xf]
    %v1108 = vld [vmem:[%s12 + $0x8] sm:$0xf]
    %v1109 = vld [vmem:[%s12 + $0xc] sm:$0xf]
    %v1110 = vlaneseq
    %v1111 = vshrl.u32 %v1110, 7
    %v1112 = vsub.s32 0, %v1111
    %v1113 = vrot.slane %v978, %v1112
    %v1118 = vunpack.c.l.b16 %v1106
    %v1119 = vunpack.c.l.b16 %v1107
    %v1120 = vunpack.c.l.b16 %v1108
    %v1121 = vunpack.c.l.b16 %v1109
    %v1122 = vpack.c.b16 %v1119, %v1118
    %v1123 = vpack.c.b16 %v1121, %v1120
    %1126 = vmatprep.subr.bf16.mxu0 0
    %1127 = vmatpush1.bf16.msra.mxu0 0
    %1128 = vmatprep.subr.bf16.mxu0 0
    %1129 = vmatpush1.bf16.msra.mxu0 0
    %1130 = vmatprep.subr.bf16.mxu0 0
    %1131 = vmatpush1.bf16.msra.mxu0 0
    %1132 = vmatprep.subr.bf16.mxu0 0
    %1133 = vmatpush1.bf16.msra.mxu0 0
    %1134 = vmatprep.subr.bf16.mxu0 0
    %1135 = vmatpush1.bf16.msra.mxu0 0
    %1136 = vmatprep.subr.bf16.mxu0 0
    %1137 = vmatpush1.bf16.msra.mxu0 0
    %1138 = vmatprep.subr.bf16.mxu0 0
    %1139 = vmatpush1.bf16.msra.mxu0 %v1123
    %1140 = vmatprep.subr.bf16.mxu0 0
    %1141 = vmatpush1.bf16.msra.mxu0 %v1122
    %1142 = vmatprep.subr.bf16.mxu0 0
    %1143 = vmatpush2.bf16.msra.mxu0 0
    %1144 = vmatprep.subr.bf16.mxu0 0
    %1145 = vmatpush2.bf16.msra.mxu0 0
    %1146 = vmatprep.subr.bf16.mxu0 0
    %1147 = vmatpush2.bf16.msra.mxu0 0
    %1148 = vmatprep.subr.bf16.mxu0 0
    %1149 = vmatpush2.bf16.msra.mxu0 0
    %1150 = vmatprep.subr.bf16.mxu0 0
    %1151 = vmatpush2.bf16.msra.mxu0 0
    %1152 = vmatprep.subr.bf16.mxu0 0
    %1153 = vmatpush2.bf16.msra.mxu0 0
    %1154 = vmatprep.subr.bf16.mxu0 0
    %1155 = vmatpush2.bf16.msra.mxu0 0
    %1156 = vmatprep.subr.bf16.mxu0 0
    %1157 = vmatpush2.bf16.msra.mxu0 0
    %1158 = vmatprep.mubr.bf16.mxu0 0
    %1159 = vmatmul.mubr.bf16.gmra.mxu0 %v1064
    %v1160 = vpop.f32.mrf.mxu0
    %v1161 = vadd.f32 %v1113, %v1160
    %v1162 = vpop.f32.mrf.mxu0
    %v1163 = vpop.f32.mrf.mxu0
    %v1164 = vpop.f32.mrf.mxu0
    %1165 = vdwg.mxu0
    %v1166 = vpack.c.bf16 %v1038, %v1038
    %v1167 = vpack.c.bf16 %v1101, %v1101
    %v1168 = vpack.c.bf16 %v1161, %v1161
    %v1170 = vsel %vm290, %v1166, 0
    %v1173 = vsel %vm290, %v1167, 0
    %1175 = vmatprep.subr.bf16.mxu0 0
    %1176 = vmatpush1.bf16.xpose.msra.mxu0 0
    %1177 = vmatprep.subr.bf16.mxu0 0
    %1178 = vmatpush1.bf16.xpose.msra.mxu0 0
    %1179 = vmatprep.subr.bf16.mxu0 0
    %1180 = vmatpush1.bf16.xpose.msra.mxu0 0
    %1181 = vmatprep.subr.bf16.mxu0 0
    %1182 = vmatpush1.bf16.xpose.msra.mxu0 0
    %1183 = vmatprep.subr.bf16.mxu0 0
    %1184 = vmatpush1.bf16.xpose.msra.mxu0 0
    %1185 = vmatprep.subr.bf16.mxu0 0
    %1186 = vmatpush1.bf16.xpose.msra.mxu0 0
    %1187 = vmatprep.subr.bf16.mxu0 0
    %1188 = vmatpush1.bf16.xpose.msra.mxu0 0
    %1189 = vmatprep.subr.bf16.mxu0 0
    %1190 = vmatpush1.bf16.xpose.msra.mxu0 %v1173
    %1191 = vmatprep.subr.bf16.mxu0 0
    %1192 = vmatpush2.bf16.xpose.msra.mxu0 0
    %1193 = vmatprep.subr.bf16.mxu0 0
    %1194 = vmatpush2.bf16.xpose.msra.mxu0 0
    %1195 = vmatprep.subr.bf16.mxu0 0
    %1196 = vmatpush2.bf16.xpose.msra.mxu0 0
    %1197 = vmatprep.subr.bf16.mxu0 0
    %1198 = vmatpush2.bf16.xpose.msra.mxu0 0
    %1199 = vmatprep.subr.bf16.mxu0 0
    %1200 = vmatpush2.bf16.xpose.msra.mxu0 0
    %1201 = vmatprep.subr.bf16.mxu0 0
    %1202 = vmatpush2.bf16.xpose.msra.mxu0 0
    %1203 = vmatprep.subr.bf16.mxu0 0
    %1204 = vmatpush2.bf16.xpose.msra.mxu0 0
    %1205 = vmatprep.subr.bf16.mxu0 0
    %1206 = vmatpush2.bf16.xpose.msra.mxu0 0
    %1207 = vmatprep.mubr.bf16.mxu0 0
    %1208 = vmatmul.mubr.bf16.gmra.mxu0 %v1170
    %v1209 = vpop.f32.mrf.mxu0
    %v1210 = vadd.f32 0.0, %v1209
    %v1211 = vpop.f32.mrf.mxu0
    %v1212 = vpop.f32.mrf.mxu0
    %v1213 = vpop.f32.mrf.mxu0
    %1214 = vdwg.mxu0
    %v1215 = vmul.f32 %v1210, 0.35355338
    %v1216 = vsel %vm64, 16843009, 0
    %v1217 = vunpack.c.0.s8 %v1216
    %vm1218 = vcmp.ne.s32.totalorder %v1217, 0
    %v1219 = vsel %vm1218, 1, 0
    %v1220 = vlaneseq
    %v1221 = vshrl.u32 %v1220, 7
    %v1222 = vsub.s32 0, %v1221
    %v1223 = vrot.slane %v1219, %v1222
    %vm1224 = vcmp.eq.s32.totalorder %v1223, 1
    %v1225 = vsel %vm1224, %v1215, -1e+09
    %v1226 = vsel %vm290, %v1225, -inf
    %1227 = vmax.xlane.f32.xlu0 %v1226
    %v1228 = vpop.xlane.xlu0 %1227
    %v1229 = vsub.f32 %v1225, %v1228
    %v1230 = vmul.f32 %v1229, 1.442695
    %v1231 = vpow.pop %v1230
    %v1232 = vsel %vm290, %v1231, 0.0
    %1233 = vadd.xlane.f32.xlu0 %v1232
    %v1234 = vpop.xlane.xlu0 %1233
    %v1235 = vrcp.pop %v1234
    %v1236 = vmul.f32 %v1231, %v1235
    %v1237 = vpack.c.bf16 %v1236, %v1236
    %v1239 = vsel %vm290, %v1237, 0
    %v1242 = vsel %vm357, %v1168, 0
    %1244 = vmatprep.subr.bf16.mxu0 0
    %1245 = vmatpush1.bf16.msra.mxu0 0
    %1246 = vmatprep.subr.bf16.mxu0 0
    %1247 = vmatpush1.bf16.msra.mxu0 0
    %1248 = vmatprep.subr.bf16.mxu0 0
    %1249 = vmatpush1.bf16.msra.mxu0 0
    %1250 = vmatprep.subr.bf16.mxu0 0
    %1251 = vmatpush1.bf16.msra.mxu0 0
    %1252 = vmatprep.subr.bf16.mxu0 0
    %1253 = vmatpush1.bf16.msra.mxu0 0
    %1254 = vmatprep.subr.bf16.mxu0 0
    %1255 = vmatpush1.bf16.msra.mxu0 0
    %1256 = vmatprep.subr.bf16.mxu0 0
    %1257 = vmatpush1.bf16.msra.mxu0 0
    %1258 = vmatprep.subr.bf16.mxu0 0
    %1259 = vmatpush1.bf16.msra.mxu0 %v1242
    %1260 = vmatprep.subr.bf16.mxu0 0
    %1261 = vmatpush2.bf16.msra.mxu0 0
    %1262 = vmatprep.subr.bf16.mxu0 0
    %1263 = vmatpush2.bf16.msra.mxu0 0
    %1264 = vmatprep.subr.bf16.mxu0 0
    %1265 = vmatpush2.bf16.msra.mxu0 0
    %1266 = vmatprep.subr.bf16.mxu0 0
    %1267 = vmatpush2.bf16.msra.mxu0 0
    %1268 = vmatprep.subr.bf16.mxu0 0
    %1269 = vmatpush2.bf16.msra.mxu0 0
    %1270 = vmatprep.subr.bf16.mxu0 0
    %1271 = vmatpush2.bf16.msra.mxu0 0
    %1272 = vmatprep.subr.bf16.mxu0 0
    %1273 = vmatpush2.bf16.msra.mxu0 0
    %1274 = vmatprep.subr.bf16.mxu0 0
    %1275 = vmatpush2.bf16.msra.mxu0 0
    %1276 = vmatprep.mubr.bf16.mxu0 0
    %1277 = vmatmul.mubr.bf16.gmra.mxu0 %v1239
    %v1278 = vpop.f32.mrf.mxu0
    %v1279 = vadd.f32 0.0, %v1278
    %v1280 = vpop.f32.mrf.mxu0
    %v1281 = vpop.f32.mrf.mxu0
    %v1282 = vpop.f32.mrf.mxu0
    %1283 = vdwg.mxu0
    %v1284 = vpack.c.bf16 %v1279, %v1279
    %v1285 = vld [vmem:[%s13] sm:$0xf]
    %1287 = vrot.lane.b32.xlu0 %v1166, 120
    %v1288 = vpop.permute.xlu0 %1287
    %1290 = vrot.lane.b32.xlu0 %v1167, 120
    %v1291 = vpop.permute.xlu0 %1290
    %v1293 = vsel %vm290, %v1288, 0
    %v1296 = vsel %vm290, %v1291, 0
    %1298 = vmatprep.subr.bf16.mxu0 0
    %1299 = vmatpush1.bf16.xpose.msra.mxu0 0
    %1300 = vmatprep.subr.bf16.mxu0 0
    %1301 = vmatpush1.bf16.xpose.msra.mxu0 0
    %1302 = vmatprep.subr.bf16.mxu0 0
    %1303 = vmatpush1.bf16.xpose.msra.mxu0 0
    %1304 = vmatprep.subr.bf16.mxu0 0
    %1305 = vmatpush1.bf16.xpose.msra.mxu0 0
    %1306 = vmatprep.subr.bf16.mxu0 0
    %1307 = vmatpush1.bf16.xpose.msra.mxu0 0
    %1308 = vmatprep.subr.bf16.mxu0 0
    %1309 = vmatpush1.bf16.xpose.msra.mxu0 0
    %1310 = vmatprep.subr.bf16.mxu0 0
    %1311 = vmatpush1.bf16.xpose.msra.mxu0 0
    %1312 = vmatprep.subr.bf16.mxu0 0
    %1313 = vmatpush1.bf16.xpose.msra.mxu0 %v1296
    %1314 = vmatprep.subr.bf16.mxu0 0
    %1315 = vmatpush2.bf16.xpose.msra.mxu0 0
    %1316 = vmatprep.subr.bf16.mxu0 0
    %1317 = vmatpush2.bf16.xpose.msra.mxu0 0
    %1318 = vmatprep.subr.bf16.mxu0 0
    %1319 = vmatpush2.bf16.xpose.msra.mxu0 0
    %1320 = vmatprep.subr.bf16.mxu0 0
    %1321 = vmatpush2.bf16.xpose.msra.mxu0 0
    %1322 = vmatprep.subr.bf16.mxu0 0
    %1323 = vmatpush2.bf16.xpose.msra.mxu0 0
    %1324 = vmatprep.subr.bf16.mxu0 0
    %1325 = vmatpush2.bf16.xpose.msra.mxu0 0
    %1326 = vmatprep.subr.bf16.mxu0 0
    %1327 = vmatpush2.bf16.xpose.msra.mxu0 0
    %1328 = vmatprep.subr.bf16.mxu0 0
    %1329 = vmatpush2.bf16.xpose.msra.mxu0 0
    %1330 = vmatprep.mubr.bf16.mxu0 0
    %1331 = vmatmul.mubr.bf16.gmra.mxu0 %v1293
    %v1332 = vpop.f32.mrf.mxu0
    %v1333 = vadd.f32 0.0, %v1332
    %v1334 = vpop.f32.mrf.mxu0
    %v1335 = vpop.f32.mrf.mxu0
    %v1336 = vpop.f32.mrf.mxu0
    %1337 = vdwg.mxu0
    %v1338 = vmul.f32 %v1333, 0.35355338
    %v1339 = vsel %vm1224, %v1338, -1e+09
    %v1340 = vsel %vm290, %v1339, -inf
    %1341 = vmax.xlane.f32.xlu0 %v1340
    %v1342 = vpop.xlane.xlu0 %1341
    %v1343 = vsub.f32 %v1339, %v1342
    %v1344 = vmul.f32 %v1343, 1.442695
    %v1345 = vpow.pop %v1344
    %v1346 = vsel %vm290, %v1345, 0.0
    %1347 = vadd.xlane.f32.xlu0 %v1346
    %v1348 = vpop.xlane.xlu0 %1347
    %v1349 = vrcp.pop %v1348
    %v1350 = vmul.f32 %v1345, %v1349
    %v1351 = vpack.c.bf16 %v1350, %v1350
    %1353 = vrot.lane.b32.xlu0 %v1168, 120
    %v1354 = vpop.permute.xlu0 %1353
    %v1356 = vsel %vm290, %v1351, 0
    %v1359 = vsel %vm357, %v1354, 0
    %1361 = vmatprep.subr.bf16.mxu0 0
    %1362 = vmatpush1.bf16.msra.mxu0 0
    %1363 = vmatprep.subr.bf16.mxu0 0
    %1364 = vmatpush1.bf16.msra.mxu0 0
    %1365 = vmatprep.subr.bf16.mxu0 0
    %1366 = vmatpush1.bf16.msra.mxu0 0
    %1367 = vmatprep.subr.bf16.mxu0 0
    %1368 = vmatpush1.bf16.msra.mxu0 0
    %1369 = vmatprep.subr.bf16.mxu0 0
    %1370 = vmatpush1.bf16.msra.mxu0 0
    %1371 = vmatprep.subr.bf16.mxu0 0
    %1372 = vmatpush1.bf16.msra.mxu0 0
    %1373 = vmatprep.subr.bf16.mxu0 0
    %1374 = vmatpush1.bf16.msra.mxu0 0
    %1375 = vmatprep.subr.bf16.mxu0 0
    %1376 = vmatpush1.bf16.msra.mxu0 %v1359
    %1377 = vmatprep.subr.bf16.mxu0 0
    %1378 = vmatpush2.bf16.msra.mxu0 0
    %1379 = vmatprep.subr.bf16.mxu0 0
    %1380 = vmatpush2.bf16.msra.mxu0 0
    %1381 = vmatprep.subr.bf16.mxu0 0
    %1382 = vmatpush2.bf16.msra.mxu0 0
    %1383 = vmatprep.subr.bf16.mxu0 0
    %1384 = vmatpush2.bf16.msra.mxu0 0
    %1385 = vmatprep.subr.bf16.mxu0 0
    %1386 = vmatpush2.bf16.msra.mxu0 0
    %1387 = vmatprep.subr.bf16.mxu0 0
    %1388 = vmatpush2.bf16.msra.mxu0 0
    %1389 = vmatprep.subr.bf16.mxu0 0
    %1390 = vmatpush2.bf16.msra.mxu0 0
    %1391 = vmatprep.subr.bf16.mxu0 0
    %1392 = vmatpush2.bf16.msra.mxu0 0
    %1393 = vmatprep.mubr.bf16.mxu0 0
    %1394 = vmatmul.mubr.bf16.gmra.mxu0 %v1356
    %v1395 = vpop.f32.mrf.mxu0
    %v1396 = vadd.f32 0.0, %v1395
    %v1397 = vpop.f32.mrf.mxu0
    %v1398 = vpop.f32.mrf.mxu0
    %v1399 = vpop.f32.mrf.mxu0
    %1400 = vdwg.mxu0
    %v1401 = vpack.c.bf16 %v1396, %v1396
    %s1402 = scalar_lea.vmem %s13, 4
    %v1403 = vld [vmem:[%s1402] sm:$0xf]
    %v1405 = vsel %vm290, %v1401, 0
    %v1408 = vsel %vm357, %v1403, 0
    %1410 = vmatprep.subr.bf16.mxu0 0
    %1411 = vmatpush1.bf16.msra.mxu0 0
    %1412 = vmatprep.subr.bf16.mxu0 0
    %1413 = vmatpush1.bf16.msra.mxu0 0
    %1414 = vmatprep.subr.bf16.mxu0 0
    %1415 = vmatpush1.bf16.msra.mxu0 0
    %1416 = vmatprep.subr.bf16.mxu0 0
    %1417 = vmatpush1.bf16.msra.mxu0 0
    %1418 = vmatprep.subr.bf16.mxu0 0
    %1419 = vmatpush1.bf16.msra.mxu0 0
    %1420 = vmatprep.subr.bf16.mxu0 0
    %1421 = vmatpush1.bf16.msra.mxu0 0
    %1422 = vmatprep.subr.bf16.mxu0 0
    %1423 = vmatpush1.bf16.msra.mxu0 0
    %1424 = vmatprep.subr.bf16.mxu0 0
    %1425 = vmatpush1.bf16.msra.mxu0 %v1408
    %1426 = vmatprep.subr.bf16.mxu0 0
    %1427 = vmatpush2.bf16.msra.mxu0 0
    %1428 = vmatprep.subr.bf16.mxu0 0
    %1429 = vmatpush2.bf16.msra.mxu0 0
    %1430 = vmatprep.subr.bf16.mxu0 0
    %1431 = vmatpush2.bf16.msra.mxu0 0
    %1432 = vmatprep.subr.bf16.mxu0 0
    %1433 = vmatpush2.bf16.msra.mxu0 0
    %1434 = vmatprep.subr.bf16.mxu0 0
    %1435 = vmatpush2.bf16.msra.mxu0 0
    %1436 = vmatprep.subr.bf16.mxu0 0
    %1437 = vmatpush2.bf16.msra.mxu0 0
    %1438 = vmatprep.subr.bf16.mxu0 0
    %1439 = vmatpush2.bf16.msra.mxu0 0
    %1440 = vmatprep.subr.bf16.mxu0 0
    %1441 = vmatpush2.bf16.msra.mxu0 0
    %1442 = vmatprep.mubr.bf16.mxu0 0
    %1443 = vmatmul.mubr.bf16.gmra.mxu0 %v1405
    %v1444 = vpop.f32.mrf.mxu0
    %v1445 = vadd.f32 0.0, %v1444
    %v1446 = vpop.f32.mrf.mxu0
    %v1447 = vpop.f32.mrf.mxu0
    %v1448 = vpop.f32.mrf.mxu0
    %1449 = vdwg.mxu0
    %v1451 = vsel %vm290, %v1284, 0
    %v1454 = vsel %vm357, %v1285, 0
    %1456 = vmatprep.subr.bf16.mxu0 0
    %1457 = vmatpush1.bf16.msra.mxu0 0
    %1458 = vmatprep.subr.bf16.mxu0 0
    %1459 = vmatpush1.bf16.msra.mxu0 0
    %1460 = vmatprep.subr.bf16.mxu0 0
    %1461 = vmatpush1.bf16.msra.mxu0 0
    %1462 = vmatprep.subr.bf16.mxu0 0
    %1463 = vmatpush1.bf16.msra.mxu0 0
    %1464 = vmatprep.subr.bf16.mxu0 0
    %1465 = vmatpush1.bf16.msra.mxu0 0
    %1466 = vmatprep.subr.bf16.mxu0 0
    %1467 = vmatpush1.bf16.msra.mxu0 0
    %1468 = vmatprep.subr.bf16.mxu0 0
    %1469 = vmatpush1.bf16.msra.mxu0 0
    %1470 = vmatprep.subr.bf16.mxu0 0
    %1471 = vmatpush1.bf16.msra.mxu0 %v1454
    %1472 = vmatprep.subr.bf16.mxu0 0
    %1473 = vmatpush2.bf16.msra.mxu0 0
    %1474 = vmatprep.subr.bf16.mxu0 0
    %1475 = vmatpush2.bf16.msra.mxu0 0
    %1476 = vmatprep.subr.bf16.mxu0 0
    %1477 = vmatpush2.bf16.msra.mxu0 0
    %1478 = vmatprep.subr.bf16.mxu0 0
    %1479 = vmatpush2.bf16.msra.mxu0 0
    %1480 = vmatprep.subr.bf16.mxu0 0
    %1481 = vmatpush2.bf16.msra.mxu0 0
    %1482 = vmatprep.subr.bf16.mxu0 0
    %1483 = vmatpush2.bf16.msra.mxu0 0
    %1484 = vmatprep.subr.bf16.mxu0 0
    %1485 = vmatpush2.bf16.msra.mxu0 0
    %1486 = vmatprep.subr.bf16.mxu0 0
    %1487 = vmatpush2.bf16.msra.mxu0 0
    %1488 = vmatprep.mubr.bf16.mxu0 0
    %1489 = vmatmul.mubr.bf16.gmra.mxu0 %v1451
    %v1490 = vpop.f32.mrf.mxu0
    %v1491 = vadd.f32 %v1445, %v1490
    %v1492 = vpop.f32.mrf.mxu0
    %v1493 = vpop.f32.mrf.mxu0
    %v1494 = vpop.f32.mrf.mxu0
    %1495 = vdwg.mxu0
    %1496 = vrot.lane.b32.xlu0 %v1166, 112
    %v1497 = vpop.permute.xlu0 %1496
    %1498 = vrot.lane.b32.xlu0 %v1167, 112
    %v1499 = vpop.permute.xlu0 %1498
    %v1501 = vsel %vm290, %v1497, 0
    %v1504 = vsel %vm290, %v1499, 0
    %1506 = vmatprep.subr.bf16.mxu0 0
    %1507 = vmatpush1.bf16.xpose.msra.mxu0 0
    %1508 = vmatprep.subr.bf16.mxu0 0
    %1509 = vmatpush1.bf16.xpose.msra.mxu0 0
    %1510 = vmatprep.subr.bf16.mxu0 0
    %1511 = vmatpush1.bf16.xpose.msra.mxu0 0
    %1512 = vmatprep.subr.bf16.mxu0 0
    %1513 = vmatpush1.bf16.xpose.msra.mxu0 0
    %1514 = vmatprep.subr.bf16.mxu0 0
    %1515 = vmatpush1.bf16.xpose.msra.mxu0 0
    %1516 = vmatprep.subr.bf16.mxu0 0
    %1517 = vmatpush1.bf16.xpose.msra.mxu0 0
    %1518 = vmatprep.subr.bf16.mxu0 0
    %1519 = vmatpush1.bf16.xpose.msra.mxu0 0
    %1520 = vmatprep.subr.bf16.mxu0 0
    %1521 = vmatpush1.bf16.xpose.msra.mxu0 %v1504
    %1522 = vmatprep.subr.bf16.mxu0 0
    %1523 = vmatpush2.bf16.xpose.msra.mxu0 0
    %1524 = vmatprep.subr.bf16.mxu0 0
    %1525 = vmatpush2.bf16.xpose.msra.mxu0 0
    %1526 = vmatprep.subr.bf16.mxu0 0
    %1527 = vmatpush2.bf16.xpose.msra.mxu0 0
    %1528 = vmatprep.subr.bf16.mxu0 0
    %1529 = vmatpush2.bf16.xpose.msra.mxu0 0
    %1530 = vmatprep.subr.bf16.mxu0 0
    %1531 = vmatpush2.bf16.xpose.msra.mxu0 0
    %1532 = vmatprep.subr.bf16.mxu0 0
    %1533 = vmatpush2.bf16.xpose.msra.mxu0 0
    %1534 = vmatprep.subr.bf16.mxu0 0
    %1535 = vmatpush2.bf16.xpose.msra.mxu0 0
    %1536 = vmatprep.subr.bf16.mxu0 0
    %1537 = vmatpush2.bf16.xpose.msra.mxu0 0
    %1538 = vmatprep.mubr.bf16.mxu0 0
    %1539 = vmatmul.mubr.bf16.gmra.mxu0 %v1501
    %v1540 = vpop.f32.mrf.mxu0
    %v1541 = vadd.f32 0.0, %v1540
    %v1542 = vpop.f32.mrf.mxu0
    %v1543 = vpop.f32.mrf.mxu0
    %v1544 = vpop.f32.mrf.mxu0
    %1545 = vdwg.mxu0
    %v1546 = vmul.f32 %v1541, 0.35355338
    %v1547 = vsel %vm1224, %v1546, -1e+09
    %v1548 = vsel %vm290, %v1547, -inf
    %1549 = vmax.xlane.f32.xlu0 %v1548
    %v1550 = vpop.xlane.xlu0 %1549
    %v1551 = vsub.f32 %v1547, %v1550
    %v1552 = vmul.f32 %v1551, 1.442695
    %v1553 = vpow.pop %v1552
    %v1554 = vsel %vm290, %v1553, 0.0
    %1555 = vadd.xlane.f32.xlu0 %v1554
    %v1556 = vpop.xlane.xlu0 %1555
    %v1557 = vrcp.pop %v1556
    %v1558 = vmul.f32 %v1553, %v1557
    %v1559 = vpack.c.bf16 %v1558, %v1558
    %1560 = vrot.lane.b32.xlu0 %v1168, 112
    %v1561 = vpop.permute.xlu0 %1560
    %v1563 = vsel %vm290, %v1559, 0
    %v1566 = vsel %vm357, %v1561, 0
    %1568 = vmatprep.subr.bf16.mxu0 0
    %1569 = vmatpush1.bf16.msra.mxu0 0
    %1570 = vmatprep.subr.bf16.mxu0 0
    %1571 = vmatpush1.bf16.msra.mxu0 0
    %1572 = vmatprep.subr.bf16.mxu0 0
    %1573 = vmatpush1.bf16.msra.mxu0 0
    %1574 = vmatprep.subr.bf16.mxu0 0
    %1575 = vmatpush1.bf16.msra.mxu0 0
    %1576 = vmatprep.subr.bf16.mxu0 0
    %1577 = vmatpush1.bf16.msra.mxu0 0
    %1578 = vmatprep.subr.bf16.mxu0 0
    %1579 = vmatpush1.bf16.msra.mxu0 0
    %1580 = vmatprep.subr.bf16.mxu0 0
    %1581 = vmatpush1.bf16.msra.mxu0 0
    %1582 = vmatprep.subr.bf16.mxu0 0
    %1583 = vmatpush1.bf16.msra.mxu0 %v1566
    %1584 = vmatprep.subr.bf16.mxu0 0
    %1585 = vmatpush2.bf16.msra.mxu0 0
    %1586 = vmatprep.subr.bf16.mxu0 0
    %1587 = vmatpush2.bf16.msra.mxu0 0
    %1588 = vmatprep.subr.bf16.mxu0 0
    %1589 = vmatpush2.bf16.msra.mxu0 0
    %1590 = vmatprep.subr.bf16.mxu0 0
    %1591 = vmatpush2.bf16.msra.mxu0 0
    %1592 = vmatprep.subr.bf16.mxu0 0
    %1593 = vmatpush2.bf16.msra.mxu0 0
    %1594 = vmatprep.subr.bf16.mxu0 0
    %1595 = vmatpush2.bf16.msra.mxu0 0
    %1596 = vmatprep.subr.bf16.mxu0 0
    %1597 = vmatpush2.bf16.msra.mxu0 0
    %1598 = vmatprep.subr.bf16.mxu0 0
    %1599 = vmatpush2.bf16.msra.mxu0 0
    %1600 = vmatprep.mubr.bf16.mxu0 0
    %1601 = vmatmul.mubr.bf16.gmra.mxu0 %v1563
    %v1602 = vpop.f32.mrf.mxu0
    %v1603 = vadd.f32 0.0, %v1602
    %v1604 = vpop.f32.mrf.mxu0
    %v1605 = vpop.f32.mrf.mxu0
    %v1606 = vpop.f32.mrf.mxu0
    %1607 = vdwg.mxu0
    %v1608 = vpack.c.bf16 %v1603, %v1603
    %s1609 = scalar_lea.vmem %s13, 8
    %v1610 = vld [vmem:[%s1609] sm:$0xf]
    %v1612 = vsel %vm290, %v1608, 0
    %v1615 = vsel %vm357, %v1610, 0
    %1617 = vmatprep.subr.bf16.mxu0 0
    %1618 = vmatpush1.bf16.msra.mxu0 0
    %1619 = vmatprep.subr.bf16.mxu0 0
    %1620 = vmatpush1.bf16.msra.mxu0 0
    %1621 = vmatprep.subr.bf16.mxu0 0
    %1622 = vmatpush1.bf16.msra.mxu0 0
    %1623 = vmatprep.subr.bf16.mxu0 0
    %1624 = vmatpush1.bf16.msra.mxu0 0
    %1625 = vmatprep.subr.bf16.mxu0 0
    %1626 = vmatpush1.bf16.msra.mxu0 0
    %1627 = vmatprep.subr.bf16.mxu0 0
    %1628 = vmatpush1.bf16.msra.mxu0 0
    %1629 = vmatprep.subr.bf16.mxu0 0
    %1630 = vmatpush1.bf16.msra.mxu0 0
    %1631 = vmatprep.subr.bf16.mxu0 0
    %1632 = vmatpush1.bf16.msra.mxu0 %v1615
    %1633 = vmatprep.subr.bf16.mxu0 0
    %1634 = vmatpush2.bf16.msra.mxu0 0
    %1635 = vmatprep.subr.bf16.mxu0 0
    %1636 = vmatpush2.bf16.msra.mxu0 0
    %1637 = vmatprep.subr.bf16.mxu0 0
    %1638 = vmatpush2.bf16.msra.mxu0 0
    %1639 = vmatprep.subr.bf16.mxu0 0
    %1640 = vmatpush2.bf16.msra.mxu0 0
    %1641 = vmatprep.subr.bf16.mxu0 0
    %1642 = vmatpush2.bf16.msra.mxu0 0
    %1643 = vmatprep.subr.bf16.mxu0 0
    %1644 = vmatpush2.bf16.msra.mxu0 0
    %1645 = vmatprep.subr.bf16.mxu0 0
    %1646 = vmatpush2.bf16.msra.mxu0 0
    %1647 = vmatprep.subr.bf16.mxu0 0
    %1648 = vmatpush2.bf16.msra.mxu0 0
    %1649 = vmatprep.mubr.bf16.mxu0 0
    %1650 = vmatmul.mubr.bf16.gmra.mxu0 %v1612
    %v1651 = vpop.f32.mrf.mxu0
    %v1652 = vadd.f32 0.0, %v1651
    %v1653 = vpop.f32.mrf.mxu0
    %v1654 = vpop.f32.mrf.mxu0
    %v1655 = vpop.f32.mrf.mxu0
    %1656 = vdwg.mxu0
    %v1657 = vadd.f32 %v1491, %v1652
    %1658 = vrot.lane.b32.xlu0 %v1166, 104
    %v1659 = vpop.permute.xlu0 %1658
    %1660 = vrot.lane.b32.xlu0 %v1167, 104
    %v1661 = vpop.permute.xlu0 %1660
    %v1663 = vsel %vm290, %v1659, 0
    %v1666 = vsel %vm290, %v1661, 0
    %1668 = vmatprep.subr.bf16.mxu0 0
    %1669 = vmatpush1.bf16.xpose.msra.mxu0 0
    %1670 = vmatprep.subr.bf16.mxu0 0
    %1671 = vmatpush1.bf16.xpose.msra.mxu0 0
    %1672 = vmatprep.subr.bf16.mxu0 0
    %1673 = vmatpush1.bf16.xpose.msra.mxu0 0
    %1674 = vmatprep.subr.bf16.mxu0 0
    %1675 = vmatpush1.bf16.xpose.msra.mxu0 0
    %1676 = vmatprep.subr.bf16.mxu0 0
    %1677 = vmatpush1.bf16.xpose.msra.mxu0 0
    %1678 = vmatprep.subr.bf16.mxu0 0
    %1679 = vmatpush1.bf16.xpose.msra.mxu0 0
    %1680 = vmatprep.subr.bf16.mxu0 0
    %1681 = vmatpush1.bf16.xpose.msra.mxu0 0
    %1682 = vmatprep.subr.bf16.mxu0 0
    %1683 = vmatpush1.bf16.xpose.msra.mxu0 %v1666
    %1684 = vmatprep.subr.bf16.mxu0 0
    %1685 = vmatpush2.bf16.xpose.msra.mxu0 0
    %1686 = vmatprep.subr.bf16.mxu0 0
    %1687 = vmatpush2.bf16.xpose.msra.mxu0 0
    %1688 = vmatprep.subr.bf16.mxu0 0
    %1689 = vmatpush2.bf16.xpose.msra.mxu0 0
    %1690 = vmatprep.subr.bf16.mxu0 0
    %1691 = vmatpush2.bf16.xpose.msra.mxu0 0
    %1692 = vmatprep.subr.bf16.mxu0 0
    %1693 = vmatpush2.bf16.xpose.msra.mxu0 0
    %1694 = vmatprep.subr.bf16.mxu0 0
    %1695 = vmatpush2.bf16.xpose.msra.mxu0 0
    %1696 = vmatprep.subr.bf16.mxu0 0
    %1697 = vmatpush2.bf16.xpose.msra.mxu0 0
    %1698 = vmatprep.subr.bf16.mxu0 0
    %1699 = vmatpush2.bf16.xpose.msra.mxu0 0
    %1700 = vmatprep.mubr.bf16.mxu0 0
    %1701 = vmatmul.mubr.bf16.gmra.mxu0 %v1663
    %v1702 = vpop.f32.mrf.mxu0
    %v1703 = vadd.f32 0.0, %v1702
    %v1704 = vpop.f32.mrf.mxu0
    %v1705 = vpop.f32.mrf.mxu0
    %v1706 = vpop.f32.mrf.mxu0
    %1707 = vdwg.mxu0
    %v1708 = vmul.f32 %v1703, 0.35355338
    %v1709 = vsel %vm1224, %v1708, -1e+09
    %v1710 = vsel %vm290, %v1709, -inf
    %1711 = vmax.xlane.f32.xlu0 %v1710
    %v1712 = vpop.xlane.xlu0 %1711
    %v1713 = vsub.f32 %v1709, %v1712
    %v1714 = vmul.f32 %v1713, 1.442695
    %v1715 = vpow.pop %v1714
    %v1716 = vsel %vm290, %v1715, 0.0
    %1717 = vadd.xlane.f32.xlu0 %v1716
    %v1718 = vpop.xlane.xlu0 %1717
    %v1719 = vrcp.pop %v1718
    %v1720 = vmul.f32 %v1715, %v1719
    %v1721 = vpack.c.bf16 %v1720, %v1720
    %1722 = vrot.lane.b32.xlu0 %v1168, 104
    %v1723 = vpop.permute.xlu0 %1722
    %v1725 = vsel %vm290, %v1721, 0
    %v1728 = vsel %vm357, %v1723, 0
    %1730 = vmatprep.subr.bf16.mxu0 0
    %1731 = vmatpush1.bf16.msra.mxu0 0
    %1732 = vmatprep.subr.bf16.mxu0 0
    %1733 = vmatpush1.bf16.msra.mxu0 0
    %1734 = vmatprep.subr.bf16.mxu0 0
    %1735 = vmatpush1.bf16.msra.mxu0 0
    %1736 = vmatprep.subr.bf16.mxu0 0
    %1737 = vmatpush1.bf16.msra.mxu0 0
    %1738 = vmatprep.subr.bf16.mxu0 0
    %1739 = vmatpush1.bf16.msra.mxu0 0
    %1740 = vmatprep.subr.bf16.mxu0 0
    %1741 = vmatpush1.bf16.msra.mxu0 0
    %1742 = vmatprep.subr.bf16.mxu0 0
    %1743 = vmatpush1.bf16.msra.mxu0 0
    %1744 = vmatprep.subr.bf16.mxu0 0
    %1745 = vmatpush1.bf16.msra.mxu0 %v1728
    %1746 = vmatprep.subr.bf16.mxu0 0
    %1747 = vmatpush2.bf16.msra.mxu0 0
    %1748 = vmatprep.subr.bf16.mxu0 0
    %1749 = vmatpush2.bf16.msra.mxu0 0
    %1750 = vmatprep.subr.bf16.mxu0 0
    %1751 = vmatpush2.bf16.msra.mxu0 0
    %1752 = vmatprep.subr.bf16.mxu0 0
    %1753 = vmatpush2.bf16.msra.mxu0 0
    %1754 = vmatprep.subr.bf16.mxu0 0
    %1755 = vmatpush2.bf16.msra.mxu0 0
    %1756 = vmatprep.subr.bf16.mxu0 0
    %1757 = vmatpush2.bf16.msra.mxu0 0
    %1758 = vmatprep.subr.bf16.mxu0 0
    %1759 = vmatpush2.bf16.msra.mxu0 0
    %1760 = vmatprep.subr.bf16.mxu0 0
    %1761 = vmatpush2.bf16.msra.mxu0 0
    %1762 = vmatprep.mubr.bf16.mxu0 0
    %1763 = vmatmul.mubr.bf16.gmra.mxu0 %v1725
    %v1764 = vpop.f32.mrf.mxu0
    %v1765 = vadd.f32 0.0, %v1764
    %v1766 = vpop.f32.mrf.mxu0
    %v1767 = vpop.f32.mrf.mxu0
    %v1768 = vpop.f32.mrf.mxu0
    %1769 = vdwg.mxu0
    %v1770 = vpack.c.bf16 %v1765, %v1765
    %s1771 = scalar_lea.vmem %s13, 12
    %v1772 = vld [vmem:[%s1771] sm:$0xf]
    %v1774 = vsel %vm290, %v1770, 0
    %v1777 = vsel %vm357, %v1772, 0
    %1779 = vmatprep.subr.bf16.mxu0 0
    %1780 = vmatpush1.bf16.msra.mxu0 0
    %1781 = vmatprep.subr.bf16.mxu0 0
    %1782 = vmatpush1.bf16.msra.mxu0 0
    %1783 = vmatprep.subr.bf16.mxu0 0
    %1784 = vmatpush1.bf16.msra.mxu0 0
    %1785 = vmatprep.subr.bf16.mxu0 0
    %1786 = vmatpush1.bf16.msra.mxu0 0
    %1787 = vmatprep.subr.bf16.mxu0 0
    %1788 = vmatpush1.bf16.msra.mxu0 0
    %1789 = vmatprep.subr.bf16.mxu0 0
    %1790 = vmatpush1.bf16.msra.mxu0 0
    %1791 = vmatprep.subr.bf16.mxu0 0
    %1792 = vmatpush1.bf16.msra.mxu0 0
    %1793 = vmatprep.subr.bf16.mxu0 0
    %1794 = vmatpush1.bf16.msra.mxu0 %v1777
    %1795 = vmatprep.subr.bf16.mxu0 0
    %1796 = vmatpush2.bf16.msra.mxu0 0
    %1797 = vmatprep.subr.bf16.mxu0 0
    %1798 = vmatpush2.bf16.msra.mxu0 0
    %1799 = vmatprep.subr.bf16.mxu0 0
    %1800 = vmatpush2.bf16.msra.mxu0 0
    %1801 = vmatprep.subr.bf16.mxu0 0
    %1802 = vmatpush2.bf16.msra.mxu0 0
    %1803 = vmatprep.subr.bf16.mxu0 0
    %1804 = vmatpush2.bf16.msra.mxu0 0
    %1805 = vmatprep.subr.bf16.mxu0 0
    %1806 = vmatpush2.bf16.msra.mxu0 0
    %1807 = vmatprep.subr.bf16.mxu0 0
    %1808 = vmatpush2.bf16.msra.mxu0 0
    %1809 = vmatprep.subr.bf16.mxu0 0
    %1810 = vmatpush2.bf16.msra.mxu0 0
    %1811 = vmatprep.mubr.bf16.mxu0 0
    %1812 = vmatmul.mubr.bf16.gmra.mxu0 %v1774
    %v1813 = vpop.f32.mrf.mxu0
    %v1814 = vadd.f32 0.0, %v1813
    %v1815 = vpop.f32.mrf.mxu0
    %v1816 = vpop.f32.mrf.mxu0
    %v1817 = vpop.f32.mrf.mxu0
    %1818 = vdwg.mxu0
    %v1819 = vadd.f32 %v1657, %v1814
    %v1820 = vlaneseq
    %v1821 = vshrl.u32 %v1820, 7
    %v1822 = vsub.s32 0, %v1821
    %v1823 = vrot.slane %v979, %v1822
    %v1824 = vadd.f32 %v1819, %v1823
    %v1825 = vadd.f32 %v942, %v1824
    %v1826 = vld [vmem:[%s4 + $0x4] sm:$0x1]
    %v1827 = vld [vmem:[%s4 + $0x5] sm:$0x1]
    %v1828 = vsel %vm67, %v1825, 0.0
    %1829 = vadd.xlane.f32.xlu0 %v1828
    %v1830 = vpop.xlane.xlu0 %1829
    %v1831 = vmul.f32 %v1830, %v71
    %v1832 = vsub.f32 %v1825, %v1831
    %v1833 = vmul.f32 %v1832, %v1832
    %v1834 = vsel %vm67, %v1833, 0.0
    %1835 = vadd.xlane.f32.xlu0 %v1834
    %v1836 = vpop.xlane.xlu0 %1835
    %v1837 = vmul.f32 %v1836, 0.032258064
    %v1838 = vrsqrt.pop %v1837
    %v1839 = vmul.f32 %v1837, %v1838
    %vm1840 = vcmp.eq.f32.partialorder %v1837, inf
    %v1841 = vsel %vm1840, %v1837, %v1839
    %vm1842 = vcmp.eq.f32.partialorder %v1837, 0.0
    %v1843 = vand.u32 %v1837, 2147483648
    %v1844 = vsel %vm1842, %v1843, %v1841
    %v1845 = vadd.f32 %v1844, 1e-06
    %v1846 = vrcp.pop %v1845
    %v1847 = vmul.f32 %v1832, %v1846
    %v1848 = vlaneseq
    %v1849 = vshrl.u32 %v1848, 7
    %v1850 = vsub.s32 0, %v1849
    %v1851 = vrot.slane %v1826, %v1850
    %v1852 = vmul.f32 %v1851, %v1847
    %v1853 = vlaneseq
    %v1854 = vshrl.u32 %v1853, 7
    %v1855 = vsub.s32 0, %v1854
    %v1856 = vrot.slane %v1827, %v1855
    %v1857 = vadd.f32 %v1852, %v1856
    %v1858 = vpack.c.bf16 %v1857, %v1857
    %v1859 = vld [vmem:[%s4 + $0xe] sm:$0x1]
    %v1860 = vld [vmem:[%s14] sm:$0xf]
    %v1861 = vld [vmem:[%s14 + $0x4] sm:$0xf]
    %v1862 = vld [vmem:[%s14 + $0x8] sm:$0xf]
    %v1863 = vld [vmem:[%s14 + $0xc] sm:$0xf]
    %v1865 = vlaneseq
    %v1866 = vshrl.u32 %v1865, 7
    %v1867 = vsub.s32 0, %v1866
    %v1868 = vrot.slane %v57, %v1867
    %v1874 = vunpack.c.l.b16 %v1860
    %v1875 = vunpack.c.l.b16 %v1861
    %v1876 = vunpack.c.l.b16 %v1862
    %v1877 = vunpack.c.l.b16 %v1863
    %v1878 = vpack.c.b16 %v1875, %v1874
    %v1879 = vpack.c.b16 %v1877, %v1876
    %v1883 = vsel %vm67, %v1858, 0
    %1885 = vmatprep.subr.bf16.mxu0 0
    %1886 = vmatpush1.bf16.msra.mxu0 0
    %1887 = vmatprep.subr.bf16.mxu0 0
    %1888 = vmatpush1.bf16.msra.mxu0 0
    %1889 = vmatprep.subr.bf16.mxu0 0
    %1890 = vmatpush1.bf16.msra.mxu0 0
    %1891 = vmatprep.subr.bf16.mxu0 0
    %1892 = vmatpush1.bf16.msra.mxu0 0
    %1893 = vmatprep.subr.bf16.mxu0 0
    %1894 = vmatpush1.bf16.msra.mxu0 0
    %1895 = vmatprep.subr.bf16.mxu0 0
    %1896 = vmatpush1.bf16.msra.mxu0 0
    %1897 = vmatprep.subr.bf16.mxu0 0
    %1898 = vmatpush1.bf16.msra.mxu0 %v1879
    %1899 = vmatprep.subr.bf16.mxu0 0
    %1900 = vmatpush1.bf16.msra.mxu0 %v1878
    %1901 = vmatprep.subr.bf16.mxu0 0
    %1902 = vmatpush2.bf16.msra.mxu0 0
    %1903 = vmatprep.subr.bf16.mxu0 0
    %1904 = vmatpush2.bf16.msra.mxu0 0
    %1905 = vmatprep.subr.bf16.mxu0 0
    %1906 = vmatpush2.bf16.msra.mxu0 0
    %1907 = vmatprep.subr.bf16.mxu0 0
    %1908 = vmatpush2.bf16.msra.mxu0 0
    %1909 = vmatprep.subr.bf16.mxu0 0
    %1910 = vmatpush2.bf16.msra.mxu0 0
    %1911 = vmatprep.subr.bf16.mxu0 0
    %1912 = vmatpush2.bf16.msra.mxu0 0
    %1913 = vmatprep.subr.bf16.mxu0 0
    %1914 = vmatpush2.bf16.msra.mxu0 0
    %1915 = vmatprep.subr.bf16.mxu0 0
    %1916 = vmatpush2.bf16.msra.mxu0 0
    %1917 = vmatprep.mubr.bf16.mxu0 0
    %1918 = vmatmul.mubr.bf16.gmra.mxu0 %v1883
    %v1919 = vpop.f32.mrf.mxu0
    %v1920 = vadd.f32 %v1868, %v1919
    %v1921 = vpop.f32.mrf.mxu0
    %v1922 = vpop.f32.mrf.mxu0
    %v1923 = vpop.f32.mrf.mxu0
    %1924 = vdwg.mxu0
    %v1925 = vmax.f32 %v1920, 0.0
    %v1926 = vpack.c.bf16 %v1925, %v1925
    %v1927 = vld [vmem:[%s15] sm:$0xf]
    %v1928 = vld [vmem:[%s15 + $0x4] sm:$0xf]
    %v1929 = vld [vmem:[%s15 + $0x8] sm:$0xf]
    %v1930 = vld [vmem:[%s15 + $0xc] sm:$0xf]
    %v1931 = vld [vmem:[%s15 + $0x10] sm:$0xf]
    %v1932 = vld [vmem:[%s15 + $0x14] sm:$0xf]
    %v1933 = vld [vmem:[%s15 + $0x18] sm:$0xf]
    %v1934 = vld [vmem:[%s15 + $0x1c] sm:$0xf]
    %v1935 = vlaneseq
    %v1936 = vshrl.u32 %v1935, 7
    %v1937 = vsub.s32 0, %v1936
    %v1938 = vrot.slane %v1859, %v1937
    %v1947 = vunpack.c.l.b16 %v1927
    %v1948 = vunpack.c.l.b16 %v1928
    %v1949 = vunpack.c.l.b16 %v1929
    %v1950 = vunpack.c.l.b16 %v1930
    %v1951 = vunpack.c.l.b16 %v1931
    %v1952 = vunpack.c.l.b16 %v1932
    %v1953 = vunpack.c.l.b16 %v1933
    %v1954 = vunpack.c.l.b16 %v1934
    %v1955 = vpack.c.b16 %v1948, %v1947
    %v1956 = vpack.c.b16 %v1950, %v1949
    %v1957 = vpack.c.b16 %v1952, %v1951
    %v1958 = vpack.c.b16 %v1954, %v1953
    %vm1963 = vcmask 523264
    %v1965 = vsel %vm1963, %v1926, 0
    %1967 = vmatprep.subr.bf16.mxu0 0
    %1968 = vmatpush1.bf16.msra.mxu0 0
    %1969 = vmatprep.subr.bf16.mxu0 0
    %1970 = vmatpush1.bf16.msra.mxu0 0
    %1971 = vmatprep.subr.bf16.mxu0 0
    %1972 = vmatpush1.bf16.msra.mxu0 0
    %1973 = vmatprep.subr.bf16.mxu0 0
    %1974 = vmatpush1.bf16.msra.mxu0 0
    %1975 = vmatprep.subr.bf16.mxu0 0
    %1976 = vmatpush1.bf16.msra.mxu0 %v1958
    %1977 = vmatprep.subr.bf16.mxu0 0
    %1978 = vmatpush1.bf16.msra.mxu0 %v1957
    %1979 = vmatprep.subr.bf16.mxu0 0
    %1980 = vmatpush1.bf16.msra.mxu0 %v1956
    %1981 = vmatprep.subr.bf16.mxu0 0
    %1982 = vmatpush1.bf16.msra.mxu0 %v1955
    %1983 = vmatprep.subr.bf16.mxu0 0
    %1984 = vmatpush2.bf16.msra.mxu0 0
    %1985 = vmatprep.subr.bf16.mxu0 0
    %1986 = vmatpush2.bf16.msra.mxu0 0
    %1987 = vmatprep.subr.bf16.mxu0 0
    %1988 = vmatpush2.bf16.msra.mxu0 0
    %1989 = vmatprep.subr.bf16.mxu0 0
    %1990 = vmatpush2.bf16.msra.mxu0 0
    %1991 = vmatprep.subr.bf16.mxu0 0
    %1992 = vmatpush2.bf16.msra.mxu0 0
    %1993 = vmatprep.subr.bf16.mxu0 0
    %1994 = vmatpush2.bf16.msra.mxu0 0
    %1995 = vmatprep.subr.bf16.mxu0 0
    %1996 = vmatpush2.bf16.msra.mxu0 0
    %1997 = vmatprep.subr.bf16.mxu0 0
    %1998 = vmatpush2.bf16.msra.mxu0 0
    %1999 = vmatprep.mubr.bf16.mxu0 0
    %2000 = vmatmul.mubr.bf16.gmra.mxu0 %v1965
    %v2001 = vpop.f32.mrf.mxu0
    %v2002 = vadd.f32 %v1938, %v2001
    %v2003 = vpop.f32.mrf.mxu0
    %v2004 = vpop.f32.mrf.mxu0
    %v2005 = vpop.f32.mrf.mxu0
    %2006 = vdwg.mxu0
    %v2007 = vadd.f32 %v1825, %v2002
    %2008 = vst.msk [vmem:[#allocation2] sm:$0xff] %vm67, %v2007
    %s2009 = scalar_lea.vmem %s0, 8
    %v2010 = vld [vmem:[%s2009] sm:$0xff]
    %s2011 = scalar_lea.vmem %s1, 8
    %v2012 = vld [vmem:[%s2011] sm:$0xff]
    %v2013 = vpack.c.bf16 %v2012, %v2012
    %s2014 = scalar_lea.vmem %s2, 2
    %v2015 = vld [vmem:[%s2014] sm:$0x3]
    %vm2016 = vnez %v2015
    %s2017 = scalar_lea.vmem %s3, 1
    %v2018 = vld [vmem:[%s2017] sm:$0x1]
    %vm2019 = vnez %v2018
    %v2020 = vld [vmem:[%s4] sm:$0x1]
    %v2021 = vld [vmem:[%s4 + $0x1] sm:$0x1]
    %v2022 = vsel %vm67, %v2010, 0.0
    %2023 = vadd.xlane.f32.xlu0 %v2022
    %v2024 = vpop.xlane.xlu0 %2023
    %v2025 = vmul.f32 %v2024, %v71
    %v2026 = vsub.f32 %v2010, %v2025
    %v2027 = vmul.f32 %v2026, %v2026
    %v2028 = vsel %vm67, %v2027, 0.0
    %2029 = vadd.xlane.f32.xlu0 %v2028
    %v2030 = vpop.xlane.xlu0 %2029
    %v2031 = vmul.f32 %v2030, 0.032258064
    %v2032 = vrsqrt.pop %v2031
    %v2033 = vmul.f32 %v2031, %v2032
    %vm2034 = vcmp.eq.f32.partialorder %v2031, inf
    %v2035 = vsel %vm2034, %v2031, %v2033
    %vm2036 = vcmp.eq.f32.partialorder %v2031, 0.0
    %v2037 = vand.u32 %v2031, 2147483648
    %v2038 = vsel %vm2036, %v2037, %v2035
    %v2039 = vadd.f32 %v2038, 1e-06
    %v2040 = vrcp.pop %v2039
    %v2041 = vmul.f32 %v2026, %v2040
    %v2042 = vlaneseq
    %v2043 = vshrl.u32 %v2042, 7
    %v2044 = vsub.s32 0, %v2043
    %v2045 = vrot.slane %v2020, %v2044
    %v2046 = vmul.f32 %v2045, %v2041
    %v2047 = vlaneseq
    %v2048 = vshrl.u32 %v2047, 7
    %v2049 = vsub.s32 0, %v2048
    %v2050 = vrot.slane %v2021, %v2049
    %v2051 = vadd.f32 %v2046, %v2050
    %v2052 = vpack.c.bf16 %v2051, %v2051
    %v2053 = vld [vmem:[%s4 + $0x6] sm:$0x1]
    %v2054 = vld [vmem:[%s4 + $0x7] sm:$0x1]
    %v2055 = vld [vmem:[%s4 + $0x8] sm:$0x1]
    %v2056 = vld [vmem:[%s4 + $0x9] sm:$0x1]
    %v2057 = vld [vmem:[%s6] sm:$0xf]
    %v2058 = vld [vmem:[%s6 + $0x4] sm:$0xf]
    %v2059 = vld [vmem:[%s6 + $0x8] sm:$0xf]
    %v2060 = vld [vmem:[%s6 + $0xc] sm:$0xf]
    %v2061 = vlaneseq
    %v2062 = vshrl.u32 %v2061, 7
    %v2063 = vsub.s32 0, %v2062
    %v2064 = vrot.slane %v2053, %v2063
    %v2069 = vunpack.c.l.b16 %v2057
    %v2070 = vunpack.c.l.b16 %v2058
    %v2071 = vunpack.c.l.b16 %v2059
    %v2072 = vunpack.c.l.b16 %v2060
    %v2073 = vpack.c.b16 %v2070, %v2069
    %v2074 = vpack.c.b16 %v2072, %v2071
    %v2078 = vsel %vm67, %v2052, 0
    %2080 = vmatprep.subr.bf16.mxu0 0
    %2081 = vmatpush1.bf16.msra.mxu0 0
    %2082 = vmatprep.subr.bf16.mxu0 0
    %2083 = vmatpush1.bf16.msra.mxu0 0
    %2084 = vmatprep.subr.bf16.mxu0 0
    %2085 = vmatpush1.bf16.msra.mxu0 0
    %2086 = vmatprep.subr.bf16.mxu0 0
    %2087 = vmatpush1.bf16.msra.mxu0 0
    %2088 = vmatprep.subr.bf16.mxu0 0
    %2089 = vmatpush1.bf16.msra.mxu0 0
    %2090 = vmatprep.subr.bf16.mxu0 0
    %2091 = vmatpush1.bf16.msra.mxu0 0
    %2092 = vmatprep.subr.bf16.mxu0 0
    %2093 = vmatpush1.bf16.msra.mxu0 %v2074
    %2094 = vmatprep.subr.bf16.mxu0 0
    %2095 = vmatpush1.bf16.msra.mxu0 %v2073
    %2096 = vmatprep.subr.bf16.mxu0 0
    %2097 = vmatpush2.bf16.msra.mxu0 0
    %2098 = vmatprep.subr.bf16.mxu0 0
    %2099 = vmatpush2.bf16.msra.mxu0 0
    %2100 = vmatprep.subr.bf16.mxu0 0
    %2101 = vmatpush2.bf16.msra.mxu0 0
    %2102 = vmatprep.subr.bf16.mxu0 0
    %2103 = vmatpush2.bf16.msra.mxu0 0
    %2104 = vmatprep.subr.bf16.mxu0 0
    %2105 = vmatpush2.bf16.msra.mxu0 0
    %2106 = vmatprep.subr.bf16.mxu0 0
    %2107 = vmatpush2.bf16.msra.mxu0 0
    %2108 = vmatprep.subr.bf16.mxu0 0
    %2109 = vmatpush2.bf16.msra.mxu0 0
    %2110 = vmatprep.subr.bf16.mxu0 0
    %2111 = vmatpush2.bf16.msra.mxu0 0
    %2112 = vmatprep.mubr.bf16.mxu0 0
    %2113 = vmatmul.mubr.bf16.gmra.mxu0 %v2078
    %v2114 = vpop.f32.mrf.mxu0
    %v2115 = vadd.f32 %v2064, %v2114
    %v2116 = vpop.f32.mrf.mxu0
    %v2117 = vpop.f32.mrf.mxu0
    %v2118 = vpop.f32.mrf.mxu0
    %2119 = vdwg.mxu0
    %v2120 = vld [vmem:[%s7] sm:$0xf]
    %v2121 = vld [vmem:[%s7 + $0x4] sm:$0xf]
    %v2122 = vld [vmem:[%s7 + $0x8] sm:$0xf]
    %v2123 = vld [vmem:[%s7 + $0xc] sm:$0xf]
    %v2124 = vlaneseq
    %v2125 = vshrl.u32 %v2124, 7
    %v2126 = vsub.s32 0, %v2125
    %v2127 = vrot.slane %v2054, %v2126
    %v2132 = vunpack.c.l.b16 %v2120
    %v2133 = vunpack.c.l.b16 %v2121
    %v2134 = vunpack.c.l.b16 %v2122
    %v2135 = vunpack.c.l.b16 %v2123
    %v2136 = vpack.c.b16 %v2133, %v2132
    %v2137 = vpack.c.b16 %v2135, %v2134
    %2140 = vmatprep.subr.bf16.mxu0 0
    %2141 = vmatpush1.bf16.msra.mxu0 0
    %2142 = vmatprep.subr.bf16.mxu0 0
    %2143 = vmatpush1.bf16.msra.mxu0 0
    %2144 = vmatprep.subr.bf16.mxu0 0
    %2145 = vmatpush1.bf16.msra.mxu0 0
    %2146 = vmatprep.subr.bf16.mxu0 0
    %2147 = vmatpush1.bf16.msra.mxu0 0
    %2148 = vmatprep.subr.bf16.mxu0 0
    %2149 = vmatpush1.bf16.msra.mxu0 0
    %2150 = vmatprep.subr.bf16.mxu0 0
    %2151 = vmatpush1.bf16.msra.mxu0 0
    %2152 = vmatprep.subr.bf16.mxu0 0
    %2153 = vmatpush1.bf16.msra.mxu0 %v2137
    %2154 = vmatprep.subr.bf16.mxu0 0
    %2155 = vmatpush1.bf16.msra.mxu0 %v2136
    %2156 = vmatprep.subr.bf16.mxu0 0
    %2157 = vmatpush2.bf16.msra.mxu0 0
    %2158 = vmatprep.subr.bf16.mxu0 0
    %2159 = vmatpush2.bf16.msra.mxu0 0
    %2160 = vmatprep.subr.bf16.mxu0 0
    %2161 = vmatpush2.bf16.msra.mxu0 0
    %2162 = vmatprep.subr.bf16.mxu0 0
    %2163 = vmatpush2.bf16.msra.mxu0 0
    %2164 = vmatprep.subr.bf16.mxu0 0
    %2165 = vmatpush2.bf16.msra.mxu0 0
    %2166 = vmatprep.subr.bf16.mxu0 0
    %2167 = vmatpush2.bf16.msra.mxu0 0
    %2168 = vmatprep.subr.bf16.mxu0 0
    %2169 = vmatpush2.bf16.msra.mxu0 0
    %2170 = vmatprep.subr.bf16.mxu0 0
    %2171 = vmatpush2.bf16.msra.mxu0 0
    %2172 = vmatprep.mubr.bf16.mxu0 0
    %2173 = vmatmul.mubr.bf16.gmra.mxu0 %v2078
    %v2174 = vpop.f32.mrf.mxu0
    %v2175 = vadd.f32 %v2127, %v2174
    %v2176 = vpop.f32.mrf.mxu0
    %v2177 = vpop.f32.mrf.mxu0
    %v2178 = vpop.f32.mrf.mxu0
    %2179 = vdwg.mxu0
    %v2180 = vld [vmem:[%s8] sm:$0xf]
    %v2181 = vld [vmem:[%s8 + $0x4] sm:$0xf]
    %v2182 = vld [vmem:[%s8 + $0x8] sm:$0xf]
    %v2183 = vld [vmem:[%s8 + $0xc] sm:$0xf]
    %v2184 = vlaneseq
    %v2185 = vshrl.u32 %v2184, 7
    %v2186 = vsub.s32 0, %v2185
    %v2187 = vrot.slane %v2055, %v2186
    %v2192 = vunpack.c.l.b16 %v2180
    %v2193 = vunpack.c.l.b16 %v2181
    %v2194 = vunpack.c.l.b16 %v2182
    %v2195 = vunpack.c.l.b16 %v2183
    %v2196 = vpack.c.b16 %v2193, %v2192
    %v2197 = vpack.c.b16 %v2195, %v2194
    %2200 = vmatprep.subr.bf16.mxu0 0
    %2201 = vmatpush1.bf16.msra.mxu0 0
    %2202 = vmatprep.subr.bf16.mxu0 0
    %2203 = vmatpush1.bf16.msra.mxu0 0
    %2204 = vmatprep.subr.bf16.mxu0 0
    %2205 = vmatpush1.bf16.msra.mxu0 0
    %2206 = vmatprep.subr.bf16.mxu0 0
    %2207 = vmatpush1.bf16.msra.mxu0 0
    %2208 = vmatprep.subr.bf16.mxu0 0
    %2209 = vmatpush1.bf16.msra.mxu0 0
    %2210 = vmatprep.subr.bf16.mxu0 0
    %2211 = vmatpush1.bf16.msra.mxu0 0
    %2212 = vmatprep.subr.bf16.mxu0 0
    %2213 = vmatpush1.bf16.msra.mxu0 %v2197
    %2214 = vmatprep.subr.bf16.mxu0 0
    %2215 = vmatpush1.bf16.msra.mxu0 %v2196
    %2216 = vmatprep.subr.bf16.mxu0 0
    %2217 = vmatpush2.bf16.msra.mxu0 0
    %2218 = vmatprep.subr.bf16.mxu0 0
    %2219 = vmatpush2.bf16.msra.mxu0 0
    %2220 = vmatprep.subr.bf16.mxu0 0
    %2221 = vmatpush2.bf16.msra.mxu0 0
    %2222 = vmatprep.subr.bf16.mxu0 0
    %2223 = vmatpush2.bf16.msra.mxu0 0
    %2224 = vmatprep.subr.bf16.mxu0 0
    %2225 = vmatpush2.bf16.msra.mxu0 0
    %2226 = vmatprep.subr.bf16.mxu0 0
    %2227 = vmatpush2.bf16.msra.mxu0 0
    %2228 = vmatprep.subr.bf16.mxu0 0
    %2229 = vmatpush2.bf16.msra.mxu0 0
    %2230 = vmatprep.subr.bf16.mxu0 0
    %2231 = vmatpush2.bf16.msra.mxu0 0
    %2232 = vmatprep.mubr.bf16.mxu0 0
    %2233 = vmatmul.mubr.bf16.gmra.mxu0 %v2078
    %v2234 = vpop.f32.mrf.mxu0
    %v2235 = vadd.f32 %v2187, %v2234
    %v2236 = vpop.f32.mrf.mxu0
    %v2237 = vpop.f32.mrf.mxu0
    %v2238 = vpop.f32.mrf.mxu0
    %2239 = vdwg.mxu0
    %v2240 = vpack.c.bf16 %v2115, %v2115
    %v2241 = vpack.c.bf16 %v2175, %v2175
    %v2242 = vpack.c.bf16 %v2235, %v2235
    %v2244 = vsel %vm290, %v2240, 0
    %v2247 = vsel %vm290, %v2241, 0
    %2249 = vmatprep.subr.bf16.mxu0 0
    %2250 = vmatpush1.bf16.xpose.msra.mxu0 0
    %2251 = vmatprep.subr.bf16.mxu0 0
    %2252 = vmatpush1.bf16.xpose.msra.mxu0 0
    %2253 = vmatprep.subr.bf16.mxu0 0
    %2254 = vmatpush1.bf16.xpose.msra.mxu0 0
    %2255 = vmatprep.subr.bf16.mxu0 0
    %2256 = vmatpush1.bf16.xpose.msra.mxu0 0
    %2257 = vmatprep.subr.bf16.mxu0 0
    %2258 = vmatpush1.bf16.xpose.msra.mxu0 0
    %2259 = vmatprep.subr.bf16.mxu0 0
    %2260 = vmatpush1.bf16.xpose.msra.mxu0 0
    %2261 = vmatprep.subr.bf16.mxu0 0
    %2262 = vmatpush1.bf16.xpose.msra.mxu0 0
    %2263 = vmatprep.subr.bf16.mxu0 0
    %2264 = vmatpush1.bf16.xpose.msra.mxu0 %v2247
    %2265 = vmatprep.subr.bf16.mxu0 0
    %2266 = vmatpush2.bf16.xpose.msra.mxu0 0
    %2267 = vmatprep.subr.bf16.mxu0 0
    %2268 = vmatpush2.bf16.xpose.msra.mxu0 0
    %2269 = vmatprep.subr.bf16.mxu0 0
    %2270 = vmatpush2.bf16.xpose.msra.mxu0 0
    %2271 = vmatprep.subr.bf16.mxu0 0
    %2272 = vmatpush2.bf16.xpose.msra.mxu0 0
    %2273 = vmatprep.subr.bf16.mxu0 0
    %2274 = vmatpush2.bf16.xpose.msra.mxu0 0
    %2275 = vmatprep.subr.bf16.mxu0 0
    %2276 = vmatpush2.bf16.xpose.msra.mxu0 0
    %2277 = vmatprep.subr.bf16.mxu0 0
    %2278 = vmatpush2.bf16.xpose.msra.mxu0 0
    %2279 = vmatprep.subr.bf16.mxu0 0
    %2280 = vmatpush2.bf16.xpose.msra.mxu0 0
    %2281 = vmatprep.mubr.bf16.mxu0 0
    %2282 = vmatmul.mubr.bf16.gmra.mxu0 %v2244
    %v2283 = vpop.f32.mrf.mxu0
    %v2284 = vadd.f32 0.0, %v2283
    %v2285 = vpop.f32.mrf.mxu0
    %v2286 = vpop.f32.mrf.mxu0
    %v2287 = vpop.f32.mrf.mxu0
    %2288 = vdwg.mxu0
    %v2289 = vmul.f32 %v2284, 0.35355338
    %v2290 = vsel %vm2016, 16843009, 0
    %v2291 = vunpack.c.0.s8 %v2290
    %vm2292 = vcmp.ne.s32.totalorder %v2291, 0
    %v2293 = vsel %vm2292, %v2289, -1e+09
    %v2294 = vsel %vm290, %v2293, -inf
    %2295 = vmax.xlane.f32.xlu0 %v2294
    %v2296 = vpop.xlane.xlu0 %2295
    %v2297 = vsub.f32 %v2293, %v2296
    %v2298 = vmul.f32 %v2297, 1.442695
    %v2299 = vpow.pop %v2298
    %v2300 = vsel %vm290, %v2299, 0.0
    %2301 = vadd.xlane.f32.xlu0 %v2300
    %v2302 = vpop.xlane.xlu0 %2301
    %v2303 = vrcp.pop %v2302
    %v2304 = vmul.f32 %v2299, %v2303
    %v2305 = vpack.c.bf16 %v2304, %v2304
    %v2307 = vsel %vm290, %v2305, 0
    %v2310 = vsel %vm357, %v2242, 0
    %2312 = vmatprep.subr.bf16.mxu0 0
    %2313 = vmatpush1.bf16.msra.mxu0 0
    %2314 = vmatprep.subr.bf16.mxu0 0
    %2315 = vmatpush1.bf16.msra.mxu0 0
    %2316 = vmatprep.subr.bf16.mxu0 0
    %2317 = vmatpush1.bf16.msra.mxu0 0
    %2318 = vmatprep.subr.bf16.mxu0 0
    %2319 = vmatpush1.bf16.msra.mxu0 0
    %2320 = vmatprep.subr.bf16.mxu0 0
    %2321 = vmatpush1.bf16.msra.mxu0 0
    %2322 = vmatprep.subr.bf16.mxu0 0
    %2323 = vmatpush1.bf16.msra.mxu0 0
    %2324 = vmatprep.subr.bf16.mxu0 0
    %2325 = vmatpush1.bf16.msra.mxu0 0
    %2326 = vmatprep.subr.bf16.mxu0 0
    %2327 = vmatpush1.bf16.msra.mxu0 %v2310
    %2328 = vmatprep.subr.bf16.mxu0 0
    %2329 = vmatpush2.bf16.msra.mxu0 0
    %2330 = vmatprep.subr.bf16.mxu0 0
    %2331 = vmatpush2.bf16.msra.mxu0 0
    %2332 = vmatprep.subr.bf16.mxu0 0
    %2333 = vmatpush2.bf16.msra.mxu0 0
    %2334 = vmatprep.subr.bf16.mxu0 0
    %2335 = vmatpush2.bf16.msra.mxu0 0
    %2336 = vmatprep.subr.bf16.mxu0 0
    %2337 = vmatpush2.bf16.msra.mxu0 0
    %2338 = vmatprep.subr.bf16.mxu0 0
    %2339 = vmatpush2.bf16.msra.mxu0 0
    %2340 = vmatprep.subr.bf16.mxu0 0
    %2341 = vmatpush2.bf16.msra.mxu0 0
    %2342 = vmatprep.subr.bf16.mxu0 0
    %2343 = vmatpush2.bf16.msra.mxu0 0
    %2344 = vmatprep.mubr.bf16.mxu0 0
    %2345 = vmatmul.mubr.bf16.gmra.mxu0 %v2307
    %v2346 = vpop.f32.mrf.mxu0
    %v2347 = vadd.f32 0.0, %v2346
    %v2348 = vpop.f32.mrf.mxu0
    %v2349 = vpop.f32.mrf.mxu0
    %v2350 = vpop.f32.mrf.mxu0
    %2351 = vdwg.mxu0
    %v2352 = vpack.c.bf16 %v2347, %v2347
    %v2353 = vld [vmem:[%s9] sm:$0xf]
    %2355 = vrot.lane.b32.xlu0 %v2240, 120
    %v2356 = vpop.permute.xlu0 %2355
    %2358 = vrot.lane.b32.xlu0 %v2241, 120
    %v2359 = vpop.permute.xlu0 %2358
    %v2361 = vsel %vm290, %v2356, 0
    %v2364 = vsel %vm290, %v2359, 0
    %2366 = vmatprep.subr.bf16.mxu0 0
    %2367 = vmatpush1.bf16.xpose.msra.mxu0 0
    %2368 = vmatprep.subr.bf16.mxu0 0
    %2369 = vmatpush1.bf16.xpose.msra.mxu0 0
    %2370 = vmatprep.subr.bf16.mxu0 0
    %2371 = vmatpush1.bf16.xpose.msra.mxu0 0
    %2372 = vmatprep.subr.bf16.mxu0 0
    %2373 = vmatpush1.bf16.xpose.msra.mxu0 0
    %2374 = vmatprep.subr.bf16.mxu0 0
    %2375 = vmatpush1.bf16.xpose.msra.mxu0 0
    %2376 = vmatprep.subr.bf16.mxu0 0
    %2377 = vmatpush1.bf16.xpose.msra.mxu0 0
    %2378 = vmatprep.subr.bf16.mxu0 0
    %2379 = vmatpush1.bf16.xpose.msra.mxu0 0
    %2380 = vmatprep.subr.bf16.mxu0 0
    %2381 = vmatpush1.bf16.xpose.msra.mxu0 %v2364
    %2382 = vmatprep.subr.bf16.mxu0 0
    %2383 = vmatpush2.bf16.xpose.msra.mxu0 0
    %2384 = vmatprep.subr.bf16.mxu0 0
    %2385 = vmatpush2.bf16.xpose.msra.mxu0 0
    %2386 = vmatprep.subr.bf16.mxu0 0
    %2387 = vmatpush2.bf16.xpose.msra.mxu0 0
    %2388 = vmatprep.subr.bf16.mxu0 0
    %2389 = vmatpush2.bf16.xpose.msra.mxu0 0
    %2390 = vmatprep.subr.bf16.mxu0 0
    %2391 = vmatpush2.bf16.xpose.msra.mxu0 0
    %2392 = vmatprep.subr.bf16.mxu0 0
    %2393 = vmatpush2.bf16.xpose.msra.mxu0 0
    %2394 = vmatprep.subr.bf16.mxu0 0
    %2395 = vmatpush2.bf16.xpose.msra.mxu0 0
    %2396 = vmatprep.subr.bf16.mxu0 0
    %2397 = vmatpush2.bf16.xpose.msra.mxu0 0
    %2398 = vmatprep.mubr.bf16.mxu0 0
    %2399 = vmatmul.mubr.bf16.gmra.mxu0 %v2361
    %v2400 = vpop.f32.mrf.mxu0
    %v2401 = vadd.f32 0.0, %v2400
    %v2402 = vpop.f32.mrf.mxu0
    %v2403 = vpop.f32.mrf.mxu0
    %v2404 = vpop.f32.mrf.mxu0
    %2405 = vdwg.mxu0
    %v2406 = vmul.f32 %v2401, 0.35355338
    %v2407 = vsel %vm2292, %v2406, -1e+09
    %v2408 = vsel %vm290, %v2407, -inf
    %2409 = vmax.xlane.f32.xlu0 %v2408
    %v2410 = vpop.xlane.xlu0 %2409
    %v2411 = vsub.f32 %v2407, %v2410
    %v2412 = vmul.f32 %v2411, 1.442695
    %v2413 = vpow.pop %v2412
    %v2414 = vsel %vm290, %v2413, 0.0
    %2415 = vadd.xlane.f32.xlu0 %v2414
    %v2416 = vpop.xlane.xlu0 %2415
    %v2417 = vrcp.pop %v2416
    %v2418 = vmul.f32 %v2413, %v2417
    %v2419 = vpack.c.bf16 %v2418, %v2418
    %2421 = vrot.lane.b32.xlu0 %v2242, 120
    %v2422 = vpop.permute.xlu0 %2421
    %v2424 = vsel %vm290, %v2419, 0
    %v2427 = vsel %vm357, %v2422, 0
    %2429 = vmatprep.subr.bf16.mxu0 0
    %2430 = vmatpush1.bf16.msra.mxu0 0
    %2431 = vmatprep.subr.bf16.mxu0 0
    %2432 = vmatpush1.bf16.msra.mxu0 0
    %2433 = vmatprep.subr.bf16.mxu0 0
    %2434 = vmatpush1.bf16.msra.mxu0 0
    %2435 = vmatprep.subr.bf16.mxu0 0
    %2436 = vmatpush1.bf16.msra.mxu0 0
    %2437 = vmatprep.subr.bf16.mxu0 0
    %2438 = vmatpush1.bf16.msra.mxu0 0
    %2439 = vmatprep.subr.bf16.mxu0 0
    %2440 = vmatpush1.bf16.msra.mxu0 0
    %2441 = vmatprep.subr.bf16.mxu0 0
    %2442 = vmatpush1.bf16.msra.mxu0 0
    %2443 = vmatprep.subr.bf16.mxu0 0
    %2444 = vmatpush1.bf16.msra.mxu0 %v2427
    %2445 = vmatprep.subr.bf16.mxu0 0
    %2446 = vmatpush2.bf16.msra.mxu0 0
    %2447 = vmatprep.subr.bf16.mxu0 0
    %2448 = vmatpush2.bf16.msra.mxu0 0
    %2449 = vmatprep.subr.bf16.mxu0 0
    %2450 = vmatpush2.bf16.msra.mxu0 0
    %2451 = vmatprep.subr.bf16.mxu0 0
    %2452 = vmatpush2.bf16.msra.mxu0 0
    %2453 = vmatprep.subr.bf16.mxu0 0
    %2454 = vmatpush2.bf16.msra.mxu0 0
    %2455 = vmatprep.subr.bf16.mxu0 0
    %2456 = vmatpush2.bf16.msra.mxu0 0
    %2457 = vmatprep.subr.bf16.mxu0 0
    %2458 = vmatpush2.bf16.msra.mxu0 0
    %2459 = vmatprep.subr.bf16.mxu0 0
    %2460 = vmatpush2.bf16.msra.mxu0 0
    %2461 = vmatprep.mubr.bf16.mxu0 0
    %2462 = vmatmul.mubr.bf16.gmra.mxu0 %v2424
    %v2463 = vpop.f32.mrf.mxu0
    %v2464 = vadd.f32 0.0, %v2463
    %v2465 = vpop.f32.mrf.mxu0
    %v2466 = vpop.f32.mrf.mxu0
    %v2467 = vpop.f32.mrf.mxu0
    %2468 = vdwg.mxu0
    %v2469 = vpack.c.bf16 %v2464, %v2464
    %v2470 = vld [vmem:[%s519] sm:$0xf]
    %v2472 = vsel %vm290, %v2469, 0
    %v2475 = vsel %vm357, %v2470, 0
    %2477 = vmatprep.subr.bf16.mxu0 0
    %2478 = vmatpush1.bf16.msra.mxu0 0
    %2479 = vmatprep.subr.bf16.mxu0 0
    %2480 = vmatpush1.bf16.msra.mxu0 0
    %2481 = vmatprep.subr.bf16.mxu0 0
    %2482 = vmatpush1.bf16.msra.mxu0 0
    %2483 = vmatprep.subr.bf16.mxu0 0
    %2484 = vmatpush1.bf16.msra.mxu0 0
    %2485 = vmatprep.subr.bf16.mxu0 0
    %2486 = vmatpush1.bf16.msra.mxu0 0
    %2487 = vmatprep.subr.bf16.mxu0 0
    %2488 = vmatpush1.bf16.msra.mxu0 0
    %2489 = vmatprep.subr.bf16.mxu0 0
    %2490 = vmatpush1.bf16.msra.mxu0 0
    %2491 = vmatprep.subr.bf16.mxu0 0
    %2492 = vmatpush1.bf16.msra.mxu0 %v2475
    %2493 = vmatprep.subr.bf16.mxu0 0
    %2494 = vmatpush2.bf16.msra.mxu0 0
    %2495 = vmatprep.subr.bf16.mxu0 0
    %2496 = vmatpush2.bf16.msra.mxu0 0
    %2497 = vmatprep.subr.bf16.mxu0 0
    %2498 = vmatpush2.bf16.msra.mxu0 0
    %2499 = vmatprep.subr.bf16.mxu0 0
    %2500 = vmatpush2.bf16.msra.mxu0 0
    %2501 = vmatprep.subr.bf16.mxu0 0
    %2502 = vmatpush2.bf16.msra.mxu0 0
    %2503 = vmatprep.subr.bf16.mxu0 0
    %2504 = vmatpush2.bf16.msra.mxu0 0
    %2505 = vmatprep.subr.bf16.mxu0 0
    %2506 = vmatpush2.bf16.msra.mxu0 0
    %2507 = vmatprep.subr.bf16.mxu0 0
    %2508 = vmatpush2.bf16.msra.mxu0 0
    %2509 = vmatprep.mubr.bf16.mxu0 0
    %2510 = vmatmul.mubr.bf16.gmra.mxu0 %v2472
    %v2511 = vpop.f32.mrf.mxu0
    %v2512 = vadd.f32 0.0, %v2511
    %v2513 = vpop.f32.mrf.mxu0
    %v2514 = vpop.f32.mrf.mxu0
    %v2515 = vpop.f32.mrf.mxu0
    %2516 = vdwg.mxu0
    %v2518 = vsel %vm290, %v2352, 0
    %v2521 = vsel %vm357, %v2353, 0
    %2523 = vmatprep.subr.bf16.mxu0 0
    %2524 = vmatpush1.bf16.msra.mxu0 0
    %2525 = vmatprep.subr.bf16.mxu0 0
    %2526 = vmatpush1.bf16.msra.mxu0 0
    %2527 = vmatprep.subr.bf16.mxu0 0
    %2528 = vmatpush1.bf16.msra.mxu0 0
    %2529 = vmatprep.subr.bf16.mxu0 0
    %2530 = vmatpush1.bf16.msra.mxu0 0
    %2531 = vmatprep.subr.bf16.mxu0 0
    %2532 = vmatpush1.bf16.msra.mxu0 0
    %2533 = vmatprep.subr.bf16.mxu0 0
    %2534 = vmatpush1.bf16.msra.mxu0 0
    %2535 = vmatprep.subr.bf16.mxu0 0
    %2536 = vmatpush1.bf16.msra.mxu0 0
    %2537 = vmatprep.subr.bf16.mxu0 0
    %2538 = vmatpush1.bf16.msra.mxu0 %v2521
    %2539 = vmatprep.subr.bf16.mxu0 0
    %2540 = vmatpush2.bf16.msra.mxu0 0
    %2541 = vmatprep.subr.bf16.mxu0 0
    %2542 = vmatpush2.bf16.msra.mxu0 0
    %2543 = vmatprep.subr.bf16.mxu0 0
    %2544 = vmatpush2.bf16.msra.mxu0 0
    %2545 = vmatprep.subr.bf16.mxu0 0
    %2546 = vmatpush2.bf16.msra.mxu0 0
    %2547 = vmatprep.subr.bf16.mxu0 0
    %2548 = vmatpush2.bf16.msra.mxu0 0
    %2549 = vmatprep.subr.bf16.mxu0 0
    %2550 = vmatpush2.bf16.msra.mxu0 0
    %2551 = vmatprep.subr.bf16.mxu0 0
    %2552 = vmatpush2.bf16.msra.mxu0 0
    %2553 = vmatprep.subr.bf16.mxu0 0
    %2554 = vmatpush2.bf16.msra.mxu0 0
    %2555 = vmatprep.mubr.bf16.mxu0 0
    %2556 = vmatmul.mubr.bf16.gmra.mxu0 %v2518
    %v2557 = vpop.f32.mrf.mxu0
    %v2558 = vadd.f32 %v2512, %v2557
    %v2559 = vpop.f32.mrf.mxu0
    %v2560 = vpop.f32.mrf.mxu0
    %v2561 = vpop.f32.mrf.mxu0
    %2562 = vdwg.mxu0
    %2563 = vrot.lane.b32.xlu0 %v2240, 112
    %v2564 = vpop.permute.xlu0 %2563
    %2565 = vrot.lane.b32.xlu0 %v2241, 112
    %v2566 = vpop.permute.xlu0 %2565
    %v2568 = vsel %vm290, %v2564, 0
    %v2571 = vsel %vm290, %v2566, 0
    %2573 = vmatprep.subr.bf16.mxu0 0
    %2574 = vmatpush1.bf16.xpose.msra.mxu0 0
    %2575 = vmatprep.subr.bf16.mxu0 0
    %2576 = vmatpush1.bf16.xpose.msra.mxu0 0
    %2577 = vmatprep.subr.bf16.mxu0 0
    %2578 = vmatpush1.bf16.xpose.msra.mxu0 0
    %2579 = vmatprep.subr.bf16.mxu0 0
    %2580 = vmatpush1.bf16.xpose.msra.mxu0 0
    %2581 = vmatprep.subr.bf16.mxu0 0
    %2582 = vmatpush1.bf16.xpose.msra.mxu0 0
    %2583 = vmatprep.subr.bf16.mxu0 0
    %2584 = vmatpush1.bf16.xpose.msra.mxu0 0
    %2585 = vmatprep.subr.bf16.mxu0 0
    %2586 = vmatpush1.bf16.xpose.msra.mxu0 0
    %2587 = vmatprep.subr.bf16.mxu0 0
    %2588 = vmatpush1.bf16.xpose.msra.mxu0 %v2571
    %2589 = vmatprep.subr.bf16.mxu0 0
    %2590 = vmatpush2.bf16.xpose.msra.mxu0 0
    %2591 = vmatprep.subr.bf16.mxu0 0
    %2592 = vmatpush2.bf16.xpose.msra.mxu0 0
    %2593 = vmatprep.subr.bf16.mxu0 0
    %2594 = vmatpush2.bf16.xpose.msra.mxu0 0
    %2595 = vmatprep.subr.bf16.mxu0 0
    %2596 = vmatpush2.bf16.xpose.msra.mxu0 0
    %2597 = vmatprep.subr.bf16.mxu0 0
    %2598 = vmatpush2.bf16.xpose.msra.mxu0 0
    %2599 = vmatprep.subr.bf16.mxu0 0
    %2600 = vmatpush2.bf16.xpose.msra.mxu0 0
    %2601 = vmatprep.subr.bf16.mxu0 0
    %2602 = vmatpush2.bf16.xpose.msra.mxu0 0
    %2603 = vmatprep.subr.bf16.mxu0 0
    %2604 = vmatpush2.bf16.xpose.msra.mxu0 0
    %2605 = vmatprep.mubr.bf16.mxu0 0
    %2606 = vmatmul.mubr.bf16.gmra.mxu0 %v2568
    %v2607 = vpop.f32.mrf.mxu0
    %v2608 = vadd.f32 0.0, %v2607
    %v2609 = vpop.f32.mrf.mxu0
    %v2610 = vpop.f32.mrf.mxu0
    %v2611 = vpop.f32.mrf.mxu0
    %2612 = vdwg.mxu0
    %v2613 = vmul.f32 %v2608, 0.35355338
    %v2614 = vsel %vm2292, %v2613, -1e+09
    %v2615 = vsel %vm290, %v2614, -inf
    %2616 = vmax.xlane.f32.xlu0 %v2615
    %v2617 = vpop.xlane.xlu0 %2616
    %v2618 = vsub.f32 %v2614, %v2617
    %v2619 = vmul.f32 %v2618, 1.442695
    %v2620 = vpow.pop %v2619
    %v2621 = vsel %vm290, %v2620, 0.0
    %2622 = vadd.xlane.f32.xlu0 %v2621
    %v2623 = vpop.xlane.xlu0 %2622
    %v2624 = vrcp.pop %v2623
    %v2625 = vmul.f32 %v2620, %v2624
    %v2626 = vpack.c.bf16 %v2625, %v2625
    %2627 = vrot.lane.b32.xlu0 %v2242, 112
    %v2628 = vpop.permute.xlu0 %2627
    %v2630 = vsel %vm290, %v2626, 0
    %v2633 = vsel %vm357, %v2628, 0
    %2635 = vmatprep.subr.bf16.mxu0 0
    %2636 = vmatpush1.bf16.msra.mxu0 0
    %2637 = vmatprep.subr.bf16.mxu0 0
    %2638 = vmatpush1.bf16.msra.mxu0 0
    %2639 = vmatprep.subr.bf16.mxu0 0
    %2640 = vmatpush1.bf16.msra.mxu0 0
    %2641 = vmatprep.subr.bf16.mxu0 0
    %2642 = vmatpush1.bf16.msra.mxu0 0
    %2643 = vmatprep.subr.bf16.mxu0 0
    %2644 = vmatpush1.bf16.msra.mxu0 0
    %2645 = vmatprep.subr.bf16.mxu0 0
    %2646 = vmatpush1.bf16.msra.mxu0 0
    %2647 = vmatprep.subr.bf16.mxu0 0
    %2648 = vmatpush1.bf16.msra.mxu0 0
    %2649 = vmatprep.subr.bf16.mxu0 0
    %2650 = vmatpush1.bf16.msra.mxu0 %v2633
    %2651 = vmatprep.subr.bf16.mxu0 0
    %2652 = vmatpush2.bf16.msra.mxu0 0
    %2653 = vmatprep.subr.bf16.mxu0 0
    %2654 = vmatpush2.bf16.msra.mxu0 0
    %2655 = vmatprep.subr.bf16.mxu0 0
    %2656 = vmatpush2.bf16.msra.mxu0 0
    %2657 = vmatprep.subr.bf16.mxu0 0
    %2658 = vmatpush2.bf16.msra.mxu0 0
    %2659 = vmatprep.subr.bf16.mxu0 0
    %2660 = vmatpush2.bf16.msra.mxu0 0
    %2661 = vmatprep.subr.bf16.mxu0 0
    %2662 = vmatpush2.bf16.msra.mxu0 0
    %2663 = vmatprep.subr.bf16.mxu0 0
    %2664 = vmatpush2.bf16.msra.mxu0 0
    %2665 = vmatprep.subr.bf16.mxu0 0
    %2666 = vmatpush2.bf16.msra.mxu0 0
    %2667 = vmatprep.mubr.bf16.mxu0 0
    %2668 = vmatmul.mubr.bf16.gmra.mxu0 %v2630
    %v2669 = vpop.f32.mrf.mxu0
    %v2670 = vadd.f32 0.0, %v2669
    %v2671 = vpop.f32.mrf.mxu0
    %v2672 = vpop.f32.mrf.mxu0
    %v2673 = vpop.f32.mrf.mxu0
    %2674 = vdwg.mxu0
    %v2675 = vpack.c.bf16 %v2670, %v2670
    %v2676 = vld [vmem:[%s726] sm:$0xf]
    %v2678 = vsel %vm290, %v2675, 0
    %v2681 = vsel %vm357, %v2676, 0
    %2683 = vmatprep.subr.bf16.mxu0 0
    %2684 = vmatpush1.bf16.msra.mxu0 0
    %2685 = vmatprep.subr.bf16.mxu0 0
    %2686 = vmatpush1.bf16.msra.mxu0 0
    %2687 = vmatprep.subr.bf16.mxu0 0
    %2688 = vmatpush1.bf16.msra.mxu0 0
    %2689 = vmatprep.subr.bf16.mxu0 0
    %2690 = vmatpush1.bf16.msra.mxu0 0
    %2691 = vmatprep.subr.bf16.mxu0 0
    %2692 = vmatpush1.bf16.msra.mxu0 0
    %2693 = vmatprep.subr.bf16.mxu0 0
    %2694 = vmatpush1.bf16.msra.mxu0 0
    %2695 = vmatprep.subr.bf16.mxu0 0
    %2696 = vmatpush1.bf16.msra.mxu0 0
    %2697 = vmatprep.subr.bf16.mxu0 0
    %2698 = vmatpush1.bf16.msra.mxu0 %v2681
    %2699 = vmatprep.subr.bf16.mxu0 0
    %2700 = vmatpush2.bf16.msra.mxu0 0
    %2701 = vmatprep.subr.bf16.mxu0 0
    %2702 = vmatpush2.bf16.msra.mxu0 0
    %2703 = vmatprep.subr.bf16.mxu0 0
    %2704 = vmatpush2.bf16.msra.mxu0 0
    %2705 = vmatprep.subr.bf16.mxu0 0
    %2706 = vmatpush2.bf16.msra.mxu0 0
    %2707 = vmatprep.subr.bf16.mxu0 0
    %2708 = vmatpush2.bf16.msra.mxu0 0
    %2709 = vmatprep.subr.bf16.mxu0 0
    %2710 = vmatpush2.bf16.msra.mxu0 0
    %2711 = vmatprep.subr.bf16.mxu0 0
    %2712 = vmatpush2.bf16.msra.mxu0 0
    %2713 = vmatprep.subr.bf16.mxu0 0
    %2714 = vmatpush2.bf16.msra.mxu0 0
    %2715 = vmatprep.mubr.bf16.mxu0 0
    %2716 = vmatmul.mubr.bf16.gmra.mxu0 %v2678
    %v2717 = vpop.f32.mrf.mxu0
    %v2718 = vadd.f32 0.0, %v2717
    %v2719 = vpop.f32.mrf.mxu0
    %v2720 = vpop.f32.mrf.mxu0
    %v2721 = vpop.f32.mrf.mxu0
    %2722 = vdwg.mxu0
    %v2723 = vadd.f32 %v2558, %v2718
    %2724 = vrot.lane.b32.xlu0 %v2240, 104
    %v2725 = vpop.permute.xlu0 %2724
    %2726 = vrot.lane.b32.xlu0 %v2241, 104
    %v2727 = vpop.permute.xlu0 %2726
    %v2729 = vsel %vm290, %v2725, 0
    %v2732 = vsel %vm290, %v2727, 0
    %2734 = vmatprep.subr.bf16.mxu0 0
    %2735 = vmatpush1.bf16.xpose.msra.mxu0 0
    %2736 = vmatprep.subr.bf16.mxu0 0
    %2737 = vmatpush1.bf16.xpose.msra.mxu0 0
    %2738 = vmatprep.subr.bf16.mxu0 0
    %2739 = vmatpush1.bf16.xpose.msra.mxu0 0
    %2740 = vmatprep.subr.bf16.mxu0 0
    %2741 = vmatpush1.bf16.xpose.msra.mxu0 0
    %2742 = vmatprep.subr.bf16.mxu0 0
    %2743 = vmatpush1.bf16.xpose.msra.mxu0 0
    %2744 = vmatprep.subr.bf16.mxu0 0
    %2745 = vmatpush1.bf16.xpose.msra.mxu0 0
    %2746 = vmatprep.subr.bf16.mxu0 0
    %2747 = vmatpush1.bf16.xpose.msra.mxu0 0
    %2748 = vmatprep.subr.bf16.mxu0 0
    %2749 = vmatpush1.bf16.xpose.msra.mxu0 %v2732
    %2750 = vmatprep.subr.bf16.mxu0 0
    %2751 = vmatpush2.bf16.xpose.msra.mxu0 0
    %2752 = vmatprep.subr.bf16.mxu0 0
    %2753 = vmatpush2.bf16.xpose.msra.mxu0 0
    %2754 = vmatprep.subr.bf16.mxu0 0
    %2755 = vmatpush2.bf16.xpose.msra.mxu0 0
    %2756 = vmatprep.subr.bf16.mxu0 0
    %2757 = vmatpush2.bf16.xpose.msra.mxu0 0
    %2758 = vmatprep.subr.bf16.mxu0 0
    %2759 = vmatpush2.bf16.xpose.msra.mxu0 0
    %2760 = vmatprep.subr.bf16.mxu0 0
    %2761 = vmatpush2.bf16.xpose.msra.mxu0 0
    %2762 = vmatprep.subr.bf16.mxu0 0
    %2763 = vmatpush2.bf16.xpose.msra.mxu0 0
    %2764 = vmatprep.subr.bf16.mxu0 0
    %2765 = vmatpush2.bf16.xpose.msra.mxu0 0
    %2766 = vmatprep.mubr.bf16.mxu0 0
    %2767 = vmatmul.mubr.bf16.gmra.mxu0 %v2729
    %v2768 = vpop.f32.mrf.mxu0
    %v2769 = vadd.f32 0.0, %v2768
    %v2770 = vpop.f32.mrf.mxu0
    %v2771 = vpop.f32.mrf.mxu0
    %v2772 = vpop.f32.mrf.mxu0
    %2773 = vdwg.mxu0
    %v2774 = vmul.f32 %v2769, 0.35355338
    %v2775 = vsel %vm2292, %v2774, -1e+09
    %v2776 = vsel %vm290, %v2775, -inf
    %2777 = vmax.xlane.f32.xlu0 %v2776
    %v2778 = vpop.xlane.xlu0 %2777
    %v2779 = vsub.f32 %v2775, %v2778
    %v2780 = vmul.f32 %v2779, 1.442695
    %v2781 = vpow.pop %v2780
    %v2782 = vsel %vm290, %v2781, 0.0
    %2783 = vadd.xlane.f32.xlu0 %v2782
    %v2784 = vpop.xlane.xlu0 %2783
    %v2785 = vrcp.pop %v2784
    %v2786 = vmul.f32 %v2781, %v2785
    %v2787 = vpack.c.bf16 %v2786, %v2786
    %2788 = vrot.lane.b32.xlu0 %v2242, 104
    %v2789 = vpop.permute.xlu0 %2788
    %v2791 = vsel %vm290, %v2787, 0
    %v2794 = vsel %vm357, %v2789, 0
    %2796 = vmatprep.subr.bf16.mxu0 0
    %2797 = vmatpush1.bf16.msra.mxu0 0
    %2798 = vmatprep.subr.bf16.mxu0 0
    %2799 = vmatpush1.bf16.msra.mxu0 0
    %2800 = vmatprep.subr.bf16.mxu0 0
    %2801 = vmatpush1.bf16.msra.mxu0 0
    %2802 = vmatprep.subr.bf16.mxu0 0
    %2803 = vmatpush1.bf16.msra.mxu0 0
    %2804 = vmatprep.subr.bf16.mxu0 0
    %2805 = vmatpush1.bf16.msra.mxu0 0
    %2806 = vmatprep.subr.bf16.mxu0 0
    %2807 = vmatpush1.bf16.msra.mxu0 0
    %2808 = vmatprep.subr.bf16.mxu0 0
    %2809 = vmatpush1.bf16.msra.mxu0 0
    %2810 = vmatprep.subr.bf16.mxu0 0
    %2811 = vmatpush1.bf16.msra.mxu0 %v2794
    %2812 = vmatprep.subr.bf16.mxu0 0
    %2813 = vmatpush2.bf16.msra.mxu0 0
    %2814 = vmatprep.subr.bf16.mxu0 0
    %2815 = vmatpush2.bf16.msra.mxu0 0
    %2816 = vmatprep.subr.bf16.mxu0 0
    %2817 = vmatpush2.bf16.msra.mxu0 0
    %2818 = vmatprep.subr.bf16.mxu0 0
    %2819 = vmatpush2.bf16.msra.mxu0 0
    %2820 = vmatprep.subr.bf16.mxu0 0
    %2821 = vmatpush2.bf16.msra.mxu0 0
    %2822 = vmatprep.subr.bf16.mxu0 0
    %2823 = vmatpush2.bf16.msra.mxu0 0
    %2824 = vmatprep.subr.bf16.mxu0 0
    %2825 = vmatpush2.bf16.msra.mxu0 0
    %2826 = vmatprep.subr.bf16.mxu0 0
    %2827 = vmatpush2.bf16.msra.mxu0 0
    %2828 = vmatprep.mubr.bf16.mxu0 0
    %2829 = vmatmul.mubr.bf16.gmra.mxu0 %v2791
    %v2830 = vpop.f32.mrf.mxu0
    %v2831 = vadd.f32 0.0, %v2830
    %v2832 = vpop.f32.mrf.mxu0
    %v2833 = vpop.f32.mrf.mxu0
    %v2834 = vpop.f32.mrf.mxu0
    %2835 = vdwg.mxu0
    %v2836 = vpack.c.bf16 %v2831, %v2831
    %v2837 = vld [vmem:[%s888] sm:$0xf]
    %v2839 = vsel %vm290, %v2836, 0
    %v2842 = vsel %vm357, %v2837, 0
    %2844 = vmatprep.subr.bf16.mxu0 0
    %2845 = vmatpush1.bf16.msra.mxu0 0
    %2846 = vmatprep.subr.bf16.mxu0 0
    %2847 = vmatpush1.bf16.msra.mxu0 0
    %2848 = vmatprep.subr.bf16.mxu0 0
    %2849 = vmatpush1.bf16.msra.mxu0 0
    %2850 = vmatprep.subr.bf16.mxu0 0
    %2851 = vmatpush1.bf16.msra.mxu0 0
    %2852 = vmatprep.subr.bf16.mxu0 0
    %2853 = vmatpush1.bf16.msra.mxu0 0
    %2854 = vmatprep.subr.bf16.mxu0 0
    %2855 = vmatpush1.bf16.msra.mxu0 0
    %2856 = vmatprep.subr.bf16.mxu0 0
    %2857 = vmatpush1.bf16.msra.mxu0 0
    %2858 = vmatprep.subr.bf16.mxu0 0
    %2859 = vmatpush1.bf16.msra.mxu0 %v2842
    %2860 = vmatprep.subr.bf16.mxu0 0
    %2861 = vmatpush2.bf16.msra.mxu0 0
    %2862 = vmatprep.subr.bf16.mxu0 0
    %2863 = vmatpush2.bf16.msra.mxu0 0
    %2864 = vmatprep.subr.bf16.mxu0 0
    %2865 = vmatpush2.bf16.msra.mxu0 0
    %2866 = vmatprep.subr.bf16.mxu0 0
    %2867 = vmatpush2.bf16.msra.mxu0 0
    %2868 = vmatprep.subr.bf16.mxu0 0
    %2869 = vmatpush2.bf16.msra.mxu0 0
    %2870 = vmatprep.subr.bf16.mxu0 0
    %2871 = vmatpush2.bf16.msra.mxu0 0
    %2872 = vmatprep.subr.bf16.mxu0 0
    %2873 = vmatpush2.bf16.msra.mxu0 0
    %2874 = vmatprep.subr.bf16.mxu0 0
    %2875 = vmatpush2.bf16.msra.mxu0 0
    %2876 = vmatprep.mubr.bf16.mxu0 0
    %2877 = vmatmul.mubr.bf16.gmra.mxu0 %v2839
    %v2878 = vpop.f32.mrf.mxu0
    %v2879 = vadd.f32 0.0, %v2878
    %v2880 = vpop.f32.mrf.mxu0
    %v2881 = vpop.f32.mrf.mxu0
    %v2882 = vpop.f32.mrf.mxu0
    %2883 = vdwg.mxu0
    %v2884 = vadd.f32 %v2723, %v2879
    %v2885 = vlaneseq
    %v2886 = vshrl.u32 %v2885, 7
    %v2887 = vsub.s32 0, %v2886
    %v2888 = vrot.slane %v2056, %v2887
    %v2889 = vadd.f32 %v2884, %v2888
    %v2890 = vadd.f32 %v2010, %v2889
    %v2891 = vld [vmem:[%s4 + $0x2] sm:$0x1]
    %v2892 = vld [vmem:[%s4 + $0x3] sm:$0x1]
    %v2893 = vsel %vm67, %v2890, 0.0
    %2894 = vadd.xlane.f32.xlu0 %v2893
    %v2895 = vpop.xlane.xlu0 %2894
    %v2896 = vmul.f32 %v2895, %v71
    %v2897 = vsub.f32 %v2890, %v2896
    %v2898 = vmul.f32 %v2897, %v2897
    %v2899 = vsel %vm67, %v2898, 0.0
    %2900 = vadd.xlane.f32.xlu0 %v2899
    %v2901 = vpop.xlane.xlu0 %2900
    %v2902 = vmul.f32 %v2901, 0.032258064
    %v2903 = vrsqrt.pop %v2902
    %v2904 = vmul.f32 %v2902, %v2903
    %vm2905 = vcmp.eq.f32.partialorder %v2902, inf
    %v2906 = vsel %vm2905, %v2902, %v2904
    %vm2907 = vcmp.eq.f32.partialorder %v2902, 0.0
    %v2908 = vand.u32 %v2902, 2147483648
    %v2909 = vsel %vm2907, %v2908, %v2906
    %v2910 = vadd.f32 %v2909, 1e-06
    %v2911 = vrcp.pop %v2910
    %v2912 = vmul.f32 %v2897, %v2911
    %v2913 = vlaneseq
    %v2914 = vshrl.u32 %v2913, 7
    %v2915 = vsub.s32 0, %v2914
    %v2916 = vrot.slane %v2891, %v2915
    %v2917 = vmul.f32 %v2916, %v2912
    %v2918 = vlaneseq
    %v2919 = vshrl.u32 %v2918, 7
    %v2920 = vsub.s32 0, %v2919
    %v2921 = vrot.slane %v2892, %v2920
    %v2922 = vadd.f32 %v2917, %v2921
    %v2923 = vpack.c.bf16 %v2922, %v2922
    %v2924 = vld [vmem:[%s4 + $0xa] sm:$0x1]
    %v2925 = vld [vmem:[%s4 + $0xb] sm:$0x1]
    %v2926 = vld [vmem:[%s4 + $0xc] sm:$0x1]
    %v2927 = vld [vmem:[%s4 + $0xd] sm:$0x1]
    %v2928 = vld [vmem:[%s10] sm:$0xf]
    %v2929 = vld [vmem:[%s10 + $0x4] sm:$0xf]
    %v2930 = vld [vmem:[%s10 + $0x8] sm:$0xf]
    %v2931 = vld [vmem:[%s10 + $0xc] sm:$0xf]
    %v2932 = vlaneseq
    %v2933 = vshrl.u32 %v2932, 7
    %v2934 = vsub.s32 0, %v2933
    %v2935 = vrot.slane %v2924, %v2934
    %v2940 = vunpack.c.l.b16 %v2928
    %v2941 = vunpack.c.l.b16 %v2929
    %v2942 = vunpack.c.l.b16 %v2930
    %v2943 = vunpack.c.l.b16 %v2931
    %v2944 = vpack.c.b16 %v2941, %v2940
    %v2945 = vpack.c.b16 %v2943, %v2942
    %v2949 = vsel %vm67, %v2923, 0
    %2951 = vmatprep.subr.bf16.mxu0 0
    %2952 = vmatpush1.bf16.msra.mxu0 0
    %2953 = vmatprep.subr.bf16.mxu0 0
    %2954 = vmatpush1.bf16.msra.mxu0 0
    %2955 = vmatprep.subr.bf16.mxu0 0
    %2956 = vmatpush1.bf16.msra.mxu0 0
    %2957 = vmatprep.subr.bf16.mxu0 0
    %2958 = vmatpush1.bf16.msra.mxu0 0
    %2959 = vmatprep.subr.bf16.mxu0 0
    %2960 = vmatpush1.bf16.msra.mxu0 0
    %2961 = vmatprep.subr.bf16.mxu0 0
    %2962 = vmatpush1.bf16.msra.mxu0 0
    %2963 = vmatprep.subr.bf16.mxu0 0
    %2964 = vmatpush1.bf16.msra.mxu0 %v2945
    %2965 = vmatprep.subr.bf16.mxu0 0
    %2966 = vmatpush1.bf16.msra.mxu0 %v2944
    %2967 = vmatprep.subr.bf16.mxu0 0
    %2968 = vmatpush2.bf16.msra.mxu0 0
    %2969 = vmatprep.subr.bf16.mxu0 0
    %2970 = vmatpush2.bf16.msra.mxu0 0
    %2971 = vmatprep.subr.bf16.mxu0 0
    %2972 = vmatpush2.bf16.msra.mxu0 0
    %2973 = vmatprep.subr.bf16.mxu0 0
    %2974 = vmatpush2.bf16.msra.mxu0 0
    %2975 = vmatprep.subr.bf16.mxu0 0
    %2976 = vmatpush2.bf16.msra.mxu0 0
    %2977 = vmatprep.subr.bf16.mxu0 0
    %2978 = vmatpush2.bf16.msra.mxu0 0
    %2979 = vmatprep.subr.bf16.mxu0 0
    %2980 = vmatpush2.bf16.msra.mxu0 0
    %2981 = vmatprep.subr.bf16.mxu0 0
    %2982 = vmatpush2.bf16.msra.mxu0 0
    %2983 = vmatprep.mubr.bf16.mxu0 0
    %2984 = vmatmul.mubr.bf16.gmra.mxu0 %v2949
    %v2985 = vpop.f32.mrf.mxu0
    %v2986 = vadd.f32 %v2935, %v2985
    %v2987 = vpop.f32.mrf.mxu0
    %v2988 = vpop.f32.mrf.mxu0
    %v2989 = vpop.f32.mrf.mxu0
    %2990 = vdwg.mxu0
    %v2991 = vld [vmem:[%s11] sm:$0xf]
    %v2992 = vld [vmem:[%s11 + $0x4] sm:$0xf]
    %v2993 = vld [vmem:[%s11 + $0x8] sm:$0xf]
    %v2994 = vld [vmem:[%s11 + $0xc] sm:$0xf]
    %v2995 = vlaneseq
    %v2996 = vshrl.u32 %v2995, 7
    %v2997 = vsub.s32 0, %v2996
    %v2998 = vrot.slane %v2925, %v2997
    %v3003 = vunpack.c.l.b16 %v2991
    %v3004 = vunpack.c.l.b16 %v2992
    %v3005 = vunpack.c.l.b16 %v2993
    %v3006 = vunpack.c.l.b16 %v2994
    %v3007 = vpack.c.b16 %v3004, %v3003
    %v3008 = vpack.c.b16 %v3006, %v3005
    %v3012 = vsel %vm67, %v2013, 0
    %3014 = vmatprep.subr.bf16.mxu0 0
    %3015 = vmatpush1.bf16.msra.mxu0 0
    %3016 = vmatprep.subr.bf16.mxu0 0
    %3017 = vmatpush1.bf16.msra.mxu0 0
    %3018 = vmatprep.subr.bf16.mxu0 0
    %3019 = vmatpush1.bf16.msra.mxu0 0
    %3020 = vmatprep.subr.bf16.mxu0 0
    %3021 = vmatpush1.bf16.msra.mxu0 0
    %3022 = vmatprep.subr.bf16.mxu0 0
    %3023 = vmatpush1.bf16.msra.mxu0 0
    %3024 = vmatprep.subr.bf16.mxu0 0
    %3025 = vmatpush1.bf16.msra.mxu0 0
    %3026 = vmatprep.subr.bf16.mxu0 0
    %3027 = vmatpush1.bf16.msra.mxu0 %v3008
    %3028 = vmatprep.subr.bf16.mxu0 0
    %3029 = vmatpush1.bf16.msra.mxu0 %v3007
    %3030 = vmatprep.subr.bf16.mxu0 0
    %3031 = vmatpush2.bf16.msra.mxu0 0
    %3032 = vmatprep.subr.bf16.mxu0 0
    %3033 = vmatpush2.bf16.msra.mxu0 0
    %3034 = vmatprep.subr.bf16.mxu0 0
    %3035 = vmatpush2.bf16.msra.mxu0 0
    %3036 = vmatprep.subr.bf16.mxu0 0
    %3037 = vmatpush2.bf16.msra.mxu0 0
    %3038 = vmatprep.subr.bf16.mxu0 0
    %3039 = vmatpush2.bf16.msra.mxu0 0
    %3040 = vmatprep.subr.bf16.mxu0 0
    %3041 = vmatpush2.bf16.msra.mxu0 0
    %3042 = vmatprep.subr.bf16.mxu0 0
    %3043 = vmatpush2.bf16.msra.mxu0 0
    %3044 = vmatprep.subr.bf16.mxu0 0
    %3045 = vmatpush2.bf16.msra.mxu0 0
    %3046 = vmatprep.mubr.bf16.mxu0 0
    %3047 = vmatmul.mubr.bf16.gmra.mxu0 %v3012
    %v3048 = vpop.f32.mrf.mxu0
    %v3049 = vadd.f32 %v2998, %v3048
    %v3050 = vpop.f32.mrf.mxu0
    %v3051 = vpop.f32.mrf.mxu0
    %v3052 = vpop.f32.mrf.mxu0
    %3053 = vdwg.mxu0
    %v3054 = vld [vmem:[%s12] sm:$0xf]
    %v3055 = vld [vmem:[%s12 + $0x4] sm:$0xf]
    %v3056 = vld [vmem:[%s12 + $0x8] sm:$0xf]
    %v3057 = vld [vmem:[%s12 + $0xc] sm:$0xf]
    %v3058 = vlaneseq
    %v3059 = vshrl.u32 %v3058, 7
    %v3060 = vsub.s32 0, %v3059
    %v3061 = vrot.slane %v2926, %v3060
    %v3066 = vunpack.c.l.b16 %v3054
    %v3067 = vunpack.c.l.b16 %v3055
    %v3068 = vunpack.c.l.b16 %v3056
    %v3069 = vunpack.c.l.b16 %v3057
    %v3070 = vpack.c.b16 %v3067, %v3066
    %v3071 = vpack.c.b16 %v3069, %v3068
    %3074 = vmatprep.subr.bf16.mxu0 0
    %3075 = vmatpush1.bf16.msra.mxu0 0
    %3076 = vmatprep.subr.bf16.mxu0 0
    %3077 = vmatpush1.bf16.msra.mxu0 0
    %3078 = vmatprep.subr.bf16.mxu0 0
    %3079 = vmatpush1.bf16.msra.mxu0 0
    %3080 = vmatprep.subr.bf16.mxu0 0
    %3081 = vmatpush1.bf16.msra.mxu0 0
    %3082 = vmatprep.subr.bf16.mxu0 0
    %3083 = vmatpush1.bf16.msra.mxu0 0
    %3084 = vmatprep.subr.bf16.mxu0 0
    %3085 = vmatpush1.bf16.msra.mxu0 0
    %3086 = vmatprep.subr.bf16.mxu0 0
    %3087 = vmatpush1.bf16.msra.mxu0 %v3071
    %3088 = vmatprep.subr.bf16.mxu0 0
    %3089 = vmatpush1.bf16.msra.mxu0 %v3070
    %3090 = vmatprep.subr.bf16.mxu0 0
    %3091 = vmatpush2.bf16.msra.mxu0 0
    %3092 = vmatprep.subr.bf16.mxu0 0
    %3093 = vmatpush2.bf16.msra.mxu0 0
    %3094 = vmatprep.subr.bf16.mxu0 0
    %3095 = vmatpush2.bf16.msra.mxu0 0
    %3096 = vmatprep.subr.bf16.mxu0 0
    %3097 = vmatpush2.bf16.msra.mxu0 0
    %3098 = vmatprep.subr.bf16.mxu0 0
    %3099 = vmatpush2.bf16.msra.mxu0 0
    %3100 = vmatprep.subr.bf16.mxu0 0
    %3101 = vmatpush2.bf16.msra.mxu0 0
    %3102 = vmatprep.subr.bf16.mxu0 0
    %3103 = vmatpush2.bf16.msra.mxu0 0
    %3104 = vmatprep.subr.bf16.mxu0 0
    %3105 = vmatpush2.bf16.msra.mxu0 0
    %3106 = vmatprep.mubr.bf16.mxu0 0
    %3107 = vmatmul.mubr.bf16.gmra.mxu0 %v3012
    %v3108 = vpop.f32.mrf.mxu0
    %v3109 = vadd.f32 %v3061, %v3108
    %v3110 = vpop.f32.mrf.mxu0
    %v3111 = vpop.f32.mrf.mxu0
    %v3112 = vpop.f32.mrf.mxu0
    %3113 = vdwg.mxu0
    %v3114 = vpack.c.bf16 %v2986, %v2986
    %v3115 = vpack.c.bf16 %v3049, %v3049
    %v3116 = vpack.c.bf16 %v3109, %v3109
    %v3118 = vsel %vm290, %v3114, 0
    %v3121 = vsel %vm290, %v3115, 0
    %3123 = vmatprep.subr.bf16.mxu0 0
    %3124 = vmatpush1.bf16.xpose.msra.mxu0 0
    %3125 = vmatprep.subr.bf16.mxu0 0
    %3126 = vmatpush1.bf16.xpose.msra.mxu0 0
    %3127 = vmatprep.subr.bf16.mxu0 0
    %3128 = vmatpush1.bf16.xpose.msra.mxu0 0
    %3129 = vmatprep.subr.bf16.mxu0 0
    %3130 = vmatpush1.bf16.xpose.msra.mxu0 0
    %3131 = vmatprep.subr.bf16.mxu0 0
    %3132 = vmatpush1.bf16.xpose.msra.mxu0 0
    %3133 = vmatprep.subr.bf16.mxu0 0
    %3134 = vmatpush1.bf16.xpose.msra.mxu0 0
    %3135 = vmatprep.subr.bf16.mxu0 0
    %3136 = vmatpush1.bf16.xpose.msra.mxu0 0
    %3137 = vmatprep.subr.bf16.mxu0 0
    %3138 = vmatpush1.bf16.xpose.msra.mxu0 %v3121
    %3139 = vmatprep.subr.bf16.mxu0 0
    %3140 = vmatpush2.bf16.xpose.msra.mxu0 0
    %3141 = vmatprep.subr.bf16.mxu0 0
    %3142 = vmatpush2.bf16.xpose.msra.mxu0 0
    %3143 = vmatprep.subr.bf16.mxu0 0
    %3144 = vmatpush2.bf16.xpose.msra.mxu0 0
    %3145 = vmatprep.subr.bf16.mxu0 0
    %3146 = vmatpush2.bf16.xpose.msra.mxu0 0
    %3147 = vmatprep.subr.bf16.mxu0 0
    %3148 = vmatpush2.bf16.xpose.msra.mxu0 0
    %3149 = vmatprep.subr.bf16.mxu0 0
    %3150 = vmatpush2.bf16.xpose.msra.mxu0 0
    %3151 = vmatprep.subr.bf16.mxu0 0
    %3152 = vmatpush2.bf16.xpose.msra.mxu0 0
    %3153 = vmatprep.subr.bf16.mxu0 0
    %3154 = vmatpush2.bf16.xpose.msra.mxu0 0
    %3155 = vmatprep.mubr.bf16.mxu0 0
    %3156 = vmatmul.mubr.bf16.gmra.mxu0 %v3118
    %v3157 = vpop.f32.mrf.mxu0
    %v3158 = vadd.f32 0.0, %v3157
    %v3159 = vpop.f32.mrf.mxu0
    %v3160 = vpop.f32.mrf.mxu0
    %v3161 = vpop.f32.mrf.mxu0
    %3162 = vdwg.mxu0
    %v3163 = vmul.f32 %v3158, 0.35355338
    %v3164 = vsel %vm2019, 16843009, 0
    %v3165 = vunpack.c.0.s8 %v3164
    %vm3166 = vcmp.ne.s32.totalorder %v3165, 0
    %v3167 = vsel %vm3166, 1, 0
    %v3168 = vlaneseq
    %v3169 = vshrl.u32 %v3168, 7
    %v3170 = vsub.s32 0, %v3169
    %v3171 = vrot.slane %v3167, %v3170
    %vm3172 = vcmp.eq.s32.totalorder %v3171, 1
    %v3173 = vsel %vm3172, %v3163, -1e+09
    %v3174 = vsel %vm290, %v3173, -inf
    %3175 = vmax.xlane.f32.xlu0 %v3174
    %v3176 = vpop.xlane.xlu0 %3175
    %v3177 = vsub.f32 %v3173, %v3176
    %v3178 = vmul.f32 %v3177, 1.442695
    %v3179 = vpow.pop %v3178
    %v3180 = vsel %vm290, %v3179, 0.0
    %3181 = vadd.xlane.f32.xlu0 %v3180
    %v3182 = vpop.xlane.xlu0 %3181
    %v3183 = vrcp.pop %v3182
    %v3184 = vmul.f32 %v3179, %v3183
    %v3185 = vpack.c.bf16 %v3184, %v3184
    %v3187 = vsel %vm290, %v3185, 0
    %v3190 = vsel %vm357, %v3116, 0
    %3192 = vmatprep.subr.bf16.mxu0 0
    %3193 = vmatpush1.bf16.msra.mxu0 0
    %3194 = vmatprep.subr.bf16.mxu0 0
    %3195 = vmatpush1.bf16.msra.mxu0 0
    %3196 = vmatprep.subr.bf16.mxu0 0
    %3197 = vmatpush1.bf16.msra.mxu0 0
    %3198 = vmatprep.subr.bf16.mxu0 0
    %3199 = vmatpush1.bf16.msra.mxu0 0
    %3200 = vmatprep.subr.bf16.mxu0 0
    %3201 = vmatpush1.bf16.msra.mxu0 0
    %3202 = vmatprep.subr.bf16.mxu0 0
    %3203 = vmatpush1.bf16.msra.mxu0 0
    %3204 = vmatprep.subr.bf16.mxu0 0
    %3205 = vmatpush1.bf16.msra.mxu0 0
    %3206 = vmatprep.subr.bf16.mxu0 0
    %3207 = vmatpush1.bf16.msra.mxu0 %v3190
    %3208 = vmatprep.subr.bf16.mxu0 0
    %3209 = vmatpush2.bf16.msra.mxu0 0
    %3210 = vmatprep.subr.bf16.mxu0 0
    %3211 = vmatpush2.bf16.msra.mxu0 0
    %3212 = vmatprep.subr.bf16.mxu0 0
    %3213 = vmatpush2.bf16.msra.mxu0 0
    %3214 = vmatprep.subr.bf16.mxu0 0
    %3215 = vmatpush2.bf16.msra.mxu0 0
    %3216 = vmatprep.subr.bf16.mxu0 0
    %3217 = vmatpush2.bf16.msra.mxu0 0
    %3218 = vmatprep.subr.bf16.mxu0 0
    %3219 = vmatpush2.bf16.msra.mxu0 0
    %3220 = vmatprep.subr.bf16.mxu0 0
    %3221 = vmatpush2.bf16.msra.mxu0 0
    %3222 = vmatprep.subr.bf16.mxu0 0
    %3223 = vmatpush2.bf16.msra.mxu0 0
    %3224 = vmatprep.mubr.bf16.mxu0 0
    %3225 = vmatmul.mubr.bf16.gmra.mxu0 %v3187
    %v3226 = vpop.f32.mrf.mxu0
    %v3227 = vadd.f32 0.0, %v3226
    %v3228 = vpop.f32.mrf.mxu0
    %v3229 = vpop.f32.mrf.mxu0
    %v3230 = vpop.f32.mrf.mxu0
    %3231 = vdwg.mxu0
    %v3232 = vpack.c.bf16 %v3227, %v3227
    %v3233 = vld [vmem:[%s13] sm:$0xf]
    %3235 = vrot.lane.b32.xlu0 %v3114, 120
    %v3236 = vpop.permute.xlu0 %3235
    %3238 = vrot.lane.b32.xlu0 %v3115, 120
    %v3239 = vpop.permute.xlu0 %3238
    %v3241 = vsel %vm290, %v3236, 0
    %v3244 = vsel %vm290, %v3239, 0
    %3246 = vmatprep.subr.bf16.mxu0 0
    %3247 = vmatpush1.bf16.xpose.msra.mxu0 0
    %3248 = vmatprep.subr.bf16.mxu0 0
    %3249 = vmatpush1.bf16.xpose.msra.mxu0 0
    %3250 = vmatprep.subr.bf16.mxu0 0
    %3251 = vmatpush1.bf16.xpose.msra.mxu0 0
    %3252 = vmatprep.subr.bf16.mxu0 0
    %3253 = vmatpush1.bf16.xpose.msra.mxu0 0
    %3254 = vmatprep.subr.bf16.mxu0 0
    %3255 = vmatpush1.bf16.xpose.msra.mxu0 0
    %3256 = vmatprep.subr.bf16.mxu0 0
    %3257 = vmatpush1.bf16.xpose.msra.mxu0 0
    %3258 = vmatprep.subr.bf16.mxu0 0
    %3259 = vmatpush1.bf16.xpose.msra.mxu0 0
    %3260 = vmatprep.subr.bf16.mxu0 0
    %3261 = vmatpush1.bf16.xpose.msra.mxu0 %v3244
    %3262 = vmatprep.subr.bf16.mxu0 0
    %3263 = vmatpush2.bf16.xpose.msra.mxu0 0
    %3264 = vmatprep.subr.bf16.mxu0 0
    %3265 = vmatpush2.bf16.xpose.msra.mxu0 0
    %3266 = vmatprep.subr.bf16.mxu0 0
    %3267 = vmatpush2.bf16.xpose.msra.mxu0 0
    %3268 = vmatprep.subr.bf16.mxu0 0
    %3269 = vmatpush2.bf16.xpose.msra.mxu0 0
    %3270 = vmatprep.subr.bf16.mxu0 0
    %3271 = vmatpush2.bf16.xpose.msra.mxu0 0
    %3272 = vmatprep.subr.bf16.mxu0 0
    %3273 = vmatpush2.bf16.xpose.msra.mxu0 0
    %3274 = vmatprep.subr.bf16.mxu0 0
    %3275 = vmatpush2.bf16.xpose.msra.mxu0 0
    %3276 = vmatprep.subr.bf16.mxu0 0
    %3277 = vmatpush2.bf16.xpose.msra.mxu0 0
    %3278 = vmatprep.mubr.bf16.mxu0 0
    %3279 = vmatmul.mubr.bf16.gmra.mxu0 %v3241
    %v3280 = vpop.f32.mrf.mxu0
    %v3281 = vadd.f32 0.0, %v3280
    %v3282 = vpop.f32.mrf.mxu0
    %v3283 = vpop.f32.mrf.mxu0
    %v3284 = vpop.f32.mrf.mxu0
    %3285 = vdwg.mxu0
    %v3286 = vmul.f32 %v3281, 0.35355338
    %v3287 = vsel %vm3172, %v3286, -1e+09
    %v3288 = vsel %vm290, %v3287, -inf
    %3289 = vmax.xlane.f32.xlu0 %v3288
    %v3290 = vpop.xlane.xlu0 %3289
    %v3291 = vsub.f32 %v3287, %v3290
    %v3292 = vmul.f32 %v3291, 1.442695
    %v3293 = vpow.pop %v3292
    %v3294 = vsel %vm290, %v3293, 0.0
    %3295 = vadd.xlane.f32.xlu0 %v3294
    %v3296 = vpop.xlane.xlu0 %3295
    %v3297 = vrcp.pop %v3296
    %v3298 = vmul.f32 %v3293, %v3297
    %v3299 = vpack.c.bf16 %v3298, %v3298
    %3301 = vrot.lane.b32.xlu0 %v3116, 120
    %v3302 = vpop.permute.xlu0 %3301
    %v3304 = vsel %vm290, %v3299, 0
    %v3307 = vsel %vm357, %v3302, 0
    %3309 = vmatprep.subr.bf16.mxu0 0
    %3310 = vmatpush1.bf16.msra.mxu0 0
    %3311 = vmatprep.subr.bf16.mxu0 0
    %3312 = vmatpush1.bf16.msra.mxu0 0
    %3313 = vmatprep.subr.bf16.mxu0 0
    %3314 = vmatpush1.bf16.msra.mxu0 0
    %3315 = vmatprep.subr.bf16.mxu0 0
    %3316 = vmatpush1.bf16.msra.mxu0 0
    %3317 = vmatprep.subr.bf16.mxu0 0
    %3318 = vmatpush1.bf16.msra.mxu0 0
    %3319 = vmatprep.subr.bf16.mxu0 0
    %3320 = vmatpush1.bf16.msra.mxu0 0
    %3321 = vmatprep.subr.bf16.mxu0 0
    %3322 = vmatpush1.bf16.msra.mxu0 0
    %3323 = vmatprep.subr.bf16.mxu0 0
    %3324 = vmatpush1.bf16.msra.mxu0 %v3307
    %3325 = vmatprep.subr.bf16.mxu0 0
    %3326 = vmatpush2.bf16.msra.mxu0 0
    %3327 = vmatprep.subr.bf16.mxu0 0
    %3328 = vmatpush2.bf16.msra.mxu0 0
    %3329 = vmatprep.subr.bf16.mxu0 0
    %3330 = vmatpush2.bf16.msra.mxu0 0
    %3331 = vmatprep.subr.bf16.mxu0 0
    %3332 = vmatpush2.bf16.msra.mxu0 0
    %3333 = vmatprep.subr.bf16.mxu0 0
    %3334 = vmatpush2.bf16.msra.mxu0 0
    %3335 = vmatprep.subr.bf16.mxu0 0
    %3336 = vmatpush2.bf16.msra.mxu0 0
    %3337 = vmatprep.subr.bf16.mxu0 0
    %3338 = vmatpush2.bf16.msra.mxu0 0
    %3339 = vmatprep.subr.bf16.mxu0 0
    %3340 = vmatpush2.bf16.msra.mxu0 0
    %3341 = vmatprep.mubr.bf16.mxu0 0
    %3342 = vmatmul.mubr.bf16.gmra.mxu0 %v3304
    %v3343 = vpop.f32.mrf.mxu0
    %v3344 = vadd.f32 0.0, %v3343
    %v3345 = vpop.f32.mrf.mxu0
    %v3346 = vpop.f32.mrf.mxu0
    %v3347 = vpop.f32.mrf.mxu0
    %3348 = vdwg.mxu0
    %v3349 = vpack.c.bf16 %v3344, %v3344
    %v3350 = vld [vmem:[%s1402] sm:$0xf]
    %v3352 = vsel %vm290, %v3349, 0
    %v3355 = vsel %vm357, %v3350, 0
    %3357 = vmatprep.subr.bf16.mxu0 0
    %3358 = vmatpush1.bf16.msra.mxu0 0
    %3359 = vmatprep.subr.bf16.mxu0 0
    %3360 = vmatpush1.bf16.msra.mxu0 0
    %3361 = vmatprep.subr.bf16.mxu0 0
    %3362 = vmatpush1.bf16.msra.mxu0 0
    %3363 = vmatprep.subr.bf16.mxu0 0
    %3364 = vmatpush1.bf16.msra.mxu0 0
    %3365 = vmatprep.subr.bf16.mxu0 0
    %3366 = vmatpush1.bf16.msra.mxu0 0
    %3367 = vmatprep.subr.bf16.mxu0 0
    %3368 = vmatpush1.bf16.msra.mxu0 0
    %3369 = vmatprep.subr.bf16.mxu0 0
    %3370 = vmatpush1.bf16.msra.mxu0 0
    %3371 = vmatprep.subr.bf16.mxu0 0
    %3372 = vmatpush1.bf16.msra.mxu0 %v3355
    %3373 = vmatprep.subr.bf16.mxu0 0
    %3374 = vmatpush2.bf16.msra.mxu0 0
    %3375 = vmatprep.subr.bf16.mxu0 0
    %3376 = vmatpush2.bf16.msra.mxu0 0
    %3377 = vmatprep.subr.bf16.mxu0 0
    %3378 = vmatpush2.bf16.msra.mxu0 0
    %3379 = vmatprep.subr.bf16.mxu0 0
    %3380 = vmatpush2.bf16.msra.mxu0 0
    %3381 = vmatprep.subr.bf16.mxu0 0
    %3382 = vmatpush2.bf16.msra.mxu0 0
    %3383 = vmatprep.subr.bf16.mxu0 0
    %3384 = vmatpush2.bf16.msra.mxu0 0
    %3385 = vmatprep.subr.bf16.mxu0 0
    %3386 = vmatpush2.bf16.msra.mxu0 0
    %3387 = vmatprep.subr.bf16.mxu0 0
    %3388 = vmatpush2.bf16.msra.mxu0 0
    %3389 = vmatprep.mubr.bf16.mxu0 0
    %3390 = vmatmul.mubr.bf16.gmra.mxu0 %v3352
    %v3391 = vpop.f32.mrf.mxu0
    %v3392 = vadd.f32 0.0, %v3391
    %v3393 = vpop.f32.mrf.mxu0
    %v3394 = vpop.f32.mrf.mxu0
    %v3395 = vpop.f32.mrf.mxu0
    %3396 = vdwg.mxu0
    %v3398 = vsel %vm290, %v3232, 0
    %v3401 = vsel %vm357, %v3233, 0
    %3403 = vmatprep.subr.bf16.mxu0 0
    %3404 = vmatpush1.bf16.msra.mxu0 0
    %3405 = vmatprep.subr.bf16.mxu0 0
    %3406 = vmatpush1.bf16.msra.mxu0 0
    %3407 = vmatprep.subr.bf16.mxu0 0
    %3408 = vmatpush1.bf16.msra.mxu0 0
    %3409 = vmatprep.subr.bf16.mxu0 0
    %3410 = vmatpush1.bf16.msra.mxu0 0
    %3411 = vmatprep.subr.bf16.mxu0 0
    %3412 = vmatpush1.bf16.msra.mxu0 0
    %3413 = vmatprep.subr.bf16.mxu0 0
    %3414 = vmatpush1.bf16.msra.mxu0 0
    %3415 = vmatprep.subr.bf16.mxu0 0
    %3416 = vmatpush1.bf16.msra.mxu0 0
    %3417 = vmatprep.subr.bf16.mxu0 0
    %3418 = vmatpush1.bf16.msra.mxu0 %v3401
    %3419 = vmatprep.subr.bf16.mxu0 0
    %3420 = vmatpush2.bf16.msra.mxu0 0
    %3421 = vmatprep.subr.bf16.mxu0 0
    %3422 = vmatpush2.bf16.msra.mxu0 0
    %3423 = vmatprep.subr.bf16.mxu0 0
    %3424 = vmatpush2.bf16.msra.mxu0 0
    %3425 = vmatprep.subr.bf16.mxu0 0
    %3426 = vmatpush2.bf16.msra.mxu0 0
    %3427 = vmatprep.subr.bf16.mxu0 0
    %3428 = vmatpush2.bf16.msra.mxu0 0
    %3429 = vmatprep.subr.bf16.mxu0 0
    %3430 = vmatpush2.bf16.msra.mxu0 0
    %3431 = vmatprep.subr.bf16.mxu0 0
    %3432 = vmatpush2.bf16.msra.mxu0 0
    %3433 = vmatprep.subr.bf16.mxu0 0
    %3434 = vmatpush2.bf16.msra.mxu0 0
    %3435 = vmatprep.mubr.bf16.mxu0 0
    %3436 = vmatmul.mubr.bf16.gmra.mxu0 %v3398
    %v3437 = vpop.f32.mrf.mxu0
    %v3438 = vadd.f32 %v3392, %v3437
    %v3439 = vpop.f32.mrf.mxu0
    %v3440 = vpop.f32.mrf.mxu0
    %v3441 = vpop.f32.mrf.mxu0
    %3442 = vdwg.mxu0
    %3443 = vrot.lane.b32.xlu0 %v3114, 112
    %v3444 = vpop.permute.xlu0 %3443
    %3445 = vrot.lane.b32.xlu0 %v3115, 112
    %v3446 = vpop.permute.xlu0 %3445
    %v3448 = vsel %vm290, %v3444, 0
    %v3451 = vsel %vm290, %v3446, 0
    %3453 = vmatprep.subr.bf16.mxu0 0
    %3454 = vmatpush1.bf16.xpose.msra.mxu0 0
    %3455 = vmatprep.subr.bf16.mxu0 0
    %3456 = vmatpush1.bf16.xpose.msra.mxu0 0
    %3457 = vmatprep.subr.bf16.mxu0 0
    %3458 = vmatpush1.bf16.xpose.msra.mxu0 0
    %3459 = vmatprep.subr.bf16.mxu0 0
    %3460 = vmatpush1.bf16.xpose.msra.mxu0 0
    %3461 = vmatprep.subr.bf16.mxu0 0
    %3462 = vmatpush1.bf16.xpose.msra.mxu0 0
    %3463 = vmatprep.subr.bf16.mxu0 0
    %3464 = vmatpush1.bf16.xpose.msra.mxu0 0
    %3465 = vmatprep.subr.bf16.mxu0 0
    %3466 = vmatpush1.bf16.xpose.msra.mxu0 0
    %3467 = vmatprep.subr.bf16.mxu0 0
    %3468 = vmatpush1.bf16.xpose.msra.mxu0 %v3451
    %3469 = vmatprep.subr.bf16.mxu0 0
    %3470 = vmatpush2.bf16.xpose.msra.mxu0 0
    %3471 = vmatprep.subr.bf16.mxu0 0
    %3472 = vmatpush2.bf16.xpose.msra.mxu0 0
    %3473 = vmatprep.subr.bf16.mxu0 0
    %3474 = vmatpush2.bf16.xpose.msra.mxu0 0
    %3475 = vmatprep.subr.bf16.mxu0 0
    %3476 = vmatpush2.bf16.xpose.msra.mxu0 0
    %3477 = vmatprep.subr.bf16.mxu0 0
    %3478 = vmatpush2.bf16.xpose.msra.mxu0 0
    %3479 = vmatprep.subr.bf16.mxu0 0
    %3480 = vmatpush2.bf16.xpose.msra.mxu0 0
    %3481 = vmatprep.subr.bf16.mxu0 0
    %3482 = vmatpush2.bf16.xpose.msra.mxu0 0
    %3483 = vmatprep.subr.bf16.mxu0 0
    %3484 = vmatpush2.bf16.xpose.msra.mxu0 0
    %3485 = vmatprep.mubr.bf16.mxu0 0
    %3486 = vmatmul.mubr.bf16.gmra.mxu0 %v3448
    %v3487 = vpop.f32.mrf.mxu0
    %v3488 = vadd.f32 0.0, %v3487
    %v3489 = vpop.f32.mrf.mxu0
    %v3490 = vpop.f32.mrf.mxu0
    %v3491 = vpop.f32.mrf.mxu0
    %3492 = vdwg.mxu0
    %v3493 = vmul.f32 %v3488, 0.35355338
    %v3494 = vsel %vm3172, %v3493, -1e+09
    %v3495 = vsel %vm290, %v3494, -inf
    %3496 = vmax.xlane.f32.xlu0 %v3495
    %v3497 = vpop.xlane.xlu0 %3496
    %v3498 = vsub.f32 %v3494, %v3497
    %v3499 = vmul.f32 %v3498, 1.442695
    %v3500 = vpow.pop %v3499
    %v3501 = vsel %vm290, %v3500, 0.0
    %3502 = vadd.xlane.f32.xlu0 %v3501
    %v3503 = vpop.xlane.xlu0 %3502
    %v3504 = vrcp.pop %v3503
    %v3505 = vmul.f32 %v3500, %v3504
    %v3506 = vpack.c.bf16 %v3505, %v3505
    %3507 = vrot.lane.b32.xlu0 %v3116, 112
    %v3508 = vpop.permute.xlu0 %3507
    %v3510 = vsel %vm290, %v3506, 0
    %v3513 = vsel %vm357, %v3508, 0
    %3515 = vmatprep.subr.bf16.mxu0 0
    %3516 = vmatpush1.bf16.msra.mxu0 0
    %3517 = vmatprep.subr.bf16.mxu0 0
    %3518 = vmatpush1.bf16.msra.mxu0 0
    %3519 = vmatprep.subr.bf16.mxu0 0
    %3520 = vmatpush1.bf16.msra.mxu0 0
    %3521 = vmatprep.subr.bf16.mxu0 0
    %3522 = vmatpush1.bf16.msra.mxu0 0
    %3523 = vmatprep.subr.bf16.mxu0 0
    %3524 = vmatpush1.bf16.msra.mxu0 0
    %3525 = vmatprep.subr.bf16.mxu0 0
    %3526 = vmatpush1.bf16.msra.mxu0 0
    %3527 = vmatprep.subr.bf16.mxu0 0
    %3528 = vmatpush1.bf16.msra.mxu0 0
    %3529 = vmatprep.subr.bf16.mxu0 0
    %3530 = vmatpush1.bf16.msra.mxu0 %v3513
    %3531 = vmatprep.subr.bf16.mxu0 0
    %3532 = vmatpush2.bf16.msra.mxu0 0
    %3533 = vmatprep.subr.bf16.mxu0 0
    %3534 = vmatpush2.bf16.msra.mxu0 0
    %3535 = vmatprep.subr.bf16.mxu0 0
    %3536 = vmatpush2.bf16.msra.mxu0 0
    %3537 = vmatprep.subr.bf16.mxu0 0
    %3538 = vmatpush2.bf16.msra.mxu0 0
    %3539 = vmatprep.subr.bf16.mxu0 0
    %3540 = vmatpush2.bf16.msra.mxu0 0
    %3541 = vmatprep.subr.bf16.mxu0 0
    %3542 = vmatpush2.bf16.msra.mxu0 0
    %3543 = vmatprep.subr.bf16.mxu0 0
    %3544 = vmatpush2.bf16.msra.mxu0 0
    %3545 = vmatprep.subr.bf16.mxu0 0
    %3546 = vmatpush2.bf16.msra.mxu0 0
    %3547 = vmatprep.mubr.bf16.mxu0 0
    %3548 = vmatmul.mubr.bf16.gmra.mxu0 %v3510
    %v3549 = vpop.f32.mrf.mxu0
    %v3550 = vadd.f32 0.0, %v3549
    %v3551 = vpop.f32.mrf.mxu0
    %v3552 = vpop.f32.mrf.mxu0
    %v3553 = vpop.f32.mrf.mxu0
    %3554 = vdwg.mxu0
    %v3555 = vpack.c.bf16 %v3550, %v3550
    %v3556 = vld [vmem:[%s1609] sm:$0xf]
    %v3558 = vsel %vm290, %v3555, 0
    %v3561 = vsel %vm357, %v3556, 0
    %3563 = vmatprep.subr.bf16.mxu0 0
    %3564 = vmatpush1.bf16.msra.mxu0 0
    %3565 = vmatprep.subr.bf16.mxu0 0
    %3566 = vmatpush1.bf16.msra.mxu0 0
    %3567 = vmatprep.subr.bf16.mxu0 0
    %3568 = vmatpush1.bf16.msra.mxu0 0
    %3569 = vmatprep.subr.bf16.mxu0 0
    %3570 = vmatpush1.bf16.msra.mxu0 0
    %3571 = vmatprep.subr.bf16.mxu0 0
    %3572 = vmatpush1.bf16.msra.mxu0 0
    %3573 = vmatprep.subr.bf16.mxu0 0
    %3574 = vmatpush1.bf16.msra.mxu0 0
    %3575 = vmatprep.subr.bf16.mxu0 0
    %3576 = vmatpush1.bf16.msra.mxu0 0
    %3577 = vmatprep.subr.bf16.mxu0 0
    %3578 = vmatpush1.bf16.msra.mxu0 %v3561
    %3579 = vmatprep.subr.bf16.mxu0 0
    %3580 = vmatpush2.bf16.msra.mxu0 0
    %3581 = vmatprep.subr.bf16.mxu0 0
    %3582 = vmatpush2.bf16.msra.mxu0 0
    %3583 = vmatprep.subr.bf16.mxu0 0
    %3584 = vmatpush2.bf16.msra.mxu0 0
    %3585 = vmatprep.subr.bf16.mxu0 0
    %3586 = vmatpush2.bf16.msra.mxu0 0
    %3587 = vmatprep.subr.bf16.mxu0 0
    %3588 = vmatpush2.bf16.msra.mxu0 0
    %3589 = vmatprep.subr.bf16.mxu0 0
    %3590 = vmatpush2.bf16.msra.mxu0 0
    %3591 = vmatprep.subr.bf16.mxu0 0
    %3592 = vmatpush2.bf16.msra.mxu0 0
    %3593 = vmatprep.subr.bf16.mxu0 0
    %3594 = vmatpush2.bf16.msra.mxu0 0
    %3595 = vmatprep.mubr.bf16.mxu0 0
    %3596 = vmatmul.mubr.bf16.gmra.mxu0 %v3558
    %v3597 = vpop.f32.mrf.mxu0
    %v3598 = vadd.f32 0.0, %v3597
    %v3599 = vpop.f32.mrf.mxu0
    %v3600 = vpop.f32.mrf.mxu0
    %v3601 = vpop.f32.mrf.mxu0
    %3602 = vdwg.mxu0
    %v3603 = vadd.f32 %v3438, %v3598
    %3604 = vrot.lane.b32.xlu0 %v3114, 104
    %v3605 = vpop.permute.xlu0 %3604
    %3606 = vrot.lane.b32.xlu0 %v3115, 104
    %v3607 = vpop.permute.xlu0 %3606
    %v3609 = vsel %vm290, %v3605, 0
    %v3612 = vsel %vm290, %v3607, 0
    %3614 = vmatprep.subr.bf16.mxu0 0
    %3615 = vmatpush1.bf16.xpose.msra.mxu0 0
    %3616 = vmatprep.subr.bf16.mxu0 0
    %3617 = vmatpush1.bf16.xpose.msra.mxu0 0
    %3618 = vmatprep.subr.bf16.mxu0 0
    %3619 = vmatpush1.bf16.xpose.msra.mxu0 0
    %3620 = vmatprep.subr.bf16.mxu0 0
    %3621 = vmatpush1.bf16.xpose.msra.mxu0 0
    %3622 = vmatprep.subr.bf16.mxu0 0
    %3623 = vmatpush1.bf16.xpose.msra.mxu0 0
    %3624 = vmatprep.subr.bf16.mxu0 0
    %3625 = vmatpush1.bf16.xpose.msra.mxu0 0
    %3626 = vmatprep.subr.bf16.mxu0 0
    %3627 = vmatpush1.bf16.xpose.msra.mxu0 0
    %3628 = vmatprep.subr.bf16.mxu0 0
    %3629 = vmatpush1.bf16.xpose.msra.mxu0 %v3612
    %3630 = vmatprep.subr.bf16.mxu0 0
    %3631 = vmatpush2.bf16.xpose.msra.mxu0 0
    %3632 = vmatprep.subr.bf16.mxu0 0
    %3633 = vmatpush2.bf16.xpose.msra.mxu0 0
    %3634 = vmatprep.subr.bf16.mxu0 0
    %3635 = vmatpush2.bf16.xpose.msra.mxu0 0
    %3636 = vmatprep.subr.bf16.mxu0 0
    %3637 = vmatpush2.bf16.xpose.msra.mxu0 0
    %3638 = vmatprep.subr.bf16.mxu0 0
    %3639 = vmatpush2.bf16.xpose.msra.mxu0 0
    %3640 = vmatprep.subr.bf16.mxu0 0
    %3641 = vmatpush2.bf16.xpose.msra.mxu0 0
    %3642 = vmatprep.subr.bf16.mxu0 0
    %3643 = vmatpush2.bf16.xpose.msra.mxu0 0
    %3644 = vmatprep.subr.bf16.mxu0 0
    %3645 = vmatpush2.bf16.xpose.msra.mxu0 0
    %3646 = vmatprep.mubr.bf16.mxu0 0
    %3647 = vmatmul.mubr.bf16.gmra.mxu0 %v3609
    %v3648 = vpop.f32.mrf.mxu0
    %v3649 = vadd.f32 0.0, %v3648
    %v3650 = vpop.f32.mrf.mxu0
    %v3651 = vpop.f32.mrf.mxu0
    %v3652 = vpop.f32.mrf.mxu0
    %3653 = vdwg.mxu0
    %v3654 = vmul.f32 %v3649, 0.35355338
    %v3655 = vsel %vm3172, %v3654, -1e+09
    %v3656 = vsel %vm290, %v3655, -inf
    %3657 = vmax.xlane.f32.xlu0 %v3656
    %v3658 = vpop.xlane.xlu0 %3657
    %v3659 = vsub.f32 %v3655, %v3658
    %v3660 = vmul.f32 %v3659, 1.442695
    %v3661 = vpow.pop %v3660
    %v3662 = vsel %vm290, %v3661, 0.0
    %3663 = vadd.xlane.f32.xlu0 %v3662
    %v3664 = vpop.xlane.xlu0 %3663
    %v3665 = vrcp.pop %v3664
    %v3666 = vmul.f32 %v3661, %v3665
    %v3667 = vpack.c.bf16 %v3666, %v3666
    %3668 = vrot.lane.b32.xlu0 %v3116, 104
    %v3669 = vpop.permute.xlu0 %3668
    %v3671 = vsel %vm290, %v3667, 0
    %v3674 = vsel %vm357, %v3669, 0
    %3676 = vmatprep.subr.bf16.mxu0 0
    %3677 = vmatpush1.bf16.msra.mxu0 0
    %3678 = vmatprep.subr.bf16.mxu0 0
    %3679 = vmatpush1.bf16.msra.mxu0 0
    %3680 = vmatprep.subr.bf16.mxu0 0
    %3681 = vmatpush1.bf16.msra.mxu0 0
    %3682 = vmatprep.subr.bf16.mxu0 0
    %3683 = vmatpush1.bf16.msra.mxu0 0
    %3684 = vmatprep.subr.bf16.mxu0 0
    %3685 = vmatpush1.bf16.msra.mxu0 0
    %3686 = vmatprep.subr.bf16.mxu0 0
    %3687 = vmatpush1.bf16.msra.mxu0 0
    %3688 = vmatprep.subr.bf16.mxu0 0
    %3689 = vmatpush1.bf16.msra.mxu0 0
    %3690 = vmatprep.subr.bf16.mxu0 0
    %3691 = vmatpush1.bf16.msra.mxu0 %v3674
    %3692 = vmatprep.subr.bf16.mxu0 0
    %3693 = vmatpush2.bf16.msra.mxu0 0
    %3694 = vmatprep.subr.bf16.mxu0 0
    %3695 = vmatpush2.bf16.msra.mxu0 0
    %3696 = vmatprep.subr.bf16.mxu0 0
    %3697 = vmatpush2.bf16.msra.mxu0 0
    %3698 = vmatprep.subr.bf16.mxu0 0
    %3699 = vmatpush2.bf16.msra.mxu0 0
    %3700 = vmatprep.subr.bf16.mxu0 0
    %3701 = vmatpush2.bf16.msra.mxu0 0
    %3702 = vmatprep.subr.bf16.mxu0 0
    %3703 = vmatpush2.bf16.msra.mxu0 0
    %3704 = vmatprep.subr.bf16.mxu0 0
    %3705 = vmatpush2.bf16.msra.mxu0 0
    %3706 = vmatprep.subr.bf16.mxu0 0
    %3707 = vmatpush2.bf16.msra.mxu0 0
    %3708 = vmatprep.mubr.bf16.mxu0 0
    %3709 = vmatmul.mubr.bf16.gmra.mxu0 %v3671
    %v3710 = vpop.f32.mrf.mxu0
    %v3711 = vadd.f32 0.0, %v3710
    %v3712 = vpop.f32.mrf.mxu0
    %v3713 = vpop.f32.mrf.mxu0
    %v3714 = vpop.f32.mrf.mxu0
    %3715 = vdwg.mxu0
    %v3716 = vpack.c.bf16 %v3711, %v3711
    %v3717 = vld [vmem:[%s1771] sm:$0xf]
    %v3719 = vsel %vm290, %v3716, 0
    %v3722 = vsel %vm357, %v3717, 0
    %3724 = vmatprep.subr.bf16.mxu0 0
    %3725 = vmatpush1.bf16.msra.mxu0 0
    %3726 = vmatprep.subr.bf16.mxu0 0
    %3727 = vmatpush1.bf16.msra.mxu0 0
    %3728 = vmatprep.subr.bf16.mxu0 0
    %3729 = vmatpush1.bf16.msra.mxu0 0
    %3730 = vmatprep.subr.bf16.mxu0 0
    %3731 = vmatpush1.bf16.msra.mxu0 0
    %3732 = vmatprep.subr.bf16.mxu0 0
    %3733 = vmatpush1.bf16.msra.mxu0 0
    %3734 = vmatprep.subr.bf16.mxu0 0
    %3735 = vmatpush1.bf16.msra.mxu0 0
    %3736 = vmatprep.subr.bf16.mxu0 0
    %3737 = vmatpush1.bf16.msra.mxu0 0
    %3738 = vmatprep.subr.bf16.mxu0 0
    %3739 = vmatpush1.bf16.msra.mxu0 %v3722
    %3740 = vmatprep.subr.bf16.mxu0 0
    %3741 = vmatpush2.bf16.msra.mxu0 0
    %3742 = vmatprep.subr.bf16.mxu0 0
    %3743 = vmatpush2.bf16.msra.mxu0 0
    %3744 = vmatprep.subr.bf16.mxu0 0
    %3745 = vmatpush2.bf16.msra.mxu0 0
    %3746 = vmatprep.subr.bf16.mxu0 0
    %3747 = vmatpush2.bf16.msra.mxu0 0
    %3748 = vmatprep.subr.bf16.mxu0 0
    %3749 = vmatpush2.bf16.msra.mxu0 0
    %3750 = vmatprep.subr.bf16.mxu0 0
    %3751 = vmatpush2.bf16.msra.mxu0 0
    %3752 = vmatprep.subr.bf16.mxu0 0
    %3753 = vmatpush2.bf16.msra.mxu0 0
    %3754 = vmatprep.subr.bf16.mxu0 0
    %3755 = vmatpush2.bf16.msra.mxu0 0
    %3756 = vmatprep.mubr.bf16.mxu0 0
    %3757 = vmatmul.mubr.bf16.gmra.mxu0 %v3719
    %v3758 = vpop.f32.mrf.mxu0
    %v3759 = vadd.f32 0.0, %v3758
    %v3760 = vpop.f32.mrf.mxu0
    %v3761 = vpop.f32.mrf.mxu0
    %v3762 = vpop.f32.mrf.mxu0
    %3763 = vdwg.mxu0
    %v3764 = vadd.f32 %v3603, %v3759
    %v3765 = vlaneseq
    %v3766 = vshrl.u32 %v3765, 7
    %v3767 = vsub.s32 0, %v3766
    %v3768 = vrot.slane %v2927, %v3767
    %v3769 = vadd.f32 %v3764, %v3768
    %v3770 = vadd.f32 %v2890, %v3769
    %v3771 = vld [vmem:[%s4 + $0x4] sm:$0x1]
    %v3772 = vld [vmem:[%s4 + $0x5] sm:$0x1]
    %v3773 = vsel %vm67, %v3770, 0.0
    %3774 = vadd.xlane.f32.xlu0 %v3773
    %v3775 = vpop.xlane.xlu0 %3774
    %v3776 = vmul.f32 %v3775, %v71
    %v3777 = vsub.f32 %v3770, %v3776
    %v3778 = vmul.f32 %v3777, %v3777
    %v3779 = vsel %vm67, %v3778, 0.0
    %3780 = vadd.xlane.f32.xlu0 %v3779
    %v3781 = vpop.xlane.xlu0 %3780
    %v3782 = vmul.f32 %v3781, 0.032258064
    %v3783 = vrsqrt.pop %v3782
    %v3784 = vmul.f32 %v3782, %v3783
    %vm3785 = vcmp.eq.f32.partialorder %v3782, inf
    %v3786 = vsel %vm3785, %v3782, %v3784
    %vm3787 = vcmp.eq.f32.partialorder %v3782, 0.0
    %v3788 = vand.u32 %v3782, 2147483648
    %v3789 = vsel %vm3787, %v3788, %v3786
    %v3790 = vadd.f32 %v3789, 1e-06
    %v3791 = vrcp.pop %v3790
    %v3792 = vmul.f32 %v3777, %v3791
    %v3793 = vlaneseq
    %v3794 = vshrl.u32 %v3793, 7
    %v3795 = vsub.s32 0, %v3794
    %v3796 = vrot.slane %v3771, %v3795
    %v3797 = vmul.f32 %v3796, %v3792
    %v3798 = vlaneseq
    %v3799 = vshrl.u32 %v3798, 7
    %v3800 = vsub.s32 0, %v3799
    %v3801 = vrot.slane %v3772, %v3800
    %v3802 = vadd.f32 %v3797, %v3801
    %v3803 = vpack.c.bf16 %v3802, %v3802
    %v3804 = vld [vmem:[%s4 + $0xe] sm:$0x1]
    %v3805 = vld [vmem:[%s14] sm:$0xf]
    %v3806 = vld [vmem:[%s14 + $0x4] sm:$0xf]
    %v3807 = vld [vmem:[%s14 + $0x8] sm:$0xf]
    %v3808 = vld [vmem:[%s14 + $0xc] sm:$0xf]
    %v3813 = vunpack.c.l.b16 %v3805
    %v3814 = vunpack.c.l.b16 %v3806
    %v3815 = vunpack.c.l.b16 %v3807
    %v3816 = vunpack.c.l.b16 %v3808
    %v3817 = vpack.c.b16 %v3814, %v3813
    %v3818 = vpack.c.b16 %v3816, %v3815
    %v3822 = vsel %vm67, %v3803, 0
    %3824 = vmatprep.subr.bf16.mxu0 0
    %3825 = vmatpush1.bf16.msra.mxu0 0
    %3826 = vmatprep.subr.bf16.mxu0 0
    %3827 = vmatpush1.bf16.msra.mxu0 0
    %3828 = vmatprep.subr.bf16.mxu0 0
    %3829 = vmatpush1.bf16.msra.mxu0 0
    %3830 = vmatprep.subr.bf16.mxu0 0
    %3831 = vmatpush1.bf16.msra.mxu0 0
    %3832 = vmatprep.subr.bf16.mxu0 0
    %3833 = vmatpush1.bf16.msra.mxu0 0
    %3834 = vmatprep.subr.bf16.mxu0 0
    %3835 = vmatpush1.bf16.msra.mxu0 0
    %3836 = vmatprep.subr.bf16.mxu0 0
    %3837 = vmatpush1.bf16.msra.mxu0 %v3818
    %3838 = vmatprep.subr.bf16.mxu0 0
    %3839 = vmatpush1.bf16.msra.mxu0 %v3817
    %3840 = vmatprep.subr.bf16.mxu0 0
    %3841 = vmatpush2.bf16.msra.mxu0 0
    %3842 = vmatprep.subr.bf16.mxu0 0
    %3843 = vmatpush2.bf16.msra.mxu0 0
    %3844 = vmatprep.subr.bf16.mxu0 0
    %3845 = vmatpush2.bf16.msra.mxu0 0
    %3846 = vmatprep.subr.bf16.mxu0 0
    %3847 = vmatpush2.bf16.msra.mxu0 0
    %3848 = vmatprep.subr.bf16.mxu0 0
    %3849 = vmatpush2.bf16.msra.mxu0 0
    %3850 = vmatprep.subr.bf16.mxu0 0
    %3851 = vmatpush2.bf16.msra.mxu0 0
    %3852 = vmatprep.subr.bf16.mxu0 0
    %3853 = vmatpush2.bf16.msra.mxu0 0
    %3854 = vmatprep.subr.bf16.mxu0 0
    %3855 = vmatpush2.bf16.msra.mxu0 0
    %3856 = vmatprep.mubr.bf16.mxu0 0
    %3857 = vmatmul.mubr.bf16.gmra.mxu0 %v3822
    %v3858 = vpop.f32.mrf.mxu0
    %v3859 = vadd.f32 %v1868, %v3858
    %v3860 = vpop.f32.mrf.mxu0
    %v3861 = vpop.f32.mrf.mxu0
    %v3862 = vpop.f32.mrf.mxu0
    %3863 = vdwg.mxu0
    %v3864 = vmax.f32 %v3859, 0.0
    %v3865 = vpack.c.bf16 %v3864, %v3864
    %v3866 = vld [vmem:[%s15] sm:$0xf]
    %v3867 = vld [vmem:[%s15 + $0x4] sm:$0xf]
    %v3868 = vld [vmem:[%s15 + $0x8] sm:$0xf]
    %v3869 = vld [vmem:[%s15 + $0xc] sm:$0xf]
    %v3870 = vld [vmem:[%s15 + $0x10] sm:$0xf]
    %v3871 = vld [vmem:[%s15 + $0x14] sm:$0xf]
    %v3872 = vld [vmem:[%s15 + $0x18] sm:$0xf]
    %v3873 = vld [vmem:[%s15 + $0x1c] sm:$0xf]
    %v3874 = vlaneseq
    %v3875 = vshrl.u32 %v3874, 7
    %v3876 = vsub.s32 0, %v3875
    %v3877 = vrot.slane %v3804, %v3876
    %v3886 = vunpack.c.l.b16 %v3866
    %v3887 = vunpack.c.l.b16 %v3867
    %v3888 = vunpack.c.l.b16 %v3868
    %v3889 = vunpack.c.l.b16 %v3869
    %v3890 = vunpack.c.l.b16 %v3870
    %v3891 = vunpack.c.l.b16 %v3871
    %v3892 = vunpack.c.l.b16 %v3872
    %v3893 = vunpack.c.l.b16 %v3873
    %v3894 = vpack.c.b16 %v3887, %v3886
    %v3895 = vpack.c.b16 %v3889, %v3888
    %v3896 = vpack.c.b16 %v3891, %v3890
    %v3897 = vpack.c.b16 %v3893, %v3892
    %v3903 = vsel %vm1963, %v3865, 0
    %3905 = vmatprep.subr.bf16.mxu0 0
    %3906 = vmatpush1.bf16.msra.mxu0 0
    %3907 = vmatprep.subr.bf16.mxu0 0
    %3908 = vmatpush1.bf16.msra.mxu0 0
    %3909 = vmatprep.subr.bf16.mxu0 0
    %3910 = vmatpush1.bf16.msra.mxu0 0
    %3911 = vmatprep.subr.bf16.mxu0 0
    %3912 = vmatpush1.bf16.msra.mxu0 0
    %3913 = vmatprep.subr.bf16.mxu0 0
    %3914 = vmatpush1.bf16.msra.mxu0 %v3897
    %3915 = vmatprep.subr.bf16.mxu0 0
    %3916 = vmatpush1.bf16.msra.mxu0 %v3896
    %3917 = vmatprep.subr.bf16.mxu0 0
    %3918 = vmatpush1.bf16.msra.mxu0 %v3895
    %3919 = vmatprep.subr.bf16.mxu0 0
    %3920 = vmatpush1.bf16.msra.mxu0 %v3894
    %3921 = vmatprep.subr.bf16.mxu0 0
    %3922 = vmatpush2.bf16.msra.mxu0 0
    %3923 = vmatprep.subr.bf16.mxu0 0
    %3924 = vmatpush2.bf16.msra.mxu0 0
    %3925 = vmatprep.subr.bf16.mxu0 0
    %3926 = vmatpush2.bf16.msra.mxu0 0
    %3927 = vmatprep.subr.bf16.mxu0 0
    %3928 = vmatpush2.bf16.msra.mxu0 0
    %3929 = vmatprep.subr.bf16.mxu0 0
    %3930 = vmatpush2.bf16.msra.mxu0 0
    %3931 = vmatprep.subr.bf16.mxu0 0
    %3932 = vmatpush2.bf16.msra.mxu0 0
    %3933 = vmatprep.subr.bf16.mxu0 0
    %3934 = vmatpush2.bf16.msra.mxu0 0
    %3935 = vmatprep.subr.bf16.mxu0 0
    %3936 = vmatpush2.bf16.msra.mxu0 0
    %3937 = vmatprep.mubr.bf16.mxu0 0
    %3938 = vmatmul.mubr.bf16.gmra.mxu0 %v3903
    %v3939 = vpop.f32.mrf.mxu0
    %v3940 = vadd.f32 %v3877, %v3939
    %v3941 = vpop.f32.mrf.mxu0
    %v3942 = vpop.f32.mrf.mxu0
    %v3943 = vpop.f32.mrf.mxu0
    %3944 = vdwg.mxu0
    %v3945 = vadd.f32 %v3770, %v3940
    %s3946 = scalar_lea.vmem [#allocation2], 8
    %3947 = vst.msk [vmem:[%s3946] sm:$0xff] %vm67, %v3945
    // Predicated region
    $region66: #{decoder_layer.1} parent=1 // pred_check
      _
    $region67: #{decoder_layer.1} parent=1 // pred_check_branch
      %3949 = sbr.rel (0) target = $region69
    $region68: #{decoder_layer.1} parent=1 // pred_region
      %s3951 = ssub.s32 256, 256
      %3952 = vsyncadd [#allocation3], %s3951
      %s3953 = sshll.u32 [#allocation2], 4
      %s3954 = int_to_ptr.vmem [resolvable:$true] %s3953
      %3959 = dma.vmem_to_hbm [thread:$0]  %s3954, 256, %s16, [#allocation3], 128, 128, 8
    $region69: #{decoder_layer.1} parent=1 // pred_fallthru
      _
    // Predicated region
    $region70: #{decoder_layer.1} parent=1 // pred_check
      _
    $region71: #{decoder_layer.1} parent=1 // pred_check_branch
      %3961 = sbr.rel (0) target = $region73
    $region72: #{decoder_layer.1} parent=1 // pred_region
      %3962 = dma.done [#allocation3], 256
    $region73: #{decoder_layer.1} parent=1 // pred_fallthru
      _
    %3963 = vsyncpa [#allocation3], 1

</llo_original>
